<compile_context>
chip_gen: v7x
topology: tpu7x:2x2x1
jax: 0.10.0
libtpu: 0.0.40
codegen_flags: <defaults>
</compile_context>

<pallas_src>
import jax
import jax.numpy as jnp
from jax.experimental import pallas as pl
from jax.experimental.pallas import tpu as pltpu

LANE = 128
_SUBLANE = 8
_MAX_TILE_M = 512                   # rows per grid block for large batch
_MIN_GRID = 2                       # keep both v7x TensorCores busy
_VMEM_LIMIT = 32 * 1024 * 1024      # well under v5e/v6e/v7x scoped VMEM


# ----------------------------- Pallas kernels ------------------------------

def _conv_pool_kernel(p_ref, w_ref, b_ref, o_ref):
    """o = relu(max_o(p[o] @ w) + bias), stored bf16.

    p_ref is a (4, tile_m, K) block holding the im2col patches of the four
    2x2 stride-2 pooling offsets, so this single kernel is conv + bias +
    relu + 2x2 max-pool.  Fusing the pool as a max over the pre-bias matmuls
    is valid only because bias-add and ReLU are monotonic."""
    w = w_ref[...]
    y0 = jnp.dot(p_ref[0], w, preferred_element_type=jnp.float32)
    y1 = jnp.dot(p_ref[1], w, preferred_element_type=jnp.float32)
    y2 = jnp.dot(p_ref[2], w, preferred_element_type=jnp.float32)
    y3 = jnp.dot(p_ref[3], w, preferred_element_type=jnp.float32)
    s = jnp.maximum(jnp.maximum(y0, y1), jnp.maximum(y2, y3))
    o_ref[...] = jnp.maximum(s + b_ref[...], 0.0).astype(o_ref.dtype)


def _mlp_kernel(x_ref, w1_ref, b1_ref, w2_ref, b2_ref, w3_ref, b3_ref, o_ref):
    """Fused fc1->relu->fc2->relu->fc3; intermediates never leave VMEM."""
    h = jnp.dot(x_ref[...], w1_ref[...], preferred_element_type=jnp.float32)
    h = jnp.maximum(h + b1_ref[...], 0.0)
    h = jnp.dot(h.astype(jnp.bfloat16), w2_ref[...],
                preferred_element_type=jnp.float32)
    h = jnp.maximum(h + b2_ref[...], 0.0)
    h = jnp.dot(h.astype(jnp.bfloat16), w3_ref[...],
                preferred_element_type=jnp.float32)
    o_ref[...] = h + b3_ref[...]


# ------------------------------- helpers ------------------------------------

def _round_up(x, m):
    return (x + m - 1) // m * m


def _pick_m_tiling(m, max_tile=_MAX_TILE_M, min_grid=_MIN_GRID):
    """Tile the row dim so the 'parallel' grid axis has >= min_grid blocks
    (2-TC sharding on v7x) while capping per-block rows at max_tile."""
    tile = min(max_tile, _round_up(-(-m // min_grid), _SUBLANE))
    m_pad = max(_round_up(m, tile), min_grid * tile)
    return m_pad, tile


def _pad2d(a, rows, cols):
    return jnp.pad(a, ((0, rows - a.shape[0]), (0, cols - a.shape[1])))


# ------------------------------ stage wrappers -------------------------------

def conv_pool_stage(x_nhwc, w_prep, b_prep, kh=5, kw=5):
    """Valid khxkw conv (stride 1) + bias + relu + 2x2/2 max-pool, fused.

    x_nhwc: (B, H, W, C) bf16.  w_prep: (kh*kw*C, 128) bf16 with rows ordered
    (i, j, c); b_prep: (1, 128) f32.  Returns (B, Ho//2, Wo//2, 128) bf16
    (real output channels in lanes [0, O))."""
    B, H, W, C = x_nhwc.shape
    Ho, Wo = H - kh + 1, W - kw + 1
    Po, Qo = Ho // 2, Wo // 2
    K = kh * kw * C
    N = w_prep.shape[1]
    M = B * Po * Qo
    M_pad, tile_m = _pick_m_tiling(M)

    # Build the 4 pooling-offset patch matrices directly from x with stride-2
    # slices (no full-resolution f32 im2col intermediate, no K/M blow-up).
    # XLA fuses the slices/concat/pad into one lean bf16 producer for `offs`.
    def offset_patches(dy, dx):
        pieces = [x_nhwc[:, dy + i: dy + i + 2 * Po - 1: 2,
                          dx + j: dx + j + 2 * Qo - 1: 2, :]
                  for i in range(kh) for j in range(kw)]
        return jnp.concatenate(pieces, axis=-1).reshape(M, K)   # cols (i,j,c)

    offs = jnp.stack([offset_patches(dy, dx)
                      for dy in (0, 1) for dx in (0, 1)], axis=0)   # (4, M, K)
    offs = jnp.pad(offs, ((0, 0), (0, M_pad - M), (0, 0))).astype(jnp.bfloat16)

    out = pl.pallas_call(
        _conv_pool_kernel,
        out_shape=jax.ShapeDtypeStruct((M_pad, N), jnp.bfloat16),
        grid=(M_pad // tile_m,),
        in_specs=[pl.BlockSpec((4, tile_m, K), lambda i: (0, i, 0)),
                  pl.BlockSpec((K, N), lambda i: (0, 0)),
                  pl.BlockSpec((1, N), lambda i: (0, 0))],
        out_specs=pl.BlockSpec((tile_m, N), lambda i: (i, 0)),
        compiler_params=pltpu.CompilerParams(
            dimension_semantics=("parallel",),
            vmem_limit_bytes=_VMEM_LIMIT),
    )(offs, w_prep, b_prep)

    return out[:M].reshape(B, Po, Qo, N)


def mlp_stage(x_flat, prep):
    """x_flat: (B, 400) bf16 (NHWC flatten of the 16 real channels) -> (B, 128) f32."""
    B, K = x_flat.shape
    B_pad, tile_b = _pick_m_tiling(B)
    x = _pad2d(x_flat, B_pad, K).astype(jnp.bfloat16)
    N = prep["f3"].shape[1]

    out = pl.pallas_call(
        _mlp_kernel,
        out_shape=jax.ShapeDtypeStruct((B_pad, N), jnp.float32),
        grid=(B_pad // tile_b,),
        in_specs=[pl.BlockSpec((tile_b, K), lambda i: (i, 0)),
                  pl.BlockSpec(prep["f1"].shape, lambda i: (0, 0)),
                  pl.BlockSpec(prep["fb1"].shape, lambda i: (0, 0)),
                  pl.BlockSpec(prep["f2"].shape, lambda i: (0, 0)),
                  pl.BlockSpec(prep["fb2"].shape, lambda i: (0, 0)),
                  pl.BlockSpec(prep["f3"].shape, lambda i: (0, 0)),
                  pl.BlockSpec(prep["fb3"].shape, lambda i: (0, 0))],
        out_specs=pl.BlockSpec((tile_b, N), lambda i: (i, 0)),
        compiler_params=pltpu.CompilerParams(
            dimension_semantics=("parallel",),
            vmem_limit_bytes=_VMEM_LIMIT),
    )(x, prep["f1"], prep["fb1"], prep["f2"], prep["fb2"],
      prep["f3"], prep["fb3"])
    return out[:B]


# ------------------------------ the model ----------------------------------

def init_params(key, l1=120, l2=84):
    """Deterministic PyTorch-default-style uniform init (f32, torch layouts)."""
    def uinit(k, shape, fan_in):
        bound = 1.0 / jnp.sqrt(jnp.float32(fan_in))
        return jax.random.uniform(k, shape, jnp.float32, -bound, bound)

    keys = jax.random.split(key, 10)
    return {
        "conv1_w": uinit(keys[0], (6, 3, 5, 5), 3 * 5 * 5),
        "conv1_b": uinit(keys[1], (6,), 3 * 5 * 5),
        "conv2_w": uinit(keys[2], (16, 6, 5, 5), 6 * 5 * 5),
        "conv2_b": uinit(keys[3], (16,), 6 * 5 * 5),
        "fc1_w": uinit(keys[4], (l1, 16 * 5 * 5), 16 * 5 * 5),
        "fc1_b": uinit(keys[5], (l1,), 16 * 5 * 5),
        "fc2_w": uinit(keys[6], (l2, l1), l1),
        "fc2_b": uinit(keys[7], (l2,), l1),
        "fc3_w": uinit(keys[8], (10, l2), l2),
        "fc3_b": uinit(keys[9], (10,), l2),
    }


def prepare_params(params):
    """One-time layout hoist: pre-transpose to (K, N) bf16, pad N to 128 lanes
    (zero cols + zero bias so padded lanes stay exactly 0 after ReLU), and
    permute fc1 columns from torch (c,h,w) flatten order to our NHWC (h,w,c)
    order over the 16 real channels (K=400, not 3200)."""
    def conv_prep(w, b):
        o, c, kh, kw = w.shape
        k = kh * kw * c
        op = _round_up(o, LANE)
        w2 = w.transpose(2, 3, 1, 0).reshape(k, o)        # rows (i, j, c), cols o
        w2 = jnp.pad(w2, ((0, 0), (0, op - o))).astype(jnp.bfloat16)
        b2 = _pad2d(b.reshape(1, o), 1, op).astype(jnp.float32)
        return w2, b2

    def fc_prep(w, b):
        n, k = w.shape
        w2 = _pad2d(w.T, _round_up(k, LANE), _round_up(n, LANE)).astype(jnp.bfloat16)
        b2 = _pad2d(b.reshape(1, n), 1, _round_up(n, LANE)).astype(jnp.float32)
        return w2, b2

    w1, b1 = conv_prep(params["conv1_w"], params["conv1_b"])   # (75,128), (1,128)
    w2, b2 = conv_prep(params["conv2_w"], params["conv2_b"])   # (150,128), (1,128)

    l1 = params["fc1_w"].shape[0]
    l1p = _round_up(l1, LANE)
    f1 = params["fc1_w"].reshape(l1, 16, 5, 5).transpose(2, 3, 1, 0)  # (5,5,16,l1)
    f1 = f1.reshape(16 * 5 * 5, l1)                                   # rows (h,w,c)
    f1 = jnp.pad(f1, ((0, 0), (0, l1p - l1))).astype(jnp.bfloat16)    # (400, 128)
    fb1 = _pad2d(params["fc1_b"].reshape(1, l1), 1, l1p).astype(jnp.float32)

    f2, fb2 = fc_prep(params["fc2_w"], params["fc2_b"])
    f3, fb3 = fc_prep(params["fc3_w"], params["fc3_b"])
    return {"w1": w1, "b1": b1, "w2": w2, "b2": b2,
            "f1": f1, "fb1": fb1, "f2": f2, "fb2": fb2, "f3": f3, "fb3": fb3}


def net_forward(prep, x_nchw):
    """x_nchw: (B, 3, 32, 32) f32 -> logits (B, 10) f32.

    Note: bf16 MXU inputs => expect ~1e-2 relative error vs an f32 torch
    reference; compare with tolerances, not exactly."""
    B = x_nchw.shape[0]
    x = jnp.transpose(x_nchw, (0, 2, 3, 1)).astype(jnp.bfloat16)   # NHWC once, bf16

    p1 = conv_pool_stage(x, prep["w1"], prep["b1"])[..., :6]       # (B,14,14,6) bf16
    p2 = conv_pool_stage(p1, prep["w2"], prep["b2"])[..., :16]     # (B,5,5,16) bf16

    fc_in = p2.reshape(B, 16 * 5 * 5)                              # (h,w,c) flatten, K=400
    logits_pad = mlp_stage(fc_in, prep)                            # (B, 128) f32
    return logits_pad[:, :10]


# --------------------------------- main -------------------------------------

if __name__ == "__main__":
    key = jax.random.PRNGKey(0)
    k_params, k_x = jax.random.split(key)

    params = init_params(k_params, l1=120, l2=84)
    prep = prepare_params(params)

    # CIFAR10-shaped input (NCHW); 32x32 is required by fc1's 16*5*5 fan-in.
    B = 2
    x = jax.random.normal(k_x, (B, 3, 32, 32), dtype=jnp.float32)

    fwd = jax.jit(net_forward)
    logits = jax.block_until_ready(fwd(prep, x))

    assert logits.shape == (B, 10), logits.shape
    assert logits.dtype == jnp.float32
    assert bool(jnp.all(jnp.isfinite(logits)))
    print("KERNEL_OK")
</pallas_src>

<mosaic_0001>
module attributes {stable_mosaic.version = 11 : i64} {
  func.func @_conv_pool_kernel(%arg0: i32, %arg1: memref<4x200x75xbf16, #tpu.memory_space<vmem>>, %arg2: memref<75x128xbf16, #tpu.memory_space<vmem>>, %arg3: memref<1x128xf32, #tpu.memory_space<vmem>>, %arg4: memref<200x128xbf16, #tpu.memory_space<vmem>>) attributes {dimension_semantics = [#tpu.dimension_semantics<parallel>], iteration_bounds = array<i64: 2>, scalar_prefetch = 0 : i64, scratch_operands = 0 : i64, tpu.core_type = #tpu.core_type<tc>, window_params = [{transform_indices = @transform_0, window_bounds = array<i64: 4, 200, 75>}, {pipeline_mode = #tpu.pipeline_mode<synchronous>, transform_indices = @transform_1, window_bounds = array<i64: 75, 128>}, {pipeline_mode = #tpu.pipeline_mode<synchronous>, transform_indices = @transform_2, window_bounds = array<i64: 1, 128>}, {transform_indices = @transform_3, window_bounds = array<i64: 200, 128>}]} {
    %c0 = arith.constant 0 : index
    %c0_0 = arith.constant 0 : index
    %0 = vector.load %arg2[%c0, %c0_0] : memref<75x128xbf16, #tpu.memory_space<vmem>>, vector<75x128xbf16>
    %c0_1 = arith.constant 0 : index
    %c0_2 = arith.constant 0 : index
    %c0_3 = arith.constant 0 : index
    %1 = vector.load %arg1[%c0_1, %c0_2, %c0_3] : memref<4x200x75xbf16, #tpu.memory_space<vmem>>, vector<1x200x75xbf16>
    %2 = vector.shape_cast %1 : vector<1x200x75xbf16> to vector<200x75xbf16>
    %cst = arith.constant dense<0.000000e+00> : vector<200x128xf32>
    %3 = tpu.matmul %2, %0, %cst {dimension_numbers = #tpu.dot_dimension_numbers<[1], [0], [0], [1], [0, 0, 1, 1], [], []>} : vector<200x75xbf16>, vector<75x128xbf16>, vector<200x128xf32> -> vector<200x128xf32>
    %c1 = arith.constant 1 : index
    %c0_4 = arith.constant 0 : index
    %c0_5 = arith.constant 0 : index
    %4 = vector.load %arg1[%c1, %c0_4, %c0_5] : memref<4x200x75xbf16, #tpu.memory_space<vmem>>, vector<1x200x75xbf16>
    %5 = vector.shape_cast %4 : vector<1x200x75xbf16> to vector<200x75xbf16>
    %cst_6 = arith.constant dense<0.000000e+00> : vector<200x128xf32>
    %6 = tpu.matmul %5, %0, %cst_6 {dimension_numbers = #tpu.dot_dimension_numbers<[1], [0], [0], [1], [0, 0, 1, 1], [], []>} : vector<200x75xbf16>, vector<75x128xbf16>, vector<200x128xf32> -> vector<200x128xf32>
    %c2 = arith.constant 2 : index
    %c0_7 = arith.constant 0 : index
    %c0_8 = arith.constant 0 : index
    %7 = vector.load %arg1[%c2, %c0_7, %c0_8] : memref<4x200x75xbf16, #tpu.memory_space<vmem>>, vector<1x200x75xbf16>
    %8 = vector.shape_cast %7 : vector<1x200x75xbf16> to vector<200x75xbf16>
    %cst_9 = arith.constant dense<0.000000e+00> : vector<200x128xf32>
    %9 = tpu.matmul %8, %0, %cst_9 {dimension_numbers = #tpu.dot_dimension_numbers<[1], [0], [0], [1], [0, 0, 1, 1], [], []>} : vector<200x75xbf16>, vector<75x128xbf16>, vector<200x128xf32> -> vector<200x128xf32>
    %c3 = arith.constant 3 : index
    %c0_10 = arith.constant 0 : index
    %c0_11 = arith.constant 0 : index
    %10 = vector.load %arg1[%c3, %c0_10, %c0_11] : memref<4x200x75xbf16, #tpu.memory_space<vmem>>, vector<1x200x75xbf16>
    %11 = vector.shape_cast %10 : vector<1x200x75xbf16> to vector<200x75xbf16>
    %cst_12 = arith.constant dense<0.000000e+00> : vector<200x128xf32>
    %12 = tpu.matmul %11, %0, %cst_12 {dimension_numbers = #tpu.dot_dimension_numbers<[1], [0], [0], [1], [0, 0, 1, 1], [], []>} : vector<200x75xbf16>, vector<75x128xbf16>, vector<200x128xf32> -> vector<200x128xf32>
    %13 = arith.maximumf %3, %6 : vector<200x128xf32>
    %14 = arith.maximumf %9, %12 : vector<200x128xf32>
    %15 = arith.maximumf %13, %14 : vector<200x128xf32>
    %c0_13 = arith.constant 0 : index
    %c0_14 = arith.constant 0 : index
    %16 = vector.load %arg3[%c0_13, %c0_14] : memref<1x128xf32, #tpu.memory_space<vmem>>, vector<1x128xf32>
    %17 = vector.broadcast %16 : vector<1x128xf32> to vector<200x128xf32>
    %18 = arith.addf %15, %17 : vector<200x128xf32>
    %cst_15 = arith.constant 0.000000e+00 : f32
    %19 = vector.broadcast %cst_15 : f32 to vector<200x128xf32>
    %20 = arith.maximumf %18, %19 : vector<200x128xf32>
    %21 = arith.truncf %20 : vector<200x128xf32> to vector<200x128xbf16>
    %c0_16 = arith.constant 0 : index
    %c0_17 = arith.constant 0 : index
    %22 = vector.load %arg4[%c0_16, %c0_17] : memref<200x128xbf16, #tpu.memory_space<vmem>>, vector<200x128xbf16>
    tpu.vector_store %arg4[%c0_16, %c0_17], %21 {strides = array<i32>} : memref<200x128xbf16, #tpu.memory_space<vmem>>, vector<200x128xbf16>,
    return
  }
  func.func @transform_0(%arg0: i32) -> (i32, i32, i32) {
    %c0_i32 = arith.constant 0 : i32
    %c0_i32_0 = arith.constant 0 : i32
    %c0_i32_1 = arith.constant 0 : i32
    return %c0_i32, %arg0, %c0_i32_0 : i32, i32, i32
  }
  func.func @transform_1(%arg0: i32) -> (i32, i32) {
    %c0_i32 = arith.constant 0 : i32
    %c0_i32_0 = arith.constant 0 : i32
    %c0_i32_1 = arith.constant 0 : i32
    return %c0_i32, %c0_i32_0 : i32, i32
  }
  func.func @transform_2(%arg0: i32) -> (i32, i32) {
    %c0_i32 = arith.constant 0 : i32
    %c0_i32_0 = arith.constant 0 : i32
    %c0_i32_1 = arith.constant 0 : i32
    return %c0_i32, %c0_i32_0 : i32, i32
  }
  func.func @transform_3(%arg0: i32) -> (i32, i32) {
    %c0_i32 = arith.constant 0 : i32
    %c0_i32_0 = arith.constant 0 : i32
    return %arg0, %c0_i32 : i32, i32
  }
}

module attributes {stable_mosaic.version = 11 : i64} {
  func.func @_conv_pool_kernel(%arg0: i32, %arg1: memref<4x32x150xbf16, #tpu.memory_space<vmem>>, %arg2: memref<150x128xbf16, #tpu.memory_space<vmem>>, %arg3: memref<1x128xf32, #tpu.memory_space<vmem>>, %arg4: memref<32x128xbf16, #tpu.memory_space<vmem>>) attributes {dimension_semantics = [#tpu.dimension_semantics<parallel>], iteration_bounds = array<i64: 2>, scalar_prefetch = 0 : i64, scratch_operands = 0 : i64, tpu.core_type = #tpu.core_type<tc>, window_params = [{transform_indices = @transform_0, window_bounds = array<i64: 4, 32, 150>}, {pipeline_mode = #tpu.pipeline_mode<synchronous>, transform_indices = @transform_1, window_bounds = array<i64: 150, 128>}, {pipeline_mode = #tpu.pipeline_mode<synchronous>, transform_indices = @transform_2, window_bounds = array<i64: 1, 128>}, {transform_indices = @transform_3, window_bounds = array<i64: 32, 128>}]} {
    %c0 = arith.constant 0 : index
    %c0_0 = arith.constant 0 : index
    %0 = vector.load %arg2[%c0, %c0_0] : memref<150x128xbf16, #tpu.memory_space<vmem>>, vector<150x128xbf16>
    %c0_1 = arith.constant 0 : index
    %c0_2 = arith.constant 0 : index
    %c0_3 = arith.constant 0 : index
    %1 = vector.load %arg1[%c0_1, %c0_2, %c0_3] : memref<4x32x150xbf16, #tpu.memory_space<vmem>>, vector<1x32x150xbf16>
    %2 = vector.shape_cast %1 : vector<1x32x150xbf16> to vector<32x150xbf16>
    %cst = arith.constant dense<0.000000e+00> : vector<32x128xf32>
    %3 = tpu.matmul %2, %0, %cst {dimension_numbers = #tpu.dot_dimension_numbers<[1], [0], [0], [1], [0, 0, 1, 1], [], []>} : vector<32x150xbf16>, vector<150x128xbf16>, vector<32x128xf32> -> vector<32x128xf32>
    %c1 = arith.constant 1 : index
    %c0_4 = arith.constant 0 : index
    %c0_5 = arith.constant 0 : index
    %4 = vector.load %arg1[%c1, %c0_4, %c0_5] : memref<4x32x150xbf16, #tpu.memory_space<vmem>>, vector<1x32x150xbf16>
    %5 = vector.shape_cast %4 : vector<1x32x150xbf16> to vector<32x150xbf16>
    %cst_6 = arith.constant dense<0.000000e+00> : vector<32x128xf32>
    %6 = tpu.matmul %5, %0, %cst_6 {dimension_numbers = #tpu.dot_dimension_numbers<[1], [0], [0], [1], [0, 0, 1, 1], [], []>} : vector<32x150xbf16>, vector<150x128xbf16>, vector<32x128xf32> -> vector<32x128xf32>
    %c2 = arith.constant 2 : index
    %c0_7 = arith.constant 0 : index
    %c0_8 = arith.constant 0 : index
    %7 = vector.load %arg1[%c2, %c0_7, %c0_8] : memref<4x32x150xbf16, #tpu.memory_space<vmem>>, vector<1x32x150xbf16>
    %8 = vector.shape_cast %7 : vector<1x32x150xbf16> to vector<32x150xbf16>
    %cst_9 = arith.constant dense<0.000000e+00> : vector<32x128xf32>
    %9 = tpu.matmul %8, %0, %cst_9 {dimension_numbers = #tpu.dot_dimension_numbers<[1], [0], [0], [1], [0, 0, 1, 1], [], []>} : vector<32x150xbf16>, vector<150x128xbf16>, vector<32x128xf32> -> vector<32x128xf32>
    %c3 = arith.constant 3 : index
    %c0_10 = arith.constant 0 : index
    %c0_11 = arith.constant 0 : index
    %10 = vector.load %arg1[%c3, %c0_10, %c0_11] : memref<4x32x150xbf16, #tpu.memory_space<vmem>>, vector<1x32x150xbf16>
    %11 = vector.shape_cast %10 : vector<1x32x150xbf16> to vector<32x150xbf16>
    %cst_12 = arith.constant dense<0.000000e+00> : vector<32x128xf32>
    %12 = tpu.matmul %11, %0, %cst_12 {dimension_numbers = #tpu.dot_dimension_numbers<[1], [0], [0], [1], [0, 0, 1, 1], [], []>} : vector<32x150xbf16>, vector<150x128xbf16>, vector<32x128xf32> -> vector<32x128xf32>
    %13 = arith.maximumf %3, %6 : vector<32x128xf32>
    %14 = arith.maximumf %9, %12 : vector<32x128xf32>
    %15 = arith.maximumf %13, %14 : vector<32x128xf32>
    %c0_13 = arith.constant 0 : index
    %c0_14 = arith.constant 0 : index
    %16 = vector.load %arg3[%c0_13, %c0_14] : memref<1x128xf32, #tpu.memory_space<vmem>>, vector<1x128xf32>
    %17 = vector.broadcast %16 : vector<1x128xf32> to vector<32x128xf32>
    %18 = arith.addf %15, %17 : vector<32x128xf32>
    %cst_15 = arith.constant 0.000000e+00 : f32
    %19 = vector.broadcast %cst_15 : f32 to vector<32x128xf32>
    %20 = arith.maximumf %18, %19 : vector<32x128xf32>
    %21 = arith.truncf %20 : vector<32x128xf32> to vector<32x128xbf16>
    %c0_16 = arith.constant 0 : index
    %c0_17 = arith.constant 0 : index
    %22 = vector.load %arg4[%c0_16, %c0_17] : memref<32x128xbf16, #tpu.memory_space<vmem>>, vector<32x128xbf16>
    tpu.vector_store %arg4[%c0_16, %c0_17], %21 {strides = array<i32>} : memref<32x128xbf16, #tpu.memory_space<vmem>>, vector<32x128xbf16>,
    return
  }
  func.func @transform_0(%arg0: i32) -> (i32, i32, i32) {
    %c0_i32 = arith.constant 0 : i32
    %c0_i32_0 = arith.constant 0 : i32
    %c0_i32_1 = arith.constant 0 : i32
    return %c0_i32, %arg0, %c0_i32_0 : i32, i32, i32
  }
  func.func @transform_1(%arg0: i32) -> (i32, i32) {
    %c0_i32 = arith.constant 0 : i32
    %c0_i32_0 = arith.constant 0 : i32
    %c0_i32_1 = arith.constant 0 : i32
    return %c0_i32, %c0_i32_0 : i32, i32
  }
  func.func @transform_2(%arg0: i32) -> (i32, i32) {
    %c0_i32 = arith.constant 0 : i32
    %c0_i32_0 = arith.constant 0 : i32
    %c0_i32_1 = arith.constant 0 : i32
    return %c0_i32, %c0_i32_0 : i32, i32
  }
  func.func @transform_3(%arg0: i32) -> (i32, i32) {
    %c0_i32 = arith.constant 0 : i32
    %c0_i32_0 = arith.constant 0 : i32
    return %arg0, %c0_i32 : i32, i32
  }
}

module attributes {stable_mosaic.version = 11 : i64} {
  func.func @_mlp_kernel(%arg0: i32, %arg1: memref<8x400xbf16, #tpu.memory_space<vmem>>, %arg2: memref<400x128xbf16, #tpu.memory_space<vmem>>, %arg3: memref<1x128xf32, #tpu.memory_space<vmem>>, %arg4: memref<128x128xbf16, #tpu.memory_space<vmem>>, %arg5: memref<1x128xf32, #tpu.memory_space<vmem>>, %arg6: memref<128x128xbf16, #tpu.memory_space<vmem>>, %arg7: memref<1x128xf32, #tpu.memory_space<vmem>>, %arg8: memref<8x128xf32, #tpu.memory_space<vmem>>) attributes {dimension_semantics = [#tpu.dimension_semantics<parallel>], iteration_bounds = array<i64: 2>, scalar_prefetch = 0 : i64, scratch_operands = 0 : i64, tpu.core_type = #tpu.core_type<tc>, window_params = [{transform_indices = @transform_0, window_bounds = array<i64: 8, 400>}, {pipeline_mode = #tpu.pipeline_mode<synchronous>, transform_indices = @transform_1, window_bounds = array<i64: 400, 128>}, {pipeline_mode = #tpu.pipeline_mode<synchronous>, transform_indices = @transform_2, window_bounds = array<i64: 1, 128>}, {pipeline_mode = #tpu.pipeline_mode<synchronous>, transform_indices = @transform_3, window_bounds = array<i64: 128, 128>}, {pipeline_mode = #tpu.pipeline_mode<synchronous>, transform_indices = @transform_4, window_bounds = array<i64: 1, 128>}, {pipeline_mode = #tpu.pipeline_mode<synchronous>, transform_indices = @transform_5, window_bounds = array<i64: 128, 128>}, {pipeline_mode = #tpu.pipeline_mode<synchronous>, transform_indices = @transform_6, window_bounds = array<i64: 1, 128>}, {transform_indices = @transform_7, window_bounds = array<i64: 8, 128>}]} {
    %c0 = arith.constant 0 : index
    %c0_0 = arith.constant 0 : index
    %0 = vector.load %arg1[%c0, %c0_0] : memref<8x400xbf16, #tpu.memory_space<vmem>>, vector<8x400xbf16>
    %c0_1 = arith.constant 0 : index
    %c0_2 = arith.constant 0 : index
    %1 = vector.load %arg2[%c0_1, %c0_2] : memref<400x128xbf16, #tpu.memory_space<vmem>>, vector<400x128xbf16>
    %cst = arith.constant dense<0.000000e+00> : vector<8x128xf32>
    %2 = tpu.matmul %0, %1, %cst {dimension_numbers = #tpu.dot_dimension_numbers<[1], [0], [0], [1], [0, 0, 1, 1], [], []>} : vector<8x400xbf16>, vector<400x128xbf16>, vector<8x128xf32> -> vector<8x128xf32>
    %c0_3 = arith.constant 0 : index
    %c0_4 = arith.constant 0 : index
    %3 = vector.load %arg3[%c0_3, %c0_4] : memref<1x128xf32, #tpu.memory_space<vmem>>, vector<1x128xf32>
    %4 = vector.broadcast %3 : vector<1x128xf32> to vector<8x128xf32>
    %5 = arith.addf %2, %4 : vector<8x128xf32>
    %cst_5 = arith.constant 0.000000e+00 : f32
    %6 = vector.broadcast %cst_5 : f32 to vector<8x128xf32>
    %7 = arith.maximumf %5, %6 : vector<8x128xf32>
    %8 = arith.truncf %7 : vector<8x128xf32> to vector<8x128xbf16>
    %c0_6 = arith.constant 0 : index
    %c0_7 = arith.constant 0 : index
    %9 = vector.load %arg4[%c0_6, %c0_7] : memref<128x128xbf16, #tpu.memory_space<vmem>>, vector<128x128xbf16>
    %cst_8 = arith.constant dense<0.000000e+00> : vector<8x128xf32>
    %10 = tpu.matmul %8, %9, %cst_8 {dimension_numbers = #tpu.dot_dimension_numbers<[1], [0], [0], [1], [0, 0, 1, 1], [], []>} : vector<8x128xbf16>, vector<128x128xbf16>, vector<8x128xf32> -> vector<8x128xf32>
    %c0_9 = arith.constant 0 : index
    %c0_10 = arith.constant 0 : index
    %11 = vector.load %arg5[%c0_9, %c0_10] : memref<1x128xf32, #tpu.memory_space<vmem>>, vector<1x128xf32>
    %12 = vector.broadcast %11 : vector<1x128xf32> to vector<8x128xf32>
    %13 = arith.addf %10, %12 : vector<8x128xf32>
    %cst_11 = arith.constant 0.000000e+00 : f32
    %14 = vector.broadcast %cst_11 : f32 to vector<8x128xf32>
    %15 = arith.maximumf %13, %14 : vector<8x128xf32>
    %16 = arith.truncf %15 : vector<8x128xf32> to vector<8x128xbf16>
    %c0_12 = arith.constant 0 : index
    %c0_13 = arith.constant 0 : index
    %17 = vector.load %arg6[%c0_12, %c0_13] : memref<128x128xbf16, #tpu.memory_space<vmem>>, vector<128x128xbf16>
    %cst_14 = arith.constant dense<0.000000e+00> : vector<8x128xf32>
    %18 = tpu.matmul %16, %17, %cst_14 {dimension_numbers = #tpu.dot_dimension_numbers<[1], [0], [0], [1], [0, 0, 1, 1], [], []>} : vector<8x128xbf16>, vector<128x128xbf16>, vector<8x128xf32> -> vector<8x128xf32>
    %c0_15 = arith.constant 0 : index
    %c0_16 = arith.constant 0 : index
    %19 = vector.load %arg7[%c0_15, %c0_16] : memref<1x128xf32, #tpu.memory_space<vmem>>, vector<1x128xf32>
    %20 = vector.broadcast %19 : vector<1x128xf32> to vector<8x128xf32>
    %21 = arith.addf %18, %20 : vector<8x128xf32>
    %c0_17 = arith.constant 0 : index
    %c0_18 = arith.constant 0 : index
    %22 = vector.load %arg8[%c0_17, %c0_18] : memref<8x128xf32, #tpu.memory_space<vmem>>, vector<8x128xf32>
    tpu.vector_store %arg8[%c0_17, %c0_18], %21 {strides = array<i32>} : memref<8x128xf32, #tpu.memory_space<vmem>>, vector<8x128xf32>,
    return
  }
  func.func @transform_0(%arg0: i32) -> (i32, i32) {
    %c0_i32 = arith.constant 0 : i32
    %c0_i32_0 = arith.constant 0 : i32
    return %arg0, %c0_i32 : i32, i32
  }
  func.func @transform_1(%arg0: i32) -> (i32, i32) {
    %c0_i32 = arith.constant 0 : i32
    %c0_i32_0 = arith.constant 0 : i32
    %c0_i32_1 = arith.constant 0 : i32
    return %c0_i32, %c0_i32_0 : i32, i32
  }
  func.func @transform_2(%arg0: i32) -> (i32, i32) {
    %c0_i32 = arith.constant 0 : i32
    %c0_i32_0 = arith.constant 0 : i32
    %c0_i32_1 = arith.constant 0 : i32
    return %c0_i32, %c0_i32_0 : i32, i32
  }
  func.func @transform_3(%arg0: i32) -> (i32, i32) {
    %c0_i32 = arith.constant 0 : i32
    %c0_i32_0 = arith.constant 0 : i32
    %c0_i32_1 = arith.constant 0 : i32
    return %c0_i32, %c0_i32_0 : i32, i32
  }
  func.func @transform_4(%arg0: i32) -> (i32, i32) {
    %c0_i32 = arith.constant 0 : i32
    %c0_i32_0 = arith.constant 0 : i32
    %c0_i32_1 = arith.constant 0 : i32
    return %c0_i32, %c0_i32_0 : i32, i32
  }
  func.func @transform_5(%arg0: i32) -> (i32, i32) {
    %c0_i32 = arith.constant 0 : i32
    %c0_i32_0 = arith.constant 0 : i32
    %c0_i32_1 = arith.constant 0 : i32
    return %c0_i32, %c0_i32_0 : i32, i32
  }
  func.func @transform_6(%arg0: i32) -> (i32, i32) {
    %c0_i32 = arith.constant 0 : i32
    %c0_i32_0 = arith.constant 0 : i32
    %c0_i32_1 = arith.constant 0 : i32
    return %c0_i32, %c0_i32_0 : i32, i32
  }
  func.func @transform_7(%arg0: i32) -> (i32, i32) {
    %c0_i32 = arith.constant 0 : i32
    %c0_i32_0 = arith.constant 0 : i32
    return %arg0, %c0_i32 : i32, i32
  }
}

</mosaic_0001>

<llo_original>
// kernel: net_forward.3
$region0: #{net_forward.3}
  #allocation0 [shape = 'u32[]', space=smem, size = 0x4, offset = 0x4, fixed_abs, tag = 'smem constant byte address 0x4 - core index']
  #allocation1 [shape = 'u32[144,128]{1,0:T(1,128)}', space=vmem, size = 0x12000, scoped, tag = 'internal scratch']
  %s0 = inlined_call_operand.vmem [shape: bf16[4,400,75], index: 0, kind: input, shape index: {}]
  %s1 = inlined_call_operand.vmem [shape: bf16[75,128], index: 1, kind: input, shape index: {}]
  %s2 = inlined_call_operand.vmem [shape: f32[1,128], index: 2, kind: input, shape index: {}]
  %s3 = inlined_call_operand.vmem [shape: bf16[400,128], index: 3, kind: output, shape index: {}]
  %s4 = sld [smem:[#allocation0]]
  $region86: #{net_forward.3} parent=0
    _
  %s6 = ssub.s32 1, %s4
  %s7 = scalar_select 0, %s6, %s4
  $region1: #{net_forward.3} parent=0
    #allocation2 [shape = 'u8[409600]{0}', space=vmem, size = 0x64000, scoped, tag = 'input window, operand 0']
    loop: start=0, step=1, limit=4
    $region2: #{net_forward.3} parent=1 // loop_pre_header
      _
    $region3: #{net_forward.3} parent=1 // loop_header
      %s9 = sphi 0, %s13
      %p10 = scmp.ge.s32.totalorder %s9, 4
      %s19 = sphi 0, %s21
      %s22 = sphi 0, %s19
      %s23 = sphi 0, %s22
      %s39 = sphi 0, %s23
      %s43 = sphi 0, %s43
      %s45 = sphi 0, %s43
      %s46 = sphi 0, %s45
      %s60 = sphi 0, %s46
      %s64 = sphi 0, %s64
      %s66 = sphi 0, %s64
      %s67 = sphi 0, %s66
      %s81 = sphi 0, %s67
      %s87 = sphi 0, %s89
      %s90 = sphi 0, %s87
      %s91 = sphi 0, %s90
      %s107 = sphi 0, %s91
    $region4: #{net_forward.3} parent=1 // loop_header_branch
      %12 = sbr.rel (%p10) target = $region8
    $region5: #{net_forward.3} parent=1 // loop_body
      %s14 = ssub.s32 %s9, 1
      %s15 = ssub.s32 %s9, 2
      %s16 = sadd.s32 %s9, 1
      %s17 = ssub.s32 %s9, %s16
      %p18 = scmp.eq.s32.totalorder %s17, 0
      %s20 = sadd.s32 %s19, 1
      %s21 = scalar_select %p18, %s19, %s20
      %p24 = pneg %p18
      %p25 = scmp.eq.s32.totalorder %s9, 1
      %p26 = por %p24, %p25
      %p27 = scmp.ne.s32.totalorder %s19, %s22
      %p28 = scmp.eq.s32.totalorder %s9, 0
      %p29 = por %p27, %p28
      %p30 = scmp.ne.s32.totalorder %s19, %s22
      %p31 = scmp.eq.s32.totalorder %s14, 1
      %p32 = por %p30, %p31
      %p33 = scmp.ne.s32.totalorder %s22, %s23
      %p34 = scmp.eq.s32.totalorder %s14, 0
      %p35 = por %p33, %p34
      %p36 = scmp.ne.s32.totalorder %s22, %s23
      %p37 = scmp.eq.s32.totalorder %s15, 1
      %p38 = por %p36, %p37
      %p40 = scmp.ne.s32.totalorder %s23, %s39
      %p41 = scmp.eq.s32.totalorder %s15, 0
      %p42 = por %p40, %p41
      %s44 = sadd.s32 %s43, 1
      %p47 = scmp.eq.s32.totalorder %s9, 1
      %p48 = scmp.ne.s32.totalorder %s43, %s45
      %p49 = scmp.eq.s32.totalorder %s9, 0
      %p50 = por %p48, %p49
      %p51 = scmp.ne.s32.totalorder %s43, %s45
      %p52 = scmp.eq.s32.totalorder %s14, 1
      %p53 = por %p51, %p52
      %p54 = scmp.ne.s32.totalorder %s45, %s46
      %p55 = scmp.eq.s32.totalorder %s14, 0
      %p56 = por %p54, %p55
      %p57 = scmp.ne.s32.totalorder %s45, %s46
      %p58 = scmp.eq.s32.totalorder %s15, 1
      %p59 = por %p57, %p58
      %p61 = scmp.ne.s32.totalorder %s46, %s60
      %p62 = scmp.eq.s32.totalorder %s15, 0
      %p63 = por %p61, %p62
      %s65 = sadd.s32 %s64, 1
      %p68 = scmp.eq.s32.totalorder %s9, 1
      %p69 = scmp.ne.s32.totalorder %s64, %s66
      %p70 = scmp.eq.s32.totalorder %s9, 0
      %p71 = por %p69, %p70
      %p72 = scmp.ne.s32.totalorder %s64, %s66
      %p73 = scmp.eq.s32.totalorder %s14, 1
      %p74 = por %p72, %p73
      %p75 = scmp.ne.s32.totalorder %s66, %s67
      %p76 = scmp.eq.s32.totalorder %s14, 0
      %p77 = por %p75, %p76
      %p78 = scmp.ne.s32.totalorder %s66, %s67
      %p79 = scmp.eq.s32.totalorder %s15, 1
      %p80 = por %p78, %p79
      %p82 = scmp.ne.s32.totalorder %s67, %s81
      %p83 = scmp.eq.s32.totalorder %s15, 0
      %p84 = por %p82, %p83
      %s85 = ssub.s32 %s9, %s16
      %p86 = scmp.eq.s32.totalorder %s85, 0
      %s88 = sadd.s32 %s87, 1
      %s89 = scalar_select %p86, %s87, %s88
      %p92 = pneg %p86
      %p93 = scmp.eq.s32.totalorder %s9, 1
      %p94 = por %p92, %p93
      %p95 = scmp.ne.s32.totalorder %s87, %s90
      %p96 = scmp.eq.s32.totalorder %s9, 0
      %p97 = por %p95, %p96
      %p98 = scmp.ne.s32.totalorder %s87, %s90
      %p99 = scmp.eq.s32.totalorder %s14, 1
      %p100 = por %p98, %p99
      %p101 = scmp.ne.s32.totalorder %s90, %s91
      %p102 = scmp.eq.s32.totalorder %s14, 0
      %p103 = por %p101, %p102
      %p104 = scmp.ne.s32.totalorder %s90, %s91
      %p105 = scmp.eq.s32.totalorder %s15, 1
      %p106 = por %p104, %p105
      %p108 = scmp.ne.s32.totalorder %s91, %s107
      %p109 = scmp.eq.s32.totalorder %s15, 0
      %p110 = por %p108, %p109
      %p111 = scmp.le.s32.totalorder 1, %s9
      %p112 = scmp.lt.s32.totalorder %s9, 3
      %p113 = pnand %p111, %p112
      %p114 = pneg %p113
      // Predicated region
      $region9: #{net_forward.3} parent=5 // pred_check
        _
      $region10: #{net_forward.3} parent=5 // pred_check_branch
        %116 = sbr.rel (%p113) target = $region12
      $region11: #{net_forward.3} parent=5 // pred_region
        %s117 = ssub.s32 %s9, 1
        // Predicated region
        $region13: #{net_forward.3} parent=11 // pred_check
          %p118 = pneg %p56
        $region14: #{net_forward.3} parent=11 // pred_check_branch
          %120 = sbr.rel (%p118) target = $region16
        $region15: #{net_forward.3} parent=11 // pred_region
          _
        $region16: #{net_forward.3} parent=11 // pred_fallthru
          _
        // Predicated region
        $region17: #{net_forward.3} parent=11 // pred_check
          %p121 = pneg %p77
        $region18: #{net_forward.3} parent=11 // pred_check_branch
          %123 = sbr.rel (%p121) target = $region20
        $region19: #{net_forward.3} parent=11 // pred_region
          _
        $region20: #{net_forward.3} parent=11 // pred_fallthru
          _
      $region12: #{net_forward.3} parent=5 // pred_fallthru
        _
      %p124 = scmp.lt.s32.totalorder %s9, 2
      // Predicated region
      $region21: #{net_forward.3} parent=5 // pred_check
        %p125 = pneg %p124
      $region22: #{net_forward.3} parent=5 // pred_check_branch
        %127 = sbr.rel (%p125) target = $region24
      $region23: #{net_forward.3} parent=5 // pred_region
        // Predicated region
        $region25: #{net_forward.3} parent=23 // pred_check
          %p128 = pneg %p29
        $region26: #{net_forward.3} parent=23 // pred_check_branch
          %130 = sbr.rel (%p128) target = $region28
        $region27: #{net_forward.3} parent=23 // pred_region
          %s131 = sand.u32 %s19, 1
          %s132 = sand.u32 %s19, 1
          %s133 = smul.addr %s132, 400
          %s134 = scalar_lea.vmem [#allocation2], %s133
          %s135 = smul.u32 25, %s9
          %s136 = smul.addr %s135, 4
          %s137 = scalar_lea.vmem %s0, %s136
          // Predicated region
          $region29: #{net_forward.3} parent=27 // pred_check
            _
          $region30: #{net_forward.3} parent=27 // pred_check_branch
            %139 = sbr.rel (0) target = $region32
          $region31: #{net_forward.3} parent=27 // pred_region
            // Predicated region
            $region33: #{net_forward.3} parent=31 // pred_check
              _
            $region34: #{net_forward.3} parent=31 // pred_check_branch
              %141 = sbr.rel target = $region36
            $region35: #{net_forward.3} parent=31 // pred_region
              // Predicated region
              $region48: #{net_forward.3} parent=35 // pred_check
                _
              $region49: #{net_forward.3} parent=35 // pred_check_branch
                %354 = sbr.rel (0) target = $region51
              $region50: #{net_forward.3} parent=35 // pred_region
                loop: start=0, step=1, limit=1
                $region52: #{net_forward.3} parent=50 // loop_pre_header
                  _
                $region53: #{net_forward.3} parent=50 // loop_header
                  %s356 = sphi 0, %s360
                  %p357 = scmp.ge.s32.totalorder %s356, 1
                  %s361 = sphi %s137, %s137
                  %s362 = sphi %s134, %s134
                $region54: #{net_forward.3} parent=50 // loop_header_branch
                  %359 = sbr.rel (%p357) target = $region58
                $region55: #{net_forward.3} parent=50 // loop_body
                  _
                $region56: #{net_forward.3} parent=50 // loop_footer
                  %s360 = sadd.s32 1, %s356
                $region57: #{net_forward.3} parent=50 // loop_footer_branch
                  %355 = sbr.rel target = $region53
                $region58: #{net_forward.3} parent=50 // loop_exit
                  _
                loop: start=0, step=1, limit=1
                $region59: #{net_forward.3} parent=50 // loop_pre_header
                  _
                $region60: #{net_forward.3} parent=50 // loop_header
                  %s365 = sphi 0, %s369
                  %p366 = scmp.ge.s32.totalorder %s365, 1
                  %s370 = sphi %s137, %s137
                  %s371 = sphi %s134, %s134
                $region61: #{net_forward.3} parent=50 // loop_header_branch
                  %368 = sbr.rel (%p366) target = $region65
                $region62: #{net_forward.3} parent=50 // loop_body
                  %v372 = vld [vmem:[%s370] sm:$0xf]
                  %373 = vst [vmem:[%s371] sm:$0xf] %v372
                  %v374 = vld [vmem:[%s370 + $0x4] sm:$0xf]
                  %375 = vst [vmem:[%s371 + $0x4] sm:$0xf] %v374
                  %v376 = vld [vmem:[%s370 + $0x8] sm:$0xf]
                  %377 = vst [vmem:[%s371 + $0x8] sm:$0xf] %v376
                  %v378 = vld [vmem:[%s370 + $0xc] sm:$0xf]
                  %379 = vst [vmem:[%s371 + $0xc] sm:$0xf] %v378
                  %v380 = vld [vmem:[%s370 + $0x10] sm:$0xf]
                  %381 = vst [vmem:[%s371 + $0x10] sm:$0xf] %v380
                  %v382 = vld [vmem:[%s370 + $0x14] sm:$0xf]
                  %383 = vst [vmem:[%s371 + $0x14] sm:$0xf] %v382
                  %v384 = vld [vmem:[%s370 + $0x18] sm:$0xf]
                  %385 = vst [vmem:[%s371 + $0x18] sm:$0xf] %v384
                  %v386 = vld [vmem:[%s370 + $0x1c] sm:$0xf]
                  %387 = vst [vmem:[%s371 + $0x1c] sm:$0xf] %v386
                  %v388 = vld [vmem:[%s370 + $0x20] sm:$0xf]
                  %389 = vst [vmem:[%s371 + $0x20] sm:$0xf] %v388
                  %v390 = vld [vmem:[%s370 + $0x24] sm:$0xf]
                  %391 = vst [vmem:[%s371 + $0x24] sm:$0xf] %v390
                  %v392 = vld [vmem:[%s370 + $0x28] sm:$0xf]
                  %393 = vst [vmem:[%s371 + $0x28] sm:$0xf] %v392
                  %v394 = vld [vmem:[%s370 + $0x2c] sm:$0xf]
                  %395 = vst [vmem:[%s371 + $0x2c] sm:$0xf] %v394
                  %v396 = vld [vmem:[%s370 + $0x30] sm:$0xf]
                  %397 = vst [vmem:[%s371 + $0x30] sm:$0xf] %v396
                  %v398 = vld [vmem:[%s370 + $0x34] sm:$0xf]
                  %399 = vst [vmem:[%s371 + $0x34] sm:$0xf] %v398
                  %v400 = vld [vmem:[%s370 + $0x38] sm:$0xf]
                  %401 = vst [vmem:[%s371 + $0x38] sm:$0xf] %v400
                  %v402 = vld [vmem:[%s370 + $0x3c] sm:$0xf]
                  %403 = vst [vmem:[%s371 + $0x3c] sm:$0xf] %v402
                  %v404 = vld [vmem:[%s370 + $0x40] sm:$0xf]
                  %405 = vst [vmem:[%s371 + $0x40] sm:$0xf] %v404
                  %v406 = vld [vmem:[%s370 + $0x44] sm:$0xf]
                  %407 = vst [vmem:[%s371 + $0x44] sm:$0xf] %v406
                  %v408 = vld [vmem:[%s370 + $0x48] sm:$0xf]
                  %409 = vst [vmem:[%s371 + $0x48] sm:$0xf] %v408
                  %v410 = vld [vmem:[%s370 + $0x4c] sm:$0xf]
                  %411 = vst [vmem:[%s371 + $0x4c] sm:$0xf] %v410
                  %v412 = vld [vmem:[%s370 + $0x50] sm:$0xf]
                  %413 = vst [vmem:[%s371 + $0x50] sm:$0xf] %v412
                  %v414 = vld [vmem:[%s370 + $0x54] sm:$0xf]
                  %415 = vst [vmem:[%s371 + $0x54] sm:$0xf] %v414
                  %v416 = vld [vmem:[%s370 + $0x58] sm:$0xf]
                  %417 = vst [vmem:[%s371 + $0x58] sm:$0xf] %v416
                  %v418 = vld [vmem:[%s370 + $0x5c] sm:$0xf]
                  %419 = vst [vmem:[%s371 + $0x5c] sm:$0xf] %v418
                  %v420 = vld [vmem:[%s370 + $0x60] sm:$0xf]
                  %421 = vst [vmem:[%s371 + $0x60] sm:$0xf] %v420
                  %v422 = vld [vmem:[%s370 + $0xc8] sm:$0xf]
                  %423 = vst [vmem:[%s371 + $0x64] sm:$0xf] %v422
                  %v424 = vld [vmem:[%s370 + $0xcc] sm:$0xf]
                  %425 = vst [vmem:[%s371 + $0x68] sm:$0xf] %v424
                  %v426 = vld [vmem:[%s370 + $0xd0] sm:$0xf]
                  %427 = vst [vmem:[%s371 + $0x6c] sm:$0xf] %v426
                  %v428 = vld [vmem:[%s370 + $0xd4] sm:$0xf]
                  %429 = vst [vmem:[%s371 + $0x70] sm:$0xf] %v428
                  %v430 = vld [vmem:[%s370 + $0xd8] sm:$0xf]
                  %431 = vst [vmem:[%s371 + $0x74] sm:$0xf] %v430
                  %v432 = vld [vmem:[%s370 + $0xdc] sm:$0xf]
                  %433 = vst [vmem:[%s371 + $0x78] sm:$0xf] %v432
                  %v434 = vld [vmem:[%s370 + $0xe0] sm:$0xf]
                  %435 = vst [vmem:[%s371 + $0x7c] sm:$0xf] %v434
                  %v436 = vld [vmem:[%s370 + $0xe4] sm:$0xf]
                  %437 = vst [vmem:[%s371 + $0x80] sm:$0xf] %v436
                  %v438 = vld [vmem:[%s370 + $0xe8] sm:$0xf]
                  %439 = vst [vmem:[%s371 + $0x84] sm:$0xf] %v438
                  %v440 = vld [vmem:[%s370 + $0xec] sm:$0xf]
                  %441 = vst [vmem:[%s371 + $0x88] sm:$0xf] %v440
                  %v442 = vld [vmem:[%s370 + $0xf0] sm:$0xf]
                  %443 = vst [vmem:[%s371 + $0x8c] sm:$0xf] %v442
                  %v444 = vld [vmem:[%s370 + $0xf4] sm:$0xf]
                  %445 = vst [vmem:[%s371 + $0x90] sm:$0xf] %v444
                  %v446 = vld [vmem:[%s370 + $0xf8] sm:$0xf]
                  %447 = vst [vmem:[%s371 + $0x94] sm:$0xf] %v446
                  %v448 = vld [vmem:[%s370 + $0xfc] sm:$0xf]
                  %449 = vst [vmem:[%s371 + $0x98] sm:$0xf] %v448
                  %v450 = vld [vmem:[%s370 + $0x100] sm:$0xf]
                  %451 = vst [vmem:[%s371 + $0x9c] sm:$0xf] %v450
                  %v452 = vld [vmem:[%s370 + $0x104] sm:$0xf]
                  %453 = vst [vmem:[%s371 + $0xa0] sm:$0xf] %v452
                  %v454 = vld [vmem:[%s370 + $0x108] sm:$0xf]
                  %455 = vst [vmem:[%s371 + $0xa4] sm:$0xf] %v454
                  %v456 = vld [vmem:[%s370 + $0x10c] sm:$0xf]
                  %457 = vst [vmem:[%s371 + $0xa8] sm:$0xf] %v456
                  %v458 = vld [vmem:[%s370 + $0x110] sm:$0xf]
                  %459 = vst [vmem:[%s371 + $0xac] sm:$0xf] %v458
                  %v460 = vld [vmem:[%s370 + $0x114] sm:$0xf]
                  %461 = vst [vmem:[%s371 + $0xb0] sm:$0xf] %v460
                  %v462 = vld [vmem:[%s370 + $0x118] sm:$0xf]
                  %463 = vst [vmem:[%s371 + $0xb4] sm:$0xf] %v462
                  %v464 = vld [vmem:[%s370 + $0x11c] sm:$0xf]
                  %465 = vst [vmem:[%s371 + $0xb8] sm:$0xf] %v464
                  %v466 = vld [vmem:[%s370 + $0x120] sm:$0xf]
                  %467 = vst [vmem:[%s371 + $0xbc] sm:$0xf] %v466
                  %v468 = vld [vmem:[%s370 + $0x124] sm:$0xf]
                  %469 = vst [vmem:[%s371 + $0xc0] sm:$0xf] %v468
                  %v470 = vld [vmem:[%s370 + $0x128] sm:$0xf]
                  %471 = vst [vmem:[%s371 + $0xc4] sm:$0xf] %v470
                  %v472 = vld [vmem:[%s370 + $0x190] sm:$0xf]
                  %473 = vst [vmem:[%s371 + $0xc8] sm:$0xf] %v472
                  %v474 = vld [vmem:[%s370 + $0x194] sm:$0xf]
                  %475 = vst [vmem:[%s371 + $0xcc] sm:$0xf] %v474
                  %v476 = vld [vmem:[%s370 + $0x198] sm:$0xf]
                  %477 = vst [vmem:[%s371 + $0xd0] sm:$0xf] %v476
                  %v478 = vld [vmem:[%s370 + $0x19c] sm:$0xf]
                  %479 = vst [vmem:[%s371 + $0xd4] sm:$0xf] %v478
                  %v480 = vld [vmem:[%s370 + $0x1a0] sm:$0xf]
                  %481 = vst [vmem:[%s371 + $0xd8] sm:$0xf] %v480
                  %v482 = vld [vmem:[%s370 + $0x1a4] sm:$0xf]
                  %483 = vst [vmem:[%s371 + $0xdc] sm:$0xf] %v482
                  %v484 = vld [vmem:[%s370 + $0x1a8] sm:$0xf]
                  %485 = vst [vmem:[%s371 + $0xe0] sm:$0xf] %v484
                  %v486 = vld [vmem:[%s370 + $0x1ac] sm:$0xf]
                  %487 = vst [vmem:[%s371 + $0xe4] sm:$0xf] %v486
                  %v488 = vld [vmem:[%s370 + $0x1b0] sm:$0xf]
                  %489 = vst [vmem:[%s371 + $0xe8] sm:$0xf] %v488
                  %v490 = vld [vmem:[%s370 + $0x1b4] sm:$0xf]
                  %491 = vst [vmem:[%s371 + $0xec] sm:$0xf] %v490
                  %v492 = vld [vmem:[%s370 + $0x1b8] sm:$0xf]
                  %493 = vst [vmem:[%s371 + $0xf0] sm:$0xf] %v492
                  %v494 = vld [vmem:[%s370 + $0x1bc] sm:$0xf]
                  %495 = vst [vmem:[%s371 + $0xf4] sm:$0xf] %v494
                  %v496 = vld [vmem:[%s370 + $0x1c0] sm:$0xf]
                  %497 = vst [vmem:[%s371 + $0xf8] sm:$0xf] %v496
                  %v498 = vld [vmem:[%s370 + $0x1c4] sm:$0xf]
                  %499 = vst [vmem:[%s371 + $0xfc] sm:$0xf] %v498
                  %v500 = vld [vmem:[%s370 + $0x1c8] sm:$0xf]
                  %501 = vst [vmem:[%s371 + $0x100] sm:$0xf] %v500
                  %v502 = vld [vmem:[%s370 + $0x1cc] sm:$0xf]
                  %503 = vst [vmem:[%s371 + $0x104] sm:$0xf] %v502
                  %v504 = vld [vmem:[%s370 + $0x1d0] sm:$0xf]
                  %505 = vst [vmem:[%s371 + $0x108] sm:$0xf] %v504
                  %v506 = vld [vmem:[%s370 + $0x1d4] sm:$0xf]
                  %507 = vst [vmem:[%s371 + $0x10c] sm:$0xf] %v506
                  %v508 = vld [vmem:[%s370 + $0x1d8] sm:$0xf]
                  %509 = vst [vmem:[%s371 + $0x110] sm:$0xf] %v508
                  %v510 = vld [vmem:[%s370 + $0x1dc] sm:$0xf]
                  %511 = vst [vmem:[%s371 + $0x114] sm:$0xf] %v510
                  %v512 = vld [vmem:[%s370 + $0x1e0] sm:$0xf]
                  %513 = vst [vmem:[%s371 + $0x118] sm:$0xf] %v512
                  %v514 = vld [vmem:[%s370 + $0x1e4] sm:$0xf]
                  %515 = vst [vmem:[%s371 + $0x11c] sm:$0xf] %v514
                  %v516 = vld [vmem:[%s370 + $0x1e8] sm:$0xf]
                  %517 = vst [vmem:[%s371 + $0x120] sm:$0xf] %v516
                  %v518 = vld [vmem:[%s370 + $0x1ec] sm:$0xf]
                  %519 = vst [vmem:[%s371 + $0x124] sm:$0xf] %v518
                  %v520 = vld [vmem:[%s370 + $0x1f0] sm:$0xf]
                  %521 = vst [vmem:[%s371 + $0x128] sm:$0xf] %v520
                  %v522 = vld [vmem:[%s370 + $0x258] sm:$0xf]
                  %523 = vst [vmem:[%s371 + $0x12c] sm:$0xf] %v522
                  %v524 = vld [vmem:[%s370 + $0x25c] sm:$0xf]
                  %525 = vst [vmem:[%s371 + $0x130] sm:$0xf] %v524
                  %v526 = vld [vmem:[%s370 + $0x260] sm:$0xf]
                  %527 = vst [vmem:[%s371 + $0x134] sm:$0xf] %v526
                  %v528 = vld [vmem:[%s370 + $0x264] sm:$0xf]
                  %529 = vst [vmem:[%s371 + $0x138] sm:$0xf] %v528
                  %v530 = vld [vmem:[%s370 + $0x268] sm:$0xf]
                  %531 = vst [vmem:[%s371 + $0x13c] sm:$0xf] %v530
                  %v532 = vld [vmem:[%s370 + $0x26c] sm:$0xf]
                  %533 = vst [vmem:[%s371 + $0x140] sm:$0xf] %v532
                  %v534 = vld [vmem:[%s370 + $0x270] sm:$0xf]
                  %535 = vst [vmem:[%s371 + $0x144] sm:$0xf] %v534
                  %v536 = vld [vmem:[%s370 + $0x274] sm:$0xf]
                  %537 = vst [vmem:[%s371 + $0x148] sm:$0xf] %v536
                  %v538 = vld [vmem:[%s370 + $0x278] sm:$0xf]
                  %539 = vst [vmem:[%s371 + $0x14c] sm:$0xf] %v538
                  %v540 = vld [vmem:[%s370 + $0x27c] sm:$0xf]
                  %541 = vst [vmem:[%s371 + $0x150] sm:$0xf] %v540
                  %v542 = vld [vmem:[%s370 + $0x280] sm:$0xf]
                  %543 = vst [vmem:[%s371 + $0x154] sm:$0xf] %v542
                  %v544 = vld [vmem:[%s370 + $0x284] sm:$0xf]
                  %545 = vst [vmem:[%s371 + $0x158] sm:$0xf] %v544
                  %v546 = vld [vmem:[%s370 + $0x288] sm:$0xf]
                  %547 = vst [vmem:[%s371 + $0x15c] sm:$0xf] %v546
                  %v548 = vld [vmem:[%s370 + $0x28c] sm:$0xf]
                  %549 = vst [vmem:[%s371 + $0x160] sm:$0xf] %v548
                  %v550 = vld [vmem:[%s370 + $0x290] sm:$0xf]
                  %551 = vst [vmem:[%s371 + $0x164] sm:$0xf] %v550
                  %v552 = vld [vmem:[%s370 + $0x294] sm:$0xf]
                  %553 = vst [vmem:[%s371 + $0x168] sm:$0xf] %v552
                  %v554 = vld [vmem:[%s370 + $0x298] sm:$0xf]
                  %555 = vst [vmem:[%s371 + $0x16c] sm:$0xf] %v554
                  %v556 = vld [vmem:[%s370 + $0x29c] sm:$0xf]
                  %557 = vst [vmem:[%s371 + $0x170] sm:$0xf] %v556
                  %v558 = vld [vmem:[%s370 + $0x2a0] sm:$0xf]
                  %559 = vst [vmem:[%s371 + $0x174] sm:$0xf] %v558
                  %v560 = vld [vmem:[%s370 + $0x2a4] sm:$0xf]
                  %561 = vst [vmem:[%s371 + $0x178] sm:$0xf] %v560
                  %v562 = vld [vmem:[%s370 + $0x2a8] sm:$0xf]
                  %563 = vst [vmem:[%s371 + $0x17c] sm:$0xf] %v562
                  %v564 = vld [vmem:[%s370 + $0x2ac] sm:$0xf]
                  %565 = vst [vmem:[%s371 + $0x180] sm:$0xf] %v564
                  %v566 = vld [vmem:[%s370 + $0x2b0] sm:$0xf]
                  %567 = vst [vmem:[%s371 + $0x184] sm:$0xf] %v566
                  %v568 = vld [vmem:[%s370 + $0x2b4] sm:$0xf]
                  %569 = vst [vmem:[%s371 + $0x188] sm:$0xf] %v568
                  %v570 = vld [vmem:[%s370 + $0x2b8] sm:$0xf]
                  %571 = vst [vmem:[%s371 + $0x18c] sm:$0xf] %v570
                $region63: #{net_forward.3} parent=50 // loop_footer
                  %s369 = sadd.s32 1, %s365
                $region64: #{net_forward.3} parent=50 // loop_footer_branch
                  %364 = sbr.rel target = $region60
                $region65: #{net_forward.3} parent=50 // loop_exit
                  _
              $region51: #{net_forward.3} parent=35 // pred_fallthru
                _
            $region36: #{net_forward.3} parent=31 // pred_fallthru
              _
            // Predicated region
            $region37: #{net_forward.3} parent=31 // pred_check
              _
            $region38: #{net_forward.3} parent=31 // pred_check_branch
              %143 = sbr.rel (0) target = $region40
            $region39: #{net_forward.3} parent=31 // pred_region
              loop: start=0, step=1, limit=1
              $region41: #{net_forward.3} parent=39 // loop_pre_header
                _
              $region42: #{net_forward.3} parent=39 // loop_header
                %s146 = sphi 0, %s150
                %p147 = scmp.ge.s32.totalorder %s146, 1
                %s151 = sphi %s137, %s137
                %s152 = sphi %s134, %s134
              $region43: #{net_forward.3} parent=39 // loop_header_branch
                %149 = sbr.rel (%p147) target = $region47
              $region44: #{net_forward.3} parent=39 // loop_body
                %v153 = vld [vmem:[%s151] sm:$0xf]
                %154 = vst [vmem:[%s152] sm:$0xf] %v153
                %v155 = vld [vmem:[%s151 + $0x4] sm:$0xf]
                %156 = vst [vmem:[%s152 + $0x4] sm:$0xf] %v155
                %v157 = vld [vmem:[%s151 + $0x8] sm:$0xf]
                %158 = vst [vmem:[%s152 + $0x8] sm:$0xf] %v157
                %v159 = vld [vmem:[%s151 + $0xc] sm:$0xf]
                %160 = vst [vmem:[%s152 + $0xc] sm:$0xf] %v159
                %v161 = vld [vmem:[%s151 + $0x10] sm:$0xf]
                %162 = vst [vmem:[%s152 + $0x10] sm:$0xf] %v161
                %v163 = vld [vmem:[%s151 + $0x14] sm:$0xf]
                %164 = vst [vmem:[%s152 + $0x14] sm:$0xf] %v163
                %v165 = vld [vmem:[%s151 + $0x18] sm:$0xf]
                %166 = vst [vmem:[%s152 + $0x18] sm:$0xf] %v165
                %v167 = vld [vmem:[%s151 + $0x1c] sm:$0xf]
                %168 = vst [vmem:[%s152 + $0x1c] sm:$0xf] %v167
                %v169 = vld [vmem:[%s151 + $0x20] sm:$0xf]
                %170 = vst [vmem:[%s152 + $0x20] sm:$0xf] %v169
                %v171 = vld [vmem:[%s151 + $0x24] sm:$0xf]
                %172 = vst [vmem:[%s152 + $0x24] sm:$0xf] %v171
                %v173 = vld [vmem:[%s151 + $0x28] sm:$0xf]
                %174 = vst [vmem:[%s152 + $0x28] sm:$0xf] %v173
                %v175 = vld [vmem:[%s151 + $0x2c] sm:$0xf]
                %176 = vst [vmem:[%s152 + $0x2c] sm:$0xf] %v175
                %v177 = vld [vmem:[%s151 + $0x30] sm:$0xf]
                %178 = vst [vmem:[%s152 + $0x30] sm:$0xf] %v177
                %v179 = vld [vmem:[%s151 + $0x34] sm:$0xf]
                %180 = vst [vmem:[%s152 + $0x34] sm:$0xf] %v179
                %v181 = vld [vmem:[%s151 + $0x38] sm:$0xf]
                %182 = vst [vmem:[%s152 + $0x38] sm:$0xf] %v181
                %v183 = vld [vmem:[%s151 + $0x3c] sm:$0xf]
                %184 = vst [vmem:[%s152 + $0x3c] sm:$0xf] %v183
                %v185 = vld [vmem:[%s151 + $0x40] sm:$0xf]
                %186 = vst [vmem:[%s152 + $0x40] sm:$0xf] %v185
                %v187 = vld [vmem:[%s151 + $0x44] sm:$0xf]
                %188 = vst [vmem:[%s152 + $0x44] sm:$0xf] %v187
                %v189 = vld [vmem:[%s151 + $0x48] sm:$0xf]
                %190 = vst [vmem:[%s152 + $0x48] sm:$0xf] %v189
                %v191 = vld [vmem:[%s151 + $0x4c] sm:$0xf]
                %192 = vst [vmem:[%s152 + $0x4c] sm:$0xf] %v191
                %v193 = vld [vmem:[%s151 + $0x50] sm:$0xf]
                %194 = vst [vmem:[%s152 + $0x50] sm:$0xf] %v193
                %v195 = vld [vmem:[%s151 + $0x54] sm:$0xf]
                %196 = vst [vmem:[%s152 + $0x54] sm:$0xf] %v195
                %v197 = vld [vmem:[%s151 + $0x58] sm:$0xf]
                %198 = vst [vmem:[%s152 + $0x58] sm:$0xf] %v197
                %v199 = vld [vmem:[%s151 + $0x5c] sm:$0xf]
                %200 = vst [vmem:[%s152 + $0x5c] sm:$0xf] %v199
                %v201 = vld [vmem:[%s151 + $0x60] sm:$0xf]
                %202 = vst [vmem:[%s152 + $0x60] sm:$0xf] %v201
                %v203 = vld [vmem:[%s151 + $0xc8] sm:$0xf]
                %204 = vst [vmem:[%s152 + $0x64] sm:$0xf] %v203
                %v205 = vld [vmem:[%s151 + $0xcc] sm:$0xf]
                %206 = vst [vmem:[%s152 + $0x68] sm:$0xf] %v205
                %v207 = vld [vmem:[%s151 + $0xd0] sm:$0xf]
                %208 = vst [vmem:[%s152 + $0x6c] sm:$0xf] %v207
                %v209 = vld [vmem:[%s151 + $0xd4] sm:$0xf]
                %210 = vst [vmem:[%s152 + $0x70] sm:$0xf] %v209
                %v211 = vld [vmem:[%s151 + $0xd8] sm:$0xf]
                %212 = vst [vmem:[%s152 + $0x74] sm:$0xf] %v211
                %v213 = vld [vmem:[%s151 + $0xdc] sm:$0xf]
                %214 = vst [vmem:[%s152 + $0x78] sm:$0xf] %v213
                %v215 = vld [vmem:[%s151 + $0xe0] sm:$0xf]
                %216 = vst [vmem:[%s152 + $0x7c] sm:$0xf] %v215
                %v217 = vld [vmem:[%s151 + $0xe4] sm:$0xf]
                %218 = vst [vmem:[%s152 + $0x80] sm:$0xf] %v217
                %v219 = vld [vmem:[%s151 + $0xe8] sm:$0xf]
                %220 = vst [vmem:[%s152 + $0x84] sm:$0xf] %v219
                %v221 = vld [vmem:[%s151 + $0xec] sm:$0xf]
                %222 = vst [vmem:[%s152 + $0x88] sm:$0xf] %v221
                %v223 = vld [vmem:[%s151 + $0xf0] sm:$0xf]
                %224 = vst [vmem:[%s152 + $0x8c] sm:$0xf] %v223
                %v225 = vld [vmem:[%s151 + $0xf4] sm:$0xf]
                %226 = vst [vmem:[%s152 + $0x90] sm:$0xf] %v225
                %v227 = vld [vmem:[%s151 + $0xf8] sm:$0xf]
                %228 = vst [vmem:[%s152 + $0x94] sm:$0xf] %v227
                %v229 = vld [vmem:[%s151 + $0xfc] sm:$0xf]
                %230 = vst [vmem:[%s152 + $0x98] sm:$0xf] %v229
                %v231 = vld [vmem:[%s151 + $0x100] sm:$0xf]
                %232 = vst [vmem:[%s152 + $0x9c] sm:$0xf] %v231
                %v233 = vld [vmem:[%s151 + $0x104] sm:$0xf]
                %234 = vst [vmem:[%s152 + $0xa0] sm:$0xf] %v233
                %v235 = vld [vmem:[%s151 + $0x108] sm:$0xf]
                %236 = vst [vmem:[%s152 + $0xa4] sm:$0xf] %v235
                %v237 = vld [vmem:[%s151 + $0x10c] sm:$0xf]
                %238 = vst [vmem:[%s152 + $0xa8] sm:$0xf] %v237
                %v239 = vld [vmem:[%s151 + $0x110] sm:$0xf]
                %240 = vst [vmem:[%s152 + $0xac] sm:$0xf] %v239
                %v241 = vld [vmem:[%s151 + $0x114] sm:$0xf]
                %242 = vst [vmem:[%s152 + $0xb0] sm:$0xf] %v241
                %v243 = vld [vmem:[%s151 + $0x118] sm:$0xf]
                %244 = vst [vmem:[%s152 + $0xb4] sm:$0xf] %v243
                %v245 = vld [vmem:[%s151 + $0x11c] sm:$0xf]
                %246 = vst [vmem:[%s152 + $0xb8] sm:$0xf] %v245
                %v247 = vld [vmem:[%s151 + $0x120] sm:$0xf]
                %248 = vst [vmem:[%s152 + $0xbc] sm:$0xf] %v247
                %v249 = vld [vmem:[%s151 + $0x124] sm:$0xf]
                %250 = vst [vmem:[%s152 + $0xc0] sm:$0xf] %v249
                %v251 = vld [vmem:[%s151 + $0x128] sm:$0xf]
                %252 = vst [vmem:[%s152 + $0xc4] sm:$0xf] %v251
                %v253 = vld [vmem:[%s151 + $0x190] sm:$0xf]
                %254 = vst [vmem:[%s152 + $0xc8] sm:$0xf] %v253
                %v255 = vld [vmem:[%s151 + $0x194] sm:$0xf]
                %256 = vst [vmem:[%s152 + $0xcc] sm:$0xf] %v255
                %v257 = vld [vmem:[%s151 + $0x198] sm:$0xf]
                %258 = vst [vmem:[%s152 + $0xd0] sm:$0xf] %v257
                %v259 = vld [vmem:[%s151 + $0x19c] sm:$0xf]
                %260 = vst [vmem:[%s152 + $0xd4] sm:$0xf] %v259
                %v261 = vld [vmem:[%s151 + $0x1a0] sm:$0xf]
                %262 = vst [vmem:[%s152 + $0xd8] sm:$0xf] %v261
                %v263 = vld [vmem:[%s151 + $0x1a4] sm:$0xf]
                %264 = vst [vmem:[%s152 + $0xdc] sm:$0xf] %v263
                %v265 = vld [vmem:[%s151 + $0x1a8] sm:$0xf]
                %266 = vst [vmem:[%s152 + $0xe0] sm:$0xf] %v265
                %v267 = vld [vmem:[%s151 + $0x1ac] sm:$0xf]
                %268 = vst [vmem:[%s152 + $0xe4] sm:$0xf] %v267
                %v269 = vld [vmem:[%s151 + $0x1b0] sm:$0xf]
                %270 = vst [vmem:[%s152 + $0xe8] sm:$0xf] %v269
                %v271 = vld [vmem:[%s151 + $0x1b4] sm:$0xf]
                %272 = vst [vmem:[%s152 + $0xec] sm:$0xf] %v271
                %v273 = vld [vmem:[%s151 + $0x1b8] sm:$0xf]
                %274 = vst [vmem:[%s152 + $0xf0] sm:$0xf] %v273
                %v275 = vld [vmem:[%s151 + $0x1bc] sm:$0xf]
                %276 = vst [vmem:[%s152 + $0xf4] sm:$0xf] %v275
                %v277 = vld [vmem:[%s151 + $0x1c0] sm:$0xf]
                %278 = vst [vmem:[%s152 + $0xf8] sm:$0xf] %v277
                %v279 = vld [vmem:[%s151 + $0x1c4] sm:$0xf]
                %280 = vst [vmem:[%s152 + $0xfc] sm:$0xf] %v279
                %v281 = vld [vmem:[%s151 + $0x1c8] sm:$0xf]
                %282 = vst [vmem:[%s152 + $0x100] sm:$0xf] %v281
                %v283 = vld [vmem:[%s151 + $0x1cc] sm:$0xf]
                %284 = vst [vmem:[%s152 + $0x104] sm:$0xf] %v283
                %v285 = vld [vmem:[%s151 + $0x1d0] sm:$0xf]
                %286 = vst [vmem:[%s152 + $0x108] sm:$0xf] %v285
                %v287 = vld [vmem:[%s151 + $0x1d4] sm:$0xf]
                %288 = vst [vmem:[%s152 + $0x10c] sm:$0xf] %v287
                %v289 = vld [vmem:[%s151 + $0x1d8] sm:$0xf]
                %290 = vst [vmem:[%s152 + $0x110] sm:$0xf] %v289
                %v291 = vld [vmem:[%s151 + $0x1dc] sm:$0xf]
                %292 = vst [vmem:[%s152 + $0x114] sm:$0xf] %v291
                %v293 = vld [vmem:[%s151 + $0x1e0] sm:$0xf]
                %294 = vst [vmem:[%s152 + $0x118] sm:$0xf] %v293
                %v295 = vld [vmem:[%s151 + $0x1e4] sm:$0xf]
                %296 = vst [vmem:[%s152 + $0x11c] sm:$0xf] %v295
                %v297 = vld [vmem:[%s151 + $0x1e8] sm:$0xf]
                %298 = vst [vmem:[%s152 + $0x120] sm:$0xf] %v297
                %v299 = vld [vmem:[%s151 + $0x1ec] sm:$0xf]
                %300 = vst [vmem:[%s152 + $0x124] sm:$0xf] %v299
                %v301 = vld [vmem:[%s151 + $0x1f0] sm:$0xf]
                %302 = vst [vmem:[%s152 + $0x128] sm:$0xf] %v301
                %v303 = vld [vmem:[%s151 + $0x258] sm:$0xf]
                %304 = vst [vmem:[%s152 + $0x12c] sm:$0xf] %v303
                %v305 = vld [vmem:[%s151 + $0x25c] sm:$0xf]
                %306 = vst [vmem:[%s152 + $0x130] sm:$0xf] %v305
                %v307 = vld [vmem:[%s151 + $0x260] sm:$0xf]
                %308 = vst [vmem:[%s152 + $0x134] sm:$0xf] %v307
                %v309 = vld [vmem:[%s151 + $0x264] sm:$0xf]
                %310 = vst [vmem:[%s152 + $0x138] sm:$0xf] %v309
                %v311 = vld [vmem:[%s151 + $0x268] sm:$0xf]
                %312 = vst [vmem:[%s152 + $0x13c] sm:$0xf] %v311
                %v313 = vld [vmem:[%s151 + $0x26c] sm:$0xf]
                %314 = vst [vmem:[%s152 + $0x140] sm:$0xf] %v313
                %v315 = vld [vmem:[%s151 + $0x270] sm:$0xf]
                %316 = vst [vmem:[%s152 + $0x144] sm:$0xf] %v315
                %v317 = vld [vmem:[%s151 + $0x274] sm:$0xf]
                %318 = vst [vmem:[%s152 + $0x148] sm:$0xf] %v317
                %v319 = vld [vmem:[%s151 + $0x278] sm:$0xf]
                %320 = vst [vmem:[%s152 + $0x14c] sm:$0xf] %v319
                %v321 = vld [vmem:[%s151 + $0x27c] sm:$0xf]
                %322 = vst [vmem:[%s152 + $0x150] sm:$0xf] %v321
                %v323 = vld [vmem:[%s151 + $0x280] sm:$0xf]
                %324 = vst [vmem:[%s152 + $0x154] sm:$0xf] %v323
                %v325 = vld [vmem:[%s151 + $0x284] sm:$0xf]
                %326 = vst [vmem:[%s152 + $0x158] sm:$0xf] %v325
                %v327 = vld [vmem:[%s151 + $0x288] sm:$0xf]
                %328 = vst [vmem:[%s152 + $0x15c] sm:$0xf] %v327
                %v329 = vld [vmem:[%s151 + $0x28c] sm:$0xf]
                %330 = vst [vmem:[%s152 + $0x160] sm:$0xf] %v329
                %v331 = vld [vmem:[%s151 + $0x290] sm:$0xf]
                %332 = vst [vmem:[%s152 + $0x164] sm:$0xf] %v331
                %v333 = vld [vmem:[%s151 + $0x294] sm:$0xf]
                %334 = vst [vmem:[%s152 + $0x168] sm:$0xf] %v333
                %v335 = vld [vmem:[%s151 + $0x298] sm:$0xf]
                %336 = vst [vmem:[%s152 + $0x16c] sm:$0xf] %v335
                %v337 = vld [vmem:[%s151 + $0x29c] sm:$0xf]
                %338 = vst [vmem:[%s152 + $0x170] sm:$0xf] %v337
                %v339 = vld [vmem:[%s151 + $0x2a0] sm:$0xf]
                %340 = vst [vmem:[%s152 + $0x174] sm:$0xf] %v339
                %v341 = vld [vmem:[%s151 + $0x2a4] sm:$0xf]
                %342 = vst [vmem:[%s152 + $0x178] sm:$0xf] %v341
                %v343 = vld [vmem:[%s151 + $0x2a8] sm:$0xf]
                %344 = vst [vmem:[%s152 + $0x17c] sm:$0xf] %v343
                %v345 = vld [vmem:[%s151 + $0x2ac] sm:$0xf]
                %346 = vst [vmem:[%s152 + $0x180] sm:$0xf] %v345
                %v347 = vld [vmem:[%s151 + $0x2b0] sm:$0xf]
                %348 = vst [vmem:[%s152 + $0x184] sm:$0xf] %v347
                %v349 = vld [vmem:[%s151 + $0x2b4] sm:$0xf]
                %350 = vst [vmem:[%s152 + $0x188] sm:$0xf] %v349
                %v351 = vld [vmem:[%s151 + $0x2b8] sm:$0xf]
                %352 = vst [vmem:[%s152 + $0x18c] sm:$0xf] %v351
              $region45: #{net_forward.3} parent=39 // loop_footer
                %s150 = sadd.s32 1, %s146
              $region46: #{net_forward.3} parent=39 // loop_footer_branch
                %145 = sbr.rel target = $region42
              $region47: #{net_forward.3} parent=39 // loop_exit
                _
            $region40: #{net_forward.3} parent=31 // pred_fallthru
              _
          $region32: #{net_forward.3} parent=27 // pred_fallthru
            _
          %572 = vnop
        $region28: #{net_forward.3} parent=23 // pred_fallthru
          _
      $region24: #{net_forward.3} parent=5 // pred_fallthru
        _
      %p573 = scmp.le.s32.totalorder 1, %s9
      %p574 = scmp.lt.s32.totalorder %s9, 3
      %p575 = pnand %p573, %p574
      %p576 = pneg %p575
      // Predicated region
      $region66: #{net_forward.3} parent=5 // pred_check
        _
      $region67: #{net_forward.3} parent=5 // pred_check_branch
        %578 = sbr.rel (%p575) target = $region69
      $region68: #{net_forward.3} parent=5 // pred_region
        %s579 = ssub.s32 %s9, 1
        %s580 = sand.u32 %s22, 1
        %s581 = sand.u32 %s22, 1
        %s582 = smul.addr %s581, 400
        %s583 = scalar_lea.vmem [#allocation2], %s582
        // Predicated region
        $region70: #{net_forward.3} parent=68 // pred_check
          %p584 = pneg %p35
        $region71: #{net_forward.3} parent=68 // pred_check_branch
          %586 = sbr.rel (%p584) target = $region73
        $region72: #{net_forward.3} parent=68 // pred_region
          _
        $region73: #{net_forward.3} parent=68 // pred_fallthru
          _
        %s587 = sand.u32 %s22, 1
        %s588 = sand.u32 %s22, 1
        %s589 = smul.addr %s588, 400
        %s590 = scalar_lea.vmem [#allocation2], %s589
        %p591 = pneg %p35
        %p592 = pneg %p32
        %p593 = pneg %p56
        %p594 = pneg %p53
        %p595 = pneg %p77
        %p596 = pneg %p74
        %p597 = pneg %p103
        %p598 = pneg %p100
        %s599 = smul.u32 25, %s14
        %p600 = scmp.lt.s32.totalorder %s599, 49
        %s601 = scalar_select %p600, %s599, 49
        %s602 = smul.addr %s601, 4
        %s603 = scalar_lea.vmem %s3, %s602
        %s604 = smul.u32 25, %s14
        %s605 = smul.u32 25, %s14
        %p606 = scmp.lt.s32.totalorder %s605, 49
        %s607 = scalar_select %p606, %s605, 49
        %s608 = smul.addr %s607, 4
        %s609 = scalar_lea.vmem %s3, %s608
        %s610 = smul.u32 25, %s14
        %v612 = vld [vmem:[%s1] sm:$0xf]
        %v613 = vld [vmem:[%s1 + $0x4] sm:$0xf]
        %v614 = vld [vmem:[%s1 + $0x8] sm:$0xf]
        %v615 = vld [vmem:[%s1 + $0xc] sm:$0xf]
        %v616 = vld [vmem:[%s1 + $0x10] sm:$0xf]
        %v617 = vld [vmem:[%s1 + $0x14] sm:$0xf]
        %v618 = vld [vmem:[%s1 + $0x18] sm:$0xf]
        %v619 = vld [vmem:[%s1 + $0x1c] sm:$0xf]
        %v620 = vld [vmem:[%s1 + $0x20] sm:$0xf]
        %v621 = vld [vmem:[%s1 + $0x24] sm:$0x3]
        %v622 = vld [vmem:[%s583] sm:$0xf]
        %v623 = vld [vmem:[%s583 + $0x4] sm:$0xf]
        %v624 = vld [vmem:[%s583 + $0x8] sm:$0xf]
        %v625 = vld [vmem:[%s583 + $0xc] sm:$0xf]
        %v626 = vld [vmem:[%s583 + $0x10] sm:$0xf]
        %v627 = vld [vmem:[%s583 + $0x14] sm:$0xf]
        %v628 = vld [vmem:[%s583 + $0x18] sm:$0xf]
        %v629 = vld [vmem:[%s583 + $0x1c] sm:$0xf]
        %v630 = vld [vmem:[%s583 + $0x20] sm:$0xf]
        %v631 = vld [vmem:[%s583 + $0x24] sm:$0xf]
        %v632 = vld [vmem:[%s583 + $0x28] sm:$0xf]
        %v633 = vld [vmem:[%s583 + $0x2c] sm:$0xf]
        %v634 = vld [vmem:[%s583 + $0x30] sm:$0xf]
        %v635 = vld [vmem:[%s583 + $0x34] sm:$0xf]
        %v636 = vld [vmem:[%s583 + $0x38] sm:$0xf]
        %v637 = vld [vmem:[%s583 + $0x3c] sm:$0xf]
        %v638 = vld [vmem:[%s583 + $0x40] sm:$0xf]
        %v639 = vld [vmem:[%s583 + $0x44] sm:$0xf]
        %v640 = vld [vmem:[%s583 + $0x48] sm:$0xf]
        %v641 = vld [vmem:[%s583 + $0x4c] sm:$0xf]
        %v642 = vld [vmem:[%s583 + $0x50] sm:$0xf]
        %v643 = vld [vmem:[%s583 + $0x54] sm:$0xf]
        %v644 = vld [vmem:[%s583 + $0x58] sm:$0xf]
        %v645 = vld [vmem:[%s583 + $0x5c] sm:$0xf]
        %v646 = vld [vmem:[%s583 + $0x60] sm:$0xf]
        %v672 = vunpack.c.l.b16 %v622
        %v673 = vunpack.c.l.b16 %v623
        %v674 = vunpack.c.l.b16 %v624
        %v675 = vunpack.c.l.b16 %v625
        %v676 = vunpack.c.l.b16 %v626
        %v677 = vunpack.c.l.b16 %v627
        %v678 = vunpack.c.l.b16 %v628
        %v679 = vunpack.c.l.b16 %v629
        %v680 = vunpack.c.l.b16 %v630
        %v681 = vunpack.c.l.b16 %v631
        %v682 = vunpack.c.l.b16 %v632
        %v683 = vunpack.c.l.b16 %v633
        %v684 = vunpack.c.l.b16 %v634
        %v685 = vunpack.c.l.b16 %v635
        %v686 = vunpack.c.l.b16 %v636
        %v687 = vunpack.c.l.b16 %v637
        %v688 = vunpack.c.l.b16 %v638
        %v689 = vunpack.c.l.b16 %v639
        %v690 = vunpack.c.l.b16 %v640
        %v691 = vunpack.c.l.b16 %v641
        %v692 = vunpack.c.l.b16 %v642
        %v693 = vunpack.c.l.b16 %v643
        %v694 = vunpack.c.l.b16 %v644
        %v695 = vunpack.c.l.b16 %v645
        %v696 = vunpack.c.l.b16 %v646
        %v697 = vpack.c.b16 %v673, %v672
        %v698 = vpack.c.b16 %v675, %v674
        %v699 = vpack.c.b16 %v677, %v676
        %v700 = vpack.c.b16 %v679, %v678
        %v701 = vpack.c.b16 %v681, %v680
        %v702 = vpack.c.b16 %v683, %v682
        %v703 = vpack.c.b16 %v685, %v684
        %v704 = vpack.c.b16 %v687, %v686
        %v705 = vpack.c.b16 %v689, %v688
        %v706 = vpack.c.b16 %v691, %v690
        %v707 = vpack.c.b16 %v693, %v692
        %v708 = vpack.c.b16 %v695, %v694
        %v709 = vpack.c.b16 %v696, %v696
        %v720 = vunpack.c.l.b16 %v612
        %v721 = vunpack.c.l.b16 %v613
        %v722 = vunpack.c.l.b16 %v614
        %v723 = vunpack.c.l.b16 %v615
        %v724 = vunpack.c.l.b16 %v616
        %v725 = vunpack.c.l.b16 %v617
        %v726 = vunpack.c.l.b16 %v618
        %v727 = vunpack.c.l.b16 %v619
        %v728 = vunpack.c.l.b16 %v620
        %v729 = vunpack.c.l.b16 %v621
        %v730 = vpack.c.b16 %v721, %v720
        %v731 = vpack.c.b16 %v723, %v722
        %v732 = vpack.c.b16 %v725, %v724
        %v733 = vpack.c.b16 %v727, %v726
        %v734 = vpack.c.b16 %v729, %v728
        %vm739 = vcmask 613376
        %v741 = vsel %vm739, %v697, 0
        %v744 = vsel %vm739, %v698, 0
        %v747 = vsel %vm739, %v699, 0
        %v750 = vsel %vm739, %v700, 0
        %v753 = vsel %vm739, %v701, 0
        %v756 = vsel %vm739, %v702, 0
        %v759 = vsel %vm739, %v703, 0
        %v762 = vsel %vm739, %v704, 0
        %v765 = vsel %vm739, %v705, 0
        %v768 = vsel %vm739, %v706, 0
        %v771 = vsel %vm739, %v707, 0
        %v774 = vsel %vm739, %v708, 0
        %v777 = vsel %vm739, %v709, 0
        %vm779 = vcmask 1044480
        %vm780 = vcmask 1045504
        %v781 = vsel %vm779, 4294967295, 65535
        %v782 = vsel %vm780, %v781, 0
        %v784 = vand.u32 %v734, %v782
        %786 = vmatprep.subr.bf16.mxu0 0
        %787 = vmatpush1.bf16.msra.mxu0 %v730
        %788 = vmatprep.subr.bf16.mxu0 0
        %789 = vmatpush1.bf16.msra.mxu0 %v731
        %790 = vmatprep.subr.bf16.mxu0 0
        %791 = vmatpush1.bf16.msra.mxu0 %v732
        %792 = vmatprep.subr.bf16.mxu0 0
        %793 = vmatpush1.bf16.msra.mxu0 %v733
        %794 = vmatprep.subr.bf16.mxu0 0
        %795 = vmatpush1.bf16.msra.mxu0 %v784
        %796 = vmatprep.subr.bf16.mxu0 0
        %797 = vmatpush1.bf16.msra.mxu0 0
        %798 = vmatprep.subr.bf16.mxu0 0
        %799 = vmatpush1.bf16.msra.mxu0 0
        %800 = vmatprep.subr.bf16.mxu0 0
        %801 = vmatpush1.bf16.msra.mxu0 0
        %802 = vmatprep.subr.bf16.mxu0 0
        %803 = vmatpush1.bf16.msra.mxu0 0
        %804 = vmatprep.subr.bf16.mxu0 0
        %805 = vmatpush1.bf16.msra.mxu0 0
        %806 = vmatprep.subr.bf16.mxu0 0
        %807 = vmatpush1.bf16.msra.mxu0 0
        %808 = vmatprep.subr.bf16.mxu0 0
        %809 = vmatpush1.bf16.msra.mxu0 0
        %810 = vmatprep.subr.bf16.mxu0 0
        %811 = vmatpush1.bf16.msra.mxu0 0
        %812 = vmatprep.subr.bf16.mxu0 0
        %813 = vmatpush1.bf16.msra.mxu0 0
        %814 = vmatprep.subr.bf16.mxu0 0
        %815 = vmatpush1.bf16.msra.mxu0 0
        %816 = vmatprep.subr.bf16.mxu0 0
        %817 = vmatpush1.bf16.msra.mxu0 0
        %818 = vmatprep.mubr.bf16.mxu0 0
        %819 = vmatmul.mubr.bf16.gmra.mrb[0].mxu0 %v741
        %v820 = vpop.f32.mrb[0].mxu0
        %v821 = vadd.f32 0.0, %v820
        %v822 = vpop.f32.mrb[0].mxu0
        %v823 = vpop.f32.mrb[0].mxu0
        %v824 = vadd.f32 0.0, %v823
        %v825 = vpop.f32.mrb[0].mxu0
        %826 = vmatprep.mubr.bf16.mxu0 0
        %827 = vmatmul.mubr.bf16.gmra.mrb[0].mxu0 %v744
        %v828 = vpop.f32.mrb[0].mxu0
        %v829 = vadd.f32 0.0, %v828
        %v830 = vpop.f32.mrb[0].mxu0
        %v831 = vpop.f32.mrb[0].mxu0
        %v832 = vadd.f32 0.0, %v831
        %v833 = vpop.f32.mrb[0].mxu0
        %834 = vmatprep.mubr.bf16.mxu0 0
        %835 = vmatmul.mubr.bf16.gmra.mrb[0].mxu0 %v747
        %v836 = vpop.f32.mrb[0].mxu0
        %v837 = vadd.f32 0.0, %v836
        %v838 = vpop.f32.mrb[0].mxu0
        %v839 = vpop.f32.mrb[0].mxu0
        %v840 = vadd.f32 0.0, %v839
        %v841 = vpop.f32.mrb[0].mxu0
        %842 = vmatprep.mubr.bf16.mxu0 0
        %843 = vmatmul.mubr.bf16.gmra.mrb[0].mxu0 %v750
        %v844 = vpop.f32.mrb[0].mxu0
        %v845 = vadd.f32 0.0, %v844
        %v846 = vpop.f32.mrb[0].mxu0
        %v847 = vpop.f32.mrb[0].mxu0
        %v848 = vadd.f32 0.0, %v847
        %v849 = vpop.f32.mrb[0].mxu0
        %850 = vmatprep.mubr.bf16.mxu0 0
        %851 = vmatmul.mubr.bf16.gmra.mrb[0].mxu0 %v753
        %v852 = vpop.f32.mrb[0].mxu0
        %v853 = vadd.f32 0.0, %v852
        %v854 = vpop.f32.mrb[0].mxu0
        %v855 = vpop.f32.mrb[0].mxu0
        %v856 = vadd.f32 0.0, %v855
        %v857 = vpop.f32.mrb[0].mxu0
        %858 = vmatprep.mubr.bf16.mxu0 0
        %859 = vmatmul.mubr.bf16.gmra.mrb[0].mxu0 %v756
        %v860 = vpop.f32.mrb[0].mxu0
        %v861 = vadd.f32 0.0, %v860
        %v862 = vpop.f32.mrb[0].mxu0
        %v863 = vpop.f32.mrb[0].mxu0
        %v864 = vadd.f32 0.0, %v863
        %v865 = vpop.f32.mrb[0].mxu0
        %866 = vmatprep.mubr.bf16.mxu0 0
        %867 = vmatmul.mubr.bf16.gmra.mrb[0].mxu0 %v759
        %v868 = vpop.f32.mrb[0].mxu0
        %v869 = vadd.f32 0.0, %v868
        %v870 = vpop.f32.mrb[0].mxu0
        %v871 = vpop.f32.mrb[0].mxu0
        %v872 = vadd.f32 0.0, %v871
        %v873 = vpop.f32.mrb[0].mxu0
        %874 = vmatprep.mubr.bf16.mxu0 0
        %875 = vmatmul.mubr.bf16.gmra.mrb[0].mxu0 %v762
        %v876 = vpop.f32.mrb[0].mxu0
        %v877 = vadd.f32 0.0, %v876
        %v878 = vpop.f32.mrb[0].mxu0
        %v879 = vpop.f32.mrb[0].mxu0
        %v880 = vadd.f32 0.0, %v879
        %v881 = vpop.f32.mrb[0].mxu0
        %882 = vmatprep.mubr.bf16.mxu0 0
        %883 = vmatmul.mubr.bf16.gmra.mrb[0].mxu0 %v765
        %v884 = vpop.f32.mrb[0].mxu0
        %v885 = vadd.f32 0.0, %v884
        %v886 = vpop.f32.mrb[0].mxu0
        %v887 = vpop.f32.mrb[0].mxu0
        %v888 = vadd.f32 0.0, %v887
        %v889 = vpop.f32.mrb[0].mxu0
        %890 = vmatprep.mubr.bf16.mxu0 0
        %891 = vmatmul.mubr.bf16.gmra.mrb[0].mxu0 %v768
        %v892 = vpop.f32.mrb[0].mxu0
        %v893 = vadd.f32 0.0, %v892
        %v894 = vpop.f32.mrb[0].mxu0
        %v895 = vpop.f32.mrb[0].mxu0
        %v896 = vadd.f32 0.0, %v895
        %v897 = vpop.f32.mrb[0].mxu0
        %898 = vmatprep.mubr.bf16.mxu0 0
        %899 = vmatmul.mubr.bf16.gmra.mrb[0].mxu0 %v771
        %v900 = vpop.f32.mrb[0].mxu0
        %v901 = vadd.f32 0.0, %v900
        %v902 = vpop.f32.mrb[0].mxu0
        %v903 = vpop.f32.mrb[0].mxu0
        %v904 = vadd.f32 0.0, %v903
        %v905 = vpop.f32.mrb[0].mxu0
        %906 = vmatprep.mubr.bf16.mxu0 0
        %907 = vmatmul.mubr.bf16.gmra.mrb[0].mxu0 %v774
        %v908 = vpop.f32.mrb[0].mxu0
        %v909 = vadd.f32 0.0, %v908
        %v910 = vpop.f32.mrb[0].mxu0
        %v911 = vpop.f32.mrb[0].mxu0
        %v912 = vadd.f32 0.0, %v911
        %v913 = vpop.f32.mrb[0].mxu0
        %914 = vmatprep.mubr.bf16.mxu0 0
        %915 = vmatmul.mubr.bf16.gmra.mrb[0].mxu0 %v777
        %v916 = vpop.f32.mrb[0].mxu0
        %v917 = vadd.f32 0.0, %v916
        %v918 = vpop.f32.mrb[0].mxu0
        %v919 = vpop.f32.mrb[0].mxu0
        %v920 = vpop.f32.mrb[0].mxu0
        %921 = vdwg.mxu0
        %s922 = scalar_lea.vmem %s583, 100 [#allocation2]
        %v923 = vld [vmem:[%s922] sm:$0xf]
        %v924 = vld [vmem:[%s922 + $0x4] sm:$0xf]
        %v925 = vld [vmem:[%s922 + $0x8] sm:$0xf]
        %v926 = vld [vmem:[%s922 + $0xc] sm:$0xf]
        %v927 = vld [vmem:[%s922 + $0x10] sm:$0xf]
        %v928 = vld [vmem:[%s922 + $0x14] sm:$0xf]
        %v929 = vld [vmem:[%s922 + $0x18] sm:$0xf]
        %v930 = vld [vmem:[%s922 + $0x1c] sm:$0xf]
        %v931 = vld [vmem:[%s922 + $0x20] sm:$0xf]
        %v932 = vld [vmem:[%s922 + $0x24] sm:$0xf]
        %v933 = vld [vmem:[%s922 + $0x28] sm:$0xf]
        %v934 = vld [vmem:[%s922 + $0x2c] sm:$0xf]
        %v935 = vld [vmem:[%s922 + $0x30] sm:$0xf]
        %v936 = vld [vmem:[%s922 + $0x34] sm:$0xf]
        %v937 = vld [vmem:[%s922 + $0x38] sm:$0xf]
        %v938 = vld [vmem:[%s922 + $0x3c] sm:$0xf]
        %v939 = vld [vmem:[%s922 + $0x40] sm:$0xf]
        %v940 = vld [vmem:[%s922 + $0x44] sm:$0xf]
        %v941 = vld [vmem:[%s922 + $0x48] sm:$0xf]
        %v942 = vld [vmem:[%s922 + $0x4c] sm:$0xf]
        %v943 = vld [vmem:[%s922 + $0x50] sm:$0xf]
        %v944 = vld [vmem:[%s922 + $0x54] sm:$0xf]
        %v945 = vld [vmem:[%s922 + $0x58] sm:$0xf]
        %v946 = vld [vmem:[%s922 + $0x5c] sm:$0xf]
        %v947 = vld [vmem:[%s922 + $0x60] sm:$0xf]
        %v973 = vunpack.c.l.b16 %v923
        %v974 = vunpack.c.l.b16 %v924
        %v975 = vunpack.c.l.b16 %v925
        %v976 = vunpack.c.l.b16 %v926
        %v977 = vunpack.c.l.b16 %v927
        %v978 = vunpack.c.l.b16 %v928
        %v979 = vunpack.c.l.b16 %v929
        %v980 = vunpack.c.l.b16 %v930
        %v981 = vunpack.c.l.b16 %v931
        %v982 = vunpack.c.l.b16 %v932
        %v983 = vunpack.c.l.b16 %v933
        %v984 = vunpack.c.l.b16 %v934
        %v985 = vunpack.c.l.b16 %v935
        %v986 = vunpack.c.l.b16 %v936
        %v987 = vunpack.c.l.b16 %v937
        %v988 = vunpack.c.l.b16 %v938
        %v989 = vunpack.c.l.b16 %v939
        %v990 = vunpack.c.l.b16 %v940
        %v991 = vunpack.c.l.b16 %v941
        %v992 = vunpack.c.l.b16 %v942
        %v993 = vunpack.c.l.b16 %v943
        %v994 = vunpack.c.l.b16 %v944
        %v995 = vunpack.c.l.b16 %v945
        %v996 = vunpack.c.l.b16 %v946
        %v997 = vunpack.c.l.b16 %v947
        %v998 = vpack.c.b16 %v974, %v973
        %v999 = vpack.c.b16 %v976, %v975
        %v1000 = vpack.c.b16 %v978, %v977
        %v1001 = vpack.c.b16 %v980, %v979
        %v1002 = vpack.c.b16 %v982, %v981
        %v1003 = vpack.c.b16 %v984, %v983
        %v1004 = vpack.c.b16 %v986, %v985
        %v1005 = vpack.c.b16 %v988, %v987
        %v1006 = vpack.c.b16 %v990, %v989
        %v1007 = vpack.c.b16 %v992, %v991
        %v1008 = vpack.c.b16 %v994, %v993
        %v1009 = vpack.c.b16 %v996, %v995
        %v1010 = vpack.c.b16 %v997, %v997
        %v1012 = vsel %vm739, %v998, 0
        %v1015 = vsel %vm739, %v999, 0
        %v1018 = vsel %vm739, %v1000, 0
        %v1021 = vsel %vm739, %v1001, 0
        %v1024 = vsel %vm739, %v1002, 0
        %v1027 = vsel %vm739, %v1003, 0
        %v1030 = vsel %vm739, %v1004, 0
        %v1033 = vsel %vm739, %v1005, 0
        %v1036 = vsel %vm739, %v1006, 0
        %v1039 = vsel %vm739, %v1007, 0
        %v1042 = vsel %vm739, %v1008, 0
        %v1045 = vsel %vm739, %v1009, 0
        %v1048 = vsel %vm739, %v1010, 0
        %1050 = vmatprep.subr.bf16.mxu0 0
        %1051 = vmatpush1.bf16.msra.mxu0 %v730
        %1052 = vmatprep.subr.bf16.mxu0 0
        %1053 = vmatpush1.bf16.msra.mxu0 %v731
        %1054 = vmatprep.subr.bf16.mxu0 0
        %1055 = vmatpush1.bf16.msra.mxu0 %v732
        %1056 = vmatprep.subr.bf16.mxu0 0
        %1057 = vmatpush1.bf16.msra.mxu0 %v733
        %1058 = vmatprep.subr.bf16.mxu0 0
        %1059 = vmatpush1.bf16.msra.mxu0 %v784
        %1060 = vmatprep.subr.bf16.mxu0 0
        %1061 = vmatpush1.bf16.msra.mxu0 0
        %1062 = vmatprep.subr.bf16.mxu0 0
        %1063 = vmatpush1.bf16.msra.mxu0 0
        %1064 = vmatprep.subr.bf16.mxu0 0
        %1065 = vmatpush1.bf16.msra.mxu0 0
        %1066 = vmatprep.subr.bf16.mxu0 0
        %1067 = vmatpush1.bf16.msra.mxu0 0
        %1068 = vmatprep.subr.bf16.mxu0 0
        %1069 = vmatpush1.bf16.msra.mxu0 0
        %1070 = vmatprep.subr.bf16.mxu0 0
        %1071 = vmatpush1.bf16.msra.mxu0 0
        %1072 = vmatprep.subr.bf16.mxu0 0
        %1073 = vmatpush1.bf16.msra.mxu0 0
        %1074 = vmatprep.subr.bf16.mxu0 0
        %1075 = vmatpush1.bf16.msra.mxu0 0
        %1076 = vmatprep.subr.bf16.mxu0 0
        %1077 = vmatpush1.bf16.msra.mxu0 0
        %1078 = vmatprep.subr.bf16.mxu0 0
        %1079 = vmatpush1.bf16.msra.mxu0 0
        %1080 = vmatprep.subr.bf16.mxu0 0
        %1081 = vmatpush1.bf16.msra.mxu0 0
        %1082 = vmatprep.mubr.bf16.mxu0 0
        %1083 = vmatmul.mubr.bf16.gmra.mrb[0].mxu0 %v1012
        %v1084 = vpop.f32.mrb[0].mxu0
        %v1085 = vadd.f32 0.0, %v1084
        %v1086 = vpop.f32.mrb[0].mxu0
        %v1087 = vpop.f32.mrb[0].mxu0
        %v1088 = vadd.f32 0.0, %v1087
        %v1089 = vpop.f32.mrb[0].mxu0
        %1090 = vmatprep.mubr.bf16.mxu0 0
        %1091 = vmatmul.mubr.bf16.gmra.mrb[0].mxu0 %v1015
        %v1092 = vpop.f32.mrb[0].mxu0
        %v1093 = vadd.f32 0.0, %v1092
        %v1094 = vpop.f32.mrb[0].mxu0
        %v1095 = vpop.f32.mrb[0].mxu0
        %v1096 = vadd.f32 0.0, %v1095
        %v1097 = vpop.f32.mrb[0].mxu0
        %1098 = vmatprep.mubr.bf16.mxu0 0
        %1099 = vmatmul.mubr.bf16.gmra.mrb[0].mxu0 %v1018
        %v1100 = vpop.f32.mrb[0].mxu0
        %v1101 = vadd.f32 0.0, %v1100
        %v1102 = vpop.f32.mrb[0].mxu0
        %v1103 = vpop.f32.mrb[0].mxu0
        %v1104 = vadd.f32 0.0, %v1103
        %v1105 = vpop.f32.mrb[0].mxu0
        %1106 = vmatprep.mubr.bf16.mxu0 0
        %1107 = vmatmul.mubr.bf16.gmra.mrb[0].mxu0 %v1021
        %v1108 = vpop.f32.mrb[0].mxu0
        %v1109 = vadd.f32 0.0, %v1108
        %v1110 = vpop.f32.mrb[0].mxu0
        %v1111 = vpop.f32.mrb[0].mxu0
        %v1112 = vadd.f32 0.0, %v1111
        %v1113 = vpop.f32.mrb[0].mxu0
        %1114 = vmatprep.mubr.bf16.mxu0 0
        %1115 = vmatmul.mubr.bf16.gmra.mrb[0].mxu0 %v1024
        %v1116 = vpop.f32.mrb[0].mxu0
        %v1117 = vadd.f32 0.0, %v1116
        %v1118 = vpop.f32.mrb[0].mxu0
        %v1119 = vpop.f32.mrb[0].mxu0
        %v1120 = vadd.f32 0.0, %v1119
        %v1121 = vpop.f32.mrb[0].mxu0
        %1122 = vmatprep.mubr.bf16.mxu0 0
        %1123 = vmatmul.mubr.bf16.gmra.mrb[0].mxu0 %v1027
        %v1124 = vpop.f32.mrb[0].mxu0
        %v1125 = vadd.f32 0.0, %v1124
        %v1126 = vpop.f32.mrb[0].mxu0
        %v1127 = vpop.f32.mrb[0].mxu0
        %v1128 = vadd.f32 0.0, %v1127
        %v1129 = vpop.f32.mrb[0].mxu0
        %1130 = vmatprep.mubr.bf16.mxu0 0
        %1131 = vmatmul.mubr.bf16.gmra.mrb[0].mxu0 %v1030
        %v1132 = vpop.f32.mrb[0].mxu0
        %v1133 = vadd.f32 0.0, %v1132
        %v1134 = vpop.f32.mrb[0].mxu0
        %v1135 = vpop.f32.mrb[0].mxu0
        %v1136 = vadd.f32 0.0, %v1135
        %v1137 = vpop.f32.mrb[0].mxu0
        %1138 = vmatprep.mubr.bf16.mxu0 0
        %1139 = vmatmul.mubr.bf16.gmra.mrb[0].mxu0 %v1033
        %v1140 = vpop.f32.mrb[0].mxu0
        %v1141 = vadd.f32 0.0, %v1140
        %v1142 = vpop.f32.mrb[0].mxu0
        %v1143 = vpop.f32.mrb[0].mxu0
        %v1144 = vadd.f32 0.0, %v1143
        %v1145 = vpop.f32.mrb[0].mxu0
        %1146 = vmatprep.mubr.bf16.mxu0 0
        %1147 = vmatmul.mubr.bf16.gmra.mrb[0].mxu0 %v1036
        %v1148 = vpop.f32.mrb[0].mxu0
        %v1149 = vadd.f32 0.0, %v1148
        %v1150 = vpop.f32.mrb[0].mxu0
        %v1151 = vpop.f32.mrb[0].mxu0
        %v1152 = vadd.f32 0.0, %v1151
        %v1153 = vpop.f32.mrb[0].mxu0
        %1154 = vmatprep.mubr.bf16.mxu0 0
        %1155 = vmatmul.mubr.bf16.gmra.mrb[0].mxu0 %v1039
        %v1156 = vpop.f32.mrb[0].mxu0
        %v1157 = vadd.f32 0.0, %v1156
        %v1158 = vpop.f32.mrb[0].mxu0
        %v1159 = vpop.f32.mrb[0].mxu0
        %v1160 = vadd.f32 0.0, %v1159
        %v1161 = vpop.f32.mrb[0].mxu0
        %1162 = vmatprep.mubr.bf16.mxu0 0
        %1163 = vmatmul.mubr.bf16.gmra.mrb[0].mxu0 %v1042
        %v1164 = vpop.f32.mrb[0].mxu0
        %v1165 = vadd.f32 0.0, %v1164
        %v1166 = vpop.f32.mrb[0].mxu0
        %v1167 = vpop.f32.mrb[0].mxu0
        %v1168 = vadd.f32 0.0, %v1167
        %v1169 = vpop.f32.mrb[0].mxu0
        %1170 = vmatprep.mubr.bf16.mxu0 0
        %1171 = vmatmul.mubr.bf16.gmra.mrb[0].mxu0 %v1045
        %v1172 = vpop.f32.mrb[0].mxu0
        %v1173 = vadd.f32 0.0, %v1172
        %v1174 = vpop.f32.mrb[0].mxu0
        %v1175 = vpop.f32.mrb[0].mxu0
        %v1176 = vadd.f32 0.0, %v1175
        %v1177 = vpop.f32.mrb[0].mxu0
        %1178 = vmatprep.mubr.bf16.mxu0 0
        %1179 = vmatmul.mubr.bf16.gmra.mrb[0].mxu0 %v1048
        %v1180 = vpop.f32.mrb[0].mxu0
        %v1181 = vadd.f32 0.0, %v1180
        %v1182 = vpop.f32.mrb[0].mxu0
        %v1183 = vpop.f32.mrb[0].mxu0
        %v1184 = vpop.f32.mrb[0].mxu0
        %1185 = vdwg.mxu0
        %s1186 = scalar_lea.vmem %s583, 200 [#allocation2]
        %v1187 = vld [vmem:[%s1186] sm:$0xf]
        %v1188 = vld [vmem:[%s1186 + $0x4] sm:$0xf]
        %v1189 = vld [vmem:[%s1186 + $0x8] sm:$0xf]
        %v1190 = vld [vmem:[%s1186 + $0xc] sm:$0xf]
        %v1191 = vld [vmem:[%s1186 + $0x10] sm:$0xf]
        %v1192 = vld [vmem:[%s1186 + $0x14] sm:$0xf]
        %v1193 = vld [vmem:[%s1186 + $0x18] sm:$0xf]
        %v1194 = vld [vmem:[%s1186 + $0x1c] sm:$0xf]
        %v1195 = vld [vmem:[%s1186 + $0x20] sm:$0xf]
        %v1196 = vld [vmem:[%s1186 + $0x24] sm:$0xf]
        %v1197 = vld [vmem:[%s1186 + $0x28] sm:$0xf]
        %v1198 = vld [vmem:[%s1186 + $0x2c] sm:$0xf]
        %v1199 = vld [vmem:[%s1186 + $0x30] sm:$0xf]
        %v1200 = vld [vmem:[%s1186 + $0x34] sm:$0xf]
        %v1201 = vld [vmem:[%s1186 + $0x38] sm:$0xf]
        %v1202 = vld [vmem:[%s1186 + $0x3c] sm:$0xf]
        %v1203 = vld [vmem:[%s1186 + $0x40] sm:$0xf]
        %v1204 = vld [vmem:[%s1186 + $0x44] sm:$0xf]
        %v1205 = vld [vmem:[%s1186 + $0x48] sm:$0xf]
        %v1206 = vld [vmem:[%s1186 + $0x4c] sm:$0xf]
        %v1207 = vld [vmem:[%s1186 + $0x50] sm:$0xf]
        %v1208 = vld [vmem:[%s1186 + $0x54] sm:$0xf]
        %v1209 = vld [vmem:[%s1186 + $0x58] sm:$0xf]
        %v1210 = vld [vmem:[%s1186 + $0x5c] sm:$0xf]
        %v1211 = vld [vmem:[%s1186 + $0x60] sm:$0xf]
        %v1237 = vunpack.c.l.b16 %v1187
        %v1238 = vunpack.c.l.b16 %v1188
        %v1239 = vunpack.c.l.b16 %v1189
        %v1240 = vunpack.c.l.b16 %v1190
        %v1241 = vunpack.c.l.b16 %v1191
        %v1242 = vunpack.c.l.b16 %v1192
        %v1243 = vunpack.c.l.b16 %v1193
        %v1244 = vunpack.c.l.b16 %v1194
        %v1245 = vunpack.c.l.b16 %v1195
        %v1246 = vunpack.c.l.b16 %v1196
        %v1247 = vunpack.c.l.b16 %v1197
        %v1248 = vunpack.c.l.b16 %v1198
        %v1249 = vunpack.c.l.b16 %v1199
        %v1250 = vunpack.c.l.b16 %v1200
        %v1251 = vunpack.c.l.b16 %v1201
        %v1252 = vunpack.c.l.b16 %v1202
        %v1253 = vunpack.c.l.b16 %v1203
        %v1254 = vunpack.c.l.b16 %v1204
        %v1255 = vunpack.c.l.b16 %v1205
        %v1256 = vunpack.c.l.b16 %v1206
        %v1257 = vunpack.c.l.b16 %v1207
        %v1258 = vunpack.c.l.b16 %v1208
        %v1259 = vunpack.c.l.b16 %v1209
        %v1260 = vunpack.c.l.b16 %v1210
        %v1261 = vunpack.c.l.b16 %v1211
        %v1262 = vpack.c.b16 %v1238, %v1237
        %v1263 = vpack.c.b16 %v1240, %v1239
        %v1264 = vpack.c.b16 %v1242, %v1241
        %v1265 = vpack.c.b16 %v1244, %v1243
        %v1266 = vpack.c.b16 %v1246, %v1245
        %v1267 = vpack.c.b16 %v1248, %v1247
        %v1268 = vpack.c.b16 %v1250, %v1249
        %v1269 = vpack.c.b16 %v1252, %v1251
        %v1270 = vpack.c.b16 %v1254, %v1253
        %v1271 = vpack.c.b16 %v1256, %v1255
        %v1272 = vpack.c.b16 %v1258, %v1257
        %v1273 = vpack.c.b16 %v1260, %v1259
        %v1274 = vpack.c.b16 %v1261, %v1261
        %v1276 = vsel %vm739, %v1262, 0
        %v1279 = vsel %vm739, %v1263, 0
        %v1282 = vsel %vm739, %v1264, 0
        %v1285 = vsel %vm739, %v1265, 0
        %v1288 = vsel %vm739, %v1266, 0
        %v1291 = vsel %vm739, %v1267, 0
        %v1294 = vsel %vm739, %v1268, 0
        %v1297 = vsel %vm739, %v1269, 0
        %v1300 = vsel %vm739, %v1270, 0
        %v1303 = vsel %vm739, %v1271, 0
        %v1306 = vsel %vm739, %v1272, 0
        %v1309 = vsel %vm739, %v1273, 0
        %v1312 = vsel %vm739, %v1274, 0
        %1314 = vmatprep.subr.bf16.mxu0 0
        %1315 = vmatpush1.bf16.msra.mxu0 %v730
        %1316 = vmatprep.subr.bf16.mxu0 0
        %1317 = vmatpush1.bf16.msra.mxu0 %v731
        %1318 = vmatprep.subr.bf16.mxu0 0
        %1319 = vmatpush1.bf16.msra.mxu0 %v732
        %1320 = vmatprep.subr.bf16.mxu0 0
        %1321 = vmatpush1.bf16.msra.mxu0 %v733
        %1322 = vmatprep.subr.bf16.mxu0 0
        %1323 = vmatpush1.bf16.msra.mxu0 %v784
        %1324 = vmatprep.subr.bf16.mxu0 0
        %1325 = vmatpush1.bf16.msra.mxu0 0
        %1326 = vmatprep.subr.bf16.mxu0 0
        %1327 = vmatpush1.bf16.msra.mxu0 0
        %1328 = vmatprep.subr.bf16.mxu0 0
        %1329 = vmatpush1.bf16.msra.mxu0 0
        %1330 = vmatprep.subr.bf16.mxu0 0
        %1331 = vmatpush1.bf16.msra.mxu0 0
        %1332 = vmatprep.subr.bf16.mxu0 0
        %1333 = vmatpush1.bf16.msra.mxu0 0
        %1334 = vmatprep.subr.bf16.mxu0 0
        %1335 = vmatpush1.bf16.msra.mxu0 0
        %1336 = vmatprep.subr.bf16.mxu0 0
        %1337 = vmatpush1.bf16.msra.mxu0 0
        %1338 = vmatprep.subr.bf16.mxu0 0
        %1339 = vmatpush1.bf16.msra.mxu0 0
        %1340 = vmatprep.subr.bf16.mxu0 0
        %1341 = vmatpush1.bf16.msra.mxu0 0
        %1342 = vmatprep.subr.bf16.mxu0 0
        %1343 = vmatpush1.bf16.msra.mxu0 0
        %1344 = vmatprep.subr.bf16.mxu0 0
        %1345 = vmatpush1.bf16.msra.mxu0 0
        %1346 = vmatprep.mubr.bf16.mxu0 0
        %1347 = vmatmul.mubr.bf16.gmra.mrb[0].mxu0 %v1276
        %v1348 = vpop.f32.mrb[0].mxu0
        %v1349 = vadd.f32 0.0, %v1348
        %v1350 = vpop.f32.mrb[0].mxu0
        %v1351 = vpop.f32.mrb[0].mxu0
        %v1352 = vadd.f32 0.0, %v1351
        %v1353 = vpop.f32.mrb[0].mxu0
        %1354 = vmatprep.mubr.bf16.mxu0 0
        %1355 = vmatmul.mubr.bf16.gmra.mrb[0].mxu0 %v1279
        %v1356 = vpop.f32.mrb[0].mxu0
        %v1357 = vadd.f32 0.0, %v1356
        %v1358 = vpop.f32.mrb[0].mxu0
        %v1359 = vpop.f32.mrb[0].mxu0
        %v1360 = vadd.f32 0.0, %v1359
        %v1361 = vpop.f32.mrb[0].mxu0
        %1362 = vmatprep.mubr.bf16.mxu0 0
        %1363 = vmatmul.mubr.bf16.gmra.mrb[0].mxu0 %v1282
        %v1364 = vpop.f32.mrb[0].mxu0
        %v1365 = vadd.f32 0.0, %v1364
        %v1366 = vpop.f32.mrb[0].mxu0
        %v1367 = vpop.f32.mrb[0].mxu0
        %v1368 = vadd.f32 0.0, %v1367
        %v1369 = vpop.f32.mrb[0].mxu0
        %1370 = vmatprep.mubr.bf16.mxu0 0
        %1371 = vmatmul.mubr.bf16.gmra.mrb[0].mxu0 %v1285
        %v1372 = vpop.f32.mrb[0].mxu0
        %v1373 = vadd.f32 0.0, %v1372
        %v1374 = vpop.f32.mrb[0].mxu0
        %v1375 = vpop.f32.mrb[0].mxu0
        %v1376 = vadd.f32 0.0, %v1375
        %v1377 = vpop.f32.mrb[0].mxu0
        %1378 = vmatprep.mubr.bf16.mxu0 0
        %1379 = vmatmul.mubr.bf16.gmra.mrb[0].mxu0 %v1288
        %v1380 = vpop.f32.mrb[0].mxu0
        %v1381 = vadd.f32 0.0, %v1380
        %v1382 = vpop.f32.mrb[0].mxu0
        %v1383 = vpop.f32.mrb[0].mxu0
        %v1384 = vadd.f32 0.0, %v1383
        %v1385 = vpop.f32.mrb[0].mxu0
        %1386 = vmatprep.mubr.bf16.mxu0 0
        %1387 = vmatmul.mubr.bf16.gmra.mrb[0].mxu0 %v1291
        %v1388 = vpop.f32.mrb[0].mxu0
        %v1389 = vadd.f32 0.0, %v1388
        %v1390 = vpop.f32.mrb[0].mxu0
        %v1391 = vpop.f32.mrb[0].mxu0
        %v1392 = vadd.f32 0.0, %v1391
        %v1393 = vpop.f32.mrb[0].mxu0
        %1394 = vmatprep.mubr.bf16.mxu0 0
        %1395 = vmatmul.mubr.bf16.gmra.mrb[0].mxu0 %v1294
        %v1396 = vpop.f32.mrb[0].mxu0
        %v1397 = vadd.f32 0.0, %v1396
        %v1398 = vpop.f32.mrb[0].mxu0
        %v1399 = vpop.f32.mrb[0].mxu0
        %v1400 = vadd.f32 0.0, %v1399
        %v1401 = vpop.f32.mrb[0].mxu0
        %1402 = vmatprep.mubr.bf16.mxu0 0
        %1403 = vmatmul.mubr.bf16.gmra.mrb[0].mxu0 %v1297
        %v1404 = vpop.f32.mrb[0].mxu0
        %v1405 = vadd.f32 0.0, %v1404
        %v1406 = vpop.f32.mrb[0].mxu0
        %v1407 = vpop.f32.mrb[0].mxu0
        %v1408 = vadd.f32 0.0, %v1407
        %v1409 = vpop.f32.mrb[0].mxu0
        %1410 = vmatprep.mubr.bf16.mxu0 0
        %1411 = vmatmul.mubr.bf16.gmra.mrb[0].mxu0 %v1300
        %v1412 = vpop.f32.mrb[0].mxu0
        %v1413 = vadd.f32 0.0, %v1412
        %v1414 = vpop.f32.mrb[0].mxu0
        %v1415 = vpop.f32.mrb[0].mxu0
        %v1416 = vadd.f32 0.0, %v1415
        %v1417 = vpop.f32.mrb[0].mxu0
        %1418 = vmatprep.mubr.bf16.mxu0 0
        %1419 = vmatmul.mubr.bf16.gmra.mrb[0].mxu0 %v1303
        %v1420 = vpop.f32.mrb[0].mxu0
        %v1421 = vadd.f32 0.0, %v1420
        %v1422 = vpop.f32.mrb[0].mxu0
        %v1423 = vpop.f32.mrb[0].mxu0
        %v1424 = vadd.f32 0.0, %v1423
        %v1425 = vpop.f32.mrb[0].mxu0
        %1426 = vmatprep.mubr.bf16.mxu0 0
        %1427 = vmatmul.mubr.bf16.gmra.mrb[0].mxu0 %v1306
        %v1428 = vpop.f32.mrb[0].mxu0
        %v1429 = vadd.f32 0.0, %v1428
        %v1430 = vpop.f32.mrb[0].mxu0
        %v1431 = vpop.f32.mrb[0].mxu0
        %v1432 = vadd.f32 0.0, %v1431
        %v1433 = vpop.f32.mrb[0].mxu0
        %1434 = vmatprep.mubr.bf16.mxu0 0
        %1435 = vmatmul.mubr.bf16.gmra.mrb[0].mxu0 %v1309
        %v1436 = vpop.f32.mrb[0].mxu0
        %v1437 = vadd.f32 0.0, %v1436
        %v1438 = vpop.f32.mrb[0].mxu0
        %v1439 = vpop.f32.mrb[0].mxu0
        %v1440 = vadd.f32 0.0, %v1439
        %v1441 = vpop.f32.mrb[0].mxu0
        %1442 = vmatprep.mubr.bf16.mxu0 0
        %1443 = vmatmul.mubr.bf16.gmra.mrb[0].mxu0 %v1312
        %v1444 = vpop.f32.mrb[0].mxu0
        %v1445 = vadd.f32 0.0, %v1444
        %v1446 = vpop.f32.mrb[0].mxu0
        %v1447 = vpop.f32.mrb[0].mxu0
        %v1448 = vpop.f32.mrb[0].mxu0
        %1449 = vdwg.mxu0
        %s1450 = scalar_lea.vmem %s583, 300 [#allocation2]
        %v1451 = vld [vmem:[%s1450] sm:$0xf]
        %v1452 = vld [vmem:[%s1450 + $0x4] sm:$0xf]
        %v1453 = vld [vmem:[%s1450 + $0x8] sm:$0xf]
        %v1454 = vld [vmem:[%s1450 + $0xc] sm:$0xf]
        %v1455 = vld [vmem:[%s1450 + $0x10] sm:$0xf]
        %v1456 = vld [vmem:[%s1450 + $0x14] sm:$0xf]
        %v1457 = vld [vmem:[%s1450 + $0x18] sm:$0xf]
        %v1458 = vld [vmem:[%s1450 + $0x1c] sm:$0xf]
        %v1459 = vld [vmem:[%s1450 + $0x20] sm:$0xf]
        %v1460 = vld [vmem:[%s1450 + $0x24] sm:$0xf]
        %v1461 = vld [vmem:[%s1450 + $0x28] sm:$0xf]
        %v1462 = vld [vmem:[%s1450 + $0x2c] sm:$0xf]
        %v1463 = vld [vmem:[%s1450 + $0x30] sm:$0xf]
        %v1464 = vld [vmem:[%s1450 + $0x34] sm:$0xf]
        %v1465 = vld [vmem:[%s1450 + $0x38] sm:$0xf]
        %v1466 = vld [vmem:[%s1450 + $0x3c] sm:$0xf]
        %v1467 = vld [vmem:[%s1450 + $0x40] sm:$0xf]
        %v1468 = vld [vmem:[%s1450 + $0x44] sm:$0xf]
        %v1469 = vld [vmem:[%s1450 + $0x48] sm:$0xf]
        %v1470 = vld [vmem:[%s1450 + $0x4c] sm:$0xf]
        %v1471 = vld [vmem:[%s1450 + $0x50] sm:$0xf]
        %v1472 = vld [vmem:[%s1450 + $0x54] sm:$0xf]
        %v1473 = vld [vmem:[%s1450 + $0x58] sm:$0xf]
        %v1474 = vld [vmem:[%s1450 + $0x5c] sm:$0xf]
        %v1475 = vld [vmem:[%s1450 + $0x60] sm:$0xf]
        %v1501 = vunpack.c.l.b16 %v1451
        %v1502 = vunpack.c.l.b16 %v1452
        %v1503 = vunpack.c.l.b16 %v1453
        %v1504 = vunpack.c.l.b16 %v1454
        %v1505 = vunpack.c.l.b16 %v1455
        %v1506 = vunpack.c.l.b16 %v1456
        %v1507 = vunpack.c.l.b16 %v1457
        %v1508 = vunpack.c.l.b16 %v1458
        %v1509 = vunpack.c.l.b16 %v1459
        %v1510 = vunpack.c.l.b16 %v1460
        %v1511 = vunpack.c.l.b16 %v1461
        %v1512 = vunpack.c.l.b16 %v1462
        %v1513 = vunpack.c.l.b16 %v1463
        %v1514 = vunpack.c.l.b16 %v1464
        %v1515 = vunpack.c.l.b16 %v1465
        %v1516 = vunpack.c.l.b16 %v1466
        %v1517 = vunpack.c.l.b16 %v1467
        %v1518 = vunpack.c.l.b16 %v1468
        %v1519 = vunpack.c.l.b16 %v1469
        %v1520 = vunpack.c.l.b16 %v1470
        %v1521 = vunpack.c.l.b16 %v1471
        %v1522 = vunpack.c.l.b16 %v1472
        %v1523 = vunpack.c.l.b16 %v1473
        %v1524 = vunpack.c.l.b16 %v1474
        %v1525 = vunpack.c.l.b16 %v1475
        %v1526 = vpack.c.b16 %v1502, %v1501
        %v1527 = vpack.c.b16 %v1504, %v1503
        %v1528 = vpack.c.b16 %v1506, %v1505
        %v1529 = vpack.c.b16 %v1508, %v1507
        %v1530 = vpack.c.b16 %v1510, %v1509
        %v1531 = vpack.c.b16 %v1512, %v1511
        %v1532 = vpack.c.b16 %v1514, %v1513
        %v1533 = vpack.c.b16 %v1516, %v1515
        %v1534 = vpack.c.b16 %v1518, %v1517
        %v1535 = vpack.c.b16 %v1520, %v1519
        %v1536 = vpack.c.b16 %v1522, %v1521
        %v1537 = vpack.c.b16 %v1524, %v1523
        %v1538 = vpack.c.b16 %v1525, %v1525
        %v1540 = vsel %vm739, %v1526, 0
        %v1543 = vsel %vm739, %v1527, 0
        %v1546 = vsel %vm739, %v1528, 0
        %v1549 = vsel %vm739, %v1529, 0
        %v1552 = vsel %vm739, %v1530, 0
        %v1555 = vsel %vm739, %v1531, 0
        %v1558 = vsel %vm739, %v1532, 0
        %v1561 = vsel %vm739, %v1533, 0
        %v1564 = vsel %vm739, %v1534, 0
        %v1567 = vsel %vm739, %v1535, 0
        %v1570 = vsel %vm739, %v1536, 0
        %v1573 = vsel %vm739, %v1537, 0
        %v1576 = vsel %vm739, %v1538, 0
        %1578 = vmatprep.subr.bf16.mxu0 0
        %1579 = vmatpush1.bf16.msra.mxu0 %v730
        %1580 = vmatprep.subr.bf16.mxu0 0
        %1581 = vmatpush1.bf16.msra.mxu0 %v731
        %1582 = vmatprep.subr.bf16.mxu0 0
        %1583 = vmatpush1.bf16.msra.mxu0 %v732
        %1584 = vmatprep.subr.bf16.mxu0 0
        %1585 = vmatpush1.bf16.msra.mxu0 %v733
        %1586 = vmatprep.subr.bf16.mxu0 0
        %1587 = vmatpush1.bf16.msra.mxu0 %v784
        %1588 = vmatprep.subr.bf16.mxu0 0
        %1589 = vmatpush1.bf16.msra.mxu0 0
        %1590 = vmatprep.subr.bf16.mxu0 0
        %1591 = vmatpush1.bf16.msra.mxu0 0
        %1592 = vmatprep.subr.bf16.mxu0 0
        %1593 = vmatpush1.bf16.msra.mxu0 0
        %1594 = vmatprep.subr.bf16.mxu0 0
        %1595 = vmatpush1.bf16.msra.mxu0 0
        %1596 = vmatprep.subr.bf16.mxu0 0
        %1597 = vmatpush1.bf16.msra.mxu0 0
        %1598 = vmatprep.subr.bf16.mxu0 0
        %1599 = vmatpush1.bf16.msra.mxu0 0
        %1600 = vmatprep.subr.bf16.mxu0 0
        %1601 = vmatpush1.bf16.msra.mxu0 0
        %1602 = vmatprep.subr.bf16.mxu0 0
        %1603 = vmatpush1.bf16.msra.mxu0 0
        %1604 = vmatprep.subr.bf16.mxu0 0
        %1605 = vmatpush1.bf16.msra.mxu0 0
        %1606 = vmatprep.subr.bf16.mxu0 0
        %1607 = vmatpush1.bf16.msra.mxu0 0
        %1608 = vmatprep.subr.bf16.mxu0 0
        %1609 = vmatpush1.bf16.msra.mxu0 0
        %1610 = vmatprep.mubr.bf16.mxu0 0
        %1611 = vmatmul.mubr.bf16.gmra.mrb[0].mxu0 %v1540
        %v1612 = vpop.f32.mrb[0].mxu0
        %v1613 = vadd.f32 0.0, %v1612
        %v1614 = vpop.f32.mrb[0].mxu0
        %v1615 = vpop.f32.mrb[0].mxu0
        %v1616 = vadd.f32 0.0, %v1615
        %v1617 = vpop.f32.mrb[0].mxu0
        %1618 = vmatprep.mubr.bf16.mxu0 0
        %1619 = vmatmul.mubr.bf16.gmra.mrb[0].mxu0 %v1543
        %v1620 = vpop.f32.mrb[0].mxu0
        %v1621 = vadd.f32 0.0, %v1620
        %v1622 = vpop.f32.mrb[0].mxu0
        %v1623 = vpop.f32.mrb[0].mxu0
        %v1624 = vadd.f32 0.0, %v1623
        %v1625 = vpop.f32.mrb[0].mxu0
        %1626 = vmatprep.mubr.bf16.mxu0 0
        %1627 = vmatmul.mubr.bf16.gmra.mrb[0].mxu0 %v1546
        %v1628 = vpop.f32.mrb[0].mxu0
        %v1629 = vadd.f32 0.0, %v1628
        %v1630 = vpop.f32.mrb[0].mxu0
        %v1631 = vpop.f32.mrb[0].mxu0
        %v1632 = vadd.f32 0.0, %v1631
        %v1633 = vpop.f32.mrb[0].mxu0
        %1634 = vmatprep.mubr.bf16.mxu0 0
        %1635 = vmatmul.mubr.bf16.gmra.mrb[0].mxu0 %v1549
        %v1636 = vpop.f32.mrb[0].mxu0
        %v1637 = vadd.f32 0.0, %v1636
        %v1638 = vpop.f32.mrb[0].mxu0
        %v1639 = vpop.f32.mrb[0].mxu0
        %v1640 = vadd.f32 0.0, %v1639
        %v1641 = vpop.f32.mrb[0].mxu0
        %1642 = vmatprep.mubr.bf16.mxu0 0
        %1643 = vmatmul.mubr.bf16.gmra.mrb[0].mxu0 %v1552
        %v1644 = vpop.f32.mrb[0].mxu0
        %v1645 = vadd.f32 0.0, %v1644
        %v1646 = vpop.f32.mrb[0].mxu0
        %v1647 = vpop.f32.mrb[0].mxu0
        %v1648 = vadd.f32 0.0, %v1647
        %v1649 = vpop.f32.mrb[0].mxu0
        %1650 = vmatprep.mubr.bf16.mxu0 0
        %1651 = vmatmul.mubr.bf16.gmra.mrb[0].mxu0 %v1555
        %v1652 = vpop.f32.mrb[0].mxu0
        %v1653 = vadd.f32 0.0, %v1652
        %v1654 = vpop.f32.mrb[0].mxu0
        %v1655 = vpop.f32.mrb[0].mxu0
        %v1656 = vadd.f32 0.0, %v1655
        %v1657 = vpop.f32.mrb[0].mxu0
        %1658 = vmatprep.mubr.bf16.mxu0 0
        %1659 = vmatmul.mubr.bf16.gmra.mrb[0].mxu0 %v1558
        %v1660 = vpop.f32.mrb[0].mxu0
        %v1661 = vadd.f32 0.0, %v1660
        %v1662 = vpop.f32.mrb[0].mxu0
        %v1663 = vpop.f32.mrb[0].mxu0
        %v1664 = vadd.f32 0.0, %v1663
        %v1665 = vpop.f32.mrb[0].mxu0
        %1666 = vmatprep.mubr.bf16.mxu0 0
        %1667 = vmatmul.mubr.bf16.gmra.mrb[0].mxu0 %v1561
        %v1668 = vpop.f32.mrb[0].mxu0
        %v1669 = vadd.f32 0.0, %v1668
        %v1670 = vpop.f32.mrb[0].mxu0
        %v1671 = vpop.f32.mrb[0].mxu0
        %v1672 = vadd.f32 0.0, %v1671
        %v1673 = vpop.f32.mrb[0].mxu0
        %1674 = vmatprep.mubr.bf16.mxu0 0
        %1675 = vmatmul.mubr.bf16.gmra.mrb[0].mxu0 %v1564
        %v1676 = vpop.f32.mrb[0].mxu0
        %v1677 = vadd.f32 0.0, %v1676
        %v1678 = vpop.f32.mrb[0].mxu0
        %v1679 = vpop.f32.mrb[0].mxu0
        %v1680 = vadd.f32 0.0, %v1679
        %v1681 = vpop.f32.mrb[0].mxu0
        %1682 = vmatprep.mubr.bf16.mxu0 0
        %1683 = vmatmul.mubr.bf16.gmra.mrb[0].mxu0 %v1567
        %v1684 = vpop.f32.mrb[0].mxu0
        %v1685 = vadd.f32 0.0, %v1684
        %v1686 = vpop.f32.mrb[0].mxu0
        %v1687 = vpop.f32.mrb[0].mxu0
        %v1688 = vadd.f32 0.0, %v1687
        %v1689 = vpop.f32.mrb[0].mxu0
        %1690 = vmatprep.mubr.bf16.mxu0 0
        %1691 = vmatmul.mubr.bf16.gmra.mrb[0].mxu0 %v1570
        %v1692 = vpop.f32.mrb[0].mxu0
        %v1693 = vadd.f32 0.0, %v1692
        %v1694 = vpop.f32.mrb[0].mxu0
        %v1695 = vpop.f32.mrb[0].mxu0
        %v1696 = vadd.f32 0.0, %v1695
        %v1697 = vpop.f32.mrb[0].mxu0
        %1698 = vmatprep.mubr.bf16.mxu0 0
        %1699 = vmatmul.mubr.bf16.gmra.mrb[0].mxu0 %v1573
        %v1700 = vpop.f32.mrb[0].mxu0
        %v1701 = vadd.f32 0.0, %v1700
        %v1702 = vpop.f32.mrb[0].mxu0
        %v1703 = vpop.f32.mrb[0].mxu0
        %v1704 = vadd.f32 0.0, %v1703
        %v1705 = vpop.f32.mrb[0].mxu0
        %1706 = vmatprep.mubr.bf16.mxu0 0
        %1707 = vmatmul.mubr.bf16.gmra.mrb[0].mxu0 %v1576
        %v1708 = vpop.f32.mrb[0].mxu0
        %v1709 = vadd.f32 0.0, %v1708
        %v1710 = vpop.f32.mrb[0].mxu0
        %v1711 = vpop.f32.mrb[0].mxu0
        %v1712 = vpop.f32.mrb[0].mxu0
        %1713 = vdwg.mxu0
        %v1714 = vmax.f32 %v821, %v1085
        %v1715 = vmax.f32 %v824, %v1088
        %v1716 = vmax.f32 %v829, %v1093
        %v1717 = vmax.f32 %v832, %v1096
        %v1718 = vmax.f32 %v837, %v1101
        %v1719 = vmax.f32 %v840, %v1104
        %v1720 = vmax.f32 %v845, %v1109
        %v1721 = vmax.f32 %v848, %v1112
        %v1722 = vmax.f32 %v853, %v1117
        %v1723 = vmax.f32 %v856, %v1120
        %v1724 = vmax.f32 %v861, %v1125
        %v1725 = vmax.f32 %v864, %v1128
        %v1726 = vmax.f32 %v869, %v1133
        %v1727 = vmax.f32 %v872, %v1136
        %v1728 = vmax.f32 %v877, %v1141
        %v1729 = vmax.f32 %v880, %v1144
        %v1730 = vmax.f32 %v885, %v1149
        %v1731 = vmax.f32 %v888, %v1152
        %v1732 = vmax.f32 %v893, %v1157
        %v1733 = vmax.f32 %v896, %v1160
        %v1734 = vmax.f32 %v901, %v1165
        %v1735 = vmax.f32 %v904, %v1168
        %v1736 = vmax.f32 %v909, %v1173
        %v1737 = vmax.f32 %v912, %v1176
        %v1738 = vmax.f32 %v917, %v1181
        %v1739 = vmax.f32 %v1349, %v1613
        %v1740 = vmax.f32 %v1352, %v1616
        %v1741 = vmax.f32 %v1357, %v1621
        %v1742 = vmax.f32 %v1360, %v1624
        %v1743 = vmax.f32 %v1365, %v1629
        %v1744 = vmax.f32 %v1368, %v1632
        %v1745 = vmax.f32 %v1373, %v1637
        %v1746 = vmax.f32 %v1376, %v1640
        %v1747 = vmax.f32 %v1381, %v1645
        %v1748 = vmax.f32 %v1384, %v1648
        %v1749 = vmax.f32 %v1389, %v1653
        %v1750 = vmax.f32 %v1392, %v1656
        %v1751 = vmax.f32 %v1397, %v1661
        %v1752 = vmax.f32 %v1400, %v1664
        %v1753 = vmax.f32 %v1405, %v1669
        %v1754 = vmax.f32 %v1408, %v1672
        %v1755 = vmax.f32 %v1413, %v1677
        %v1756 = vmax.f32 %v1416, %v1680
        %v1757 = vmax.f32 %v1421, %v1685
        %v1758 = vmax.f32 %v1424, %v1688
        %v1759 = vmax.f32 %v1429, %v1693
        %v1760 = vmax.f32 %v1432, %v1696
        %v1761 = vmax.f32 %v1437, %v1701
        %v1762 = vmax.f32 %v1440, %v1704
        %v1763 = vmax.f32 %v1445, %v1709
        %v1764 = vmax.f32 %v1714, %v1739
        %v1765 = vmax.f32 %v1715, %v1740
        %v1766 = vmax.f32 %v1716, %v1741
        %v1767 = vmax.f32 %v1717, %v1742
        %v1768 = vmax.f32 %v1718, %v1743
        %v1769 = vmax.f32 %v1719, %v1744
        %v1770 = vmax.f32 %v1720, %v1745
        %v1771 = vmax.f32 %v1721, %v1746
        %v1772 = vmax.f32 %v1722, %v1747
        %v1773 = vmax.f32 %v1723, %v1748
        %v1774 = vmax.f32 %v1724, %v1749
        %v1775 = vmax.f32 %v1725, %v1750
        %v1776 = vmax.f32 %v1726, %v1751
        %v1777 = vmax.f32 %v1727, %v1752
        %v1778 = vmax.f32 %v1728, %v1753
        %v1779 = vmax.f32 %v1729, %v1754
        %v1780 = vmax.f32 %v1730, %v1755
        %v1781 = vmax.f32 %v1731, %v1756
        %v1782 = vmax.f32 %v1732, %v1757
        %v1783 = vmax.f32 %v1733, %v1758
        %v1784 = vmax.f32 %v1734, %v1759
        %v1785 = vmax.f32 %v1735, %v1760
        %v1786 = vmax.f32 %v1736, %v1761
        %v1787 = vmax.f32 %v1737, %v1762
        %v1788 = vmax.f32 %v1738, %v1763
        %v1789 = vld [vmem:[%s2] sm:$0x1]
        %v1791 = vlaneseq
        %v1792 = vshrl.u32 %v1791, 7
        %v1793 = vsub.s32 0, %v1792
        %v1794 = vrot.slane %v1789, %v1793
        %v1796 = vadd.f32 %v1764, %v1794
        %v1797 = vadd.f32 %v1765, %v1794
        %v1798 = vadd.f32 %v1766, %v1794
        %v1799 = vadd.f32 %v1767, %v1794
        %v1800 = vadd.f32 %v1768, %v1794
        %v1801 = vadd.f32 %v1769, %v1794
        %v1802 = vadd.f32 %v1770, %v1794
        %v1803 = vadd.f32 %v1771, %v1794
        %v1804 = vadd.f32 %v1772, %v1794
        %v1805 = vadd.f32 %v1773, %v1794
        %v1806 = vadd.f32 %v1774, %v1794
        %v1807 = vadd.f32 %v1775, %v1794
        %v1808 = vadd.f32 %v1776, %v1794
        %v1809 = vadd.f32 %v1777, %v1794
        %v1810 = vadd.f32 %v1778, %v1794
        %v1811 = vadd.f32 %v1779, %v1794
        %v1812 = vadd.f32 %v1780, %v1794
        %v1813 = vadd.f32 %v1781, %v1794
        %v1814 = vadd.f32 %v1782, %v1794
        %v1815 = vadd.f32 %v1783, %v1794
        %v1816 = vadd.f32 %v1784, %v1794
        %v1817 = vadd.f32 %v1785, %v1794
        %v1818 = vadd.f32 %v1786, %v1794
        %v1819 = vadd.f32 %v1787, %v1794
        %v1820 = vadd.f32 %v1788, %v1794
        %v1821 = vmax.f32 %v1796, 0.0
        %v1822 = vmax.f32 %v1797, 0.0
        %v1823 = vmax.f32 %v1798, 0.0
        %v1824 = vmax.f32 %v1799, 0.0
        %v1825 = vmax.f32 %v1800, 0.0
        %v1826 = vmax.f32 %v1801, 0.0
        %v1827 = vmax.f32 %v1802, 0.0
        %v1828 = vmax.f32 %v1803, 0.0
        %v1829 = vmax.f32 %v1804, 0.0
        %v1830 = vmax.f32 %v1805, 0.0
        %v1831 = vmax.f32 %v1806, 0.0
        %v1832 = vmax.f32 %v1807, 0.0
        %v1833 = vmax.f32 %v1808, 0.0
        %v1834 = vmax.f32 %v1809, 0.0
        %v1835 = vmax.f32 %v1810, 0.0
        %v1836 = vmax.f32 %v1811, 0.0
        %v1837 = vmax.f32 %v1812, 0.0
        %v1838 = vmax.f32 %v1813, 0.0
        %v1839 = vmax.f32 %v1814, 0.0
        %v1840 = vmax.f32 %v1815, 0.0
        %v1841 = vmax.f32 %v1816, 0.0
        %v1842 = vmax.f32 %v1817, 0.0
        %v1843 = vmax.f32 %v1818, 0.0
        %v1844 = vmax.f32 %v1819, 0.0
        %v1845 = vmax.f32 %v1820, 0.0
        %v1846 = vpack.c.bf16 %v1822, %v1821
        %v1847 = vpack.c.bf16 %v1824, %v1823
        %v1848 = vpack.c.bf16 %v1826, %v1825
        %v1849 = vpack.c.bf16 %v1828, %v1827
        %v1850 = vpack.c.bf16 %v1830, %v1829
        %v1851 = vpack.c.bf16 %v1832, %v1831
        %v1852 = vpack.c.bf16 %v1834, %v1833
        %v1853 = vpack.c.bf16 %v1836, %v1835
        %v1854 = vpack.c.bf16 %v1838, %v1837
        %v1855 = vpack.c.bf16 %v1840, %v1839
        %v1856 = vpack.c.bf16 %v1842, %v1841
        %v1857 = vpack.c.bf16 %v1844, %v1843
        %v1858 = vpack.c.bf16 %v1845, %v1845
        %v1872 = vunpack.c.l.b16 %v1846
        %v1873 = vunpack.c.h.b16 %v1846
        %v1874 = vunpack.c.l.b16 %v1847
        %v1875 = vunpack.c.h.b16 %v1847
        %v1876 = vunpack.c.l.b16 %v1848
        %v1877 = vunpack.c.h.b16 %v1848
        %v1878 = vunpack.c.l.b16 %v1849
        %v1879 = vunpack.c.h.b16 %v1849
        %v1880 = vunpack.c.l.b16 %v1850
        %v1881 = vunpack.c.h.b16 %v1850
        %v1882 = vunpack.c.l.b16 %v1851
        %v1883 = vunpack.c.h.b16 %v1851
        %v1884 = vunpack.c.l.b16 %v1852
        %v1885 = vunpack.c.h.b16 %v1852
        %v1886 = vunpack.c.l.b16 %v1853
        %v1887 = vunpack.c.h.b16 %v1853
        %v1888 = vunpack.c.l.b16 %v1854
        %v1889 = vunpack.c.h.b16 %v1854
        %v1890 = vunpack.c.l.b16 %v1855
        %v1891 = vunpack.c.h.b16 %v1855
        %v1892 = vunpack.c.l.b16 %v1856
        %v1893 = vunpack.c.h.b16 %v1856
        %v1894 = vunpack.c.l.b16 %v1857
        %v1895 = vunpack.c.h.b16 %v1857
        %v1896 = vunpack.c.l.b16 %v1858
        %v1897 = vpack.c.b16 %v1872, %v1872
        %v1898 = vpack.c.b16 %v1873, %v1873
        %v1899 = vpack.c.b16 %v1874, %v1874
        %v1900 = vpack.c.b16 %v1875, %v1875
        %v1901 = vpack.c.b16 %v1876, %v1876
        %v1902 = vpack.c.b16 %v1877, %v1877
        %v1903 = vpack.c.b16 %v1878, %v1878
        %v1904 = vpack.c.b16 %v1879, %v1879
        %v1905 = vpack.c.b16 %v1880, %v1880
        %v1906 = vpack.c.b16 %v1881, %v1881
        %v1907 = vpack.c.b16 %v1882, %v1882
        %v1908 = vpack.c.b16 %v1883, %v1883
        %v1909 = vpack.c.b16 %v1884, %v1884
        %v1910 = vpack.c.b16 %v1885, %v1885
        %v1911 = vpack.c.b16 %v1886, %v1886
        %v1912 = vpack.c.b16 %v1887, %v1887
        %v1913 = vpack.c.b16 %v1888, %v1888
        %v1914 = vpack.c.b16 %v1889, %v1889
        %v1915 = vpack.c.b16 %v1890, %v1890
        %v1916 = vpack.c.b16 %v1891, %v1891
        %v1917 = vpack.c.b16 %v1892, %v1892
        %v1918 = vpack.c.b16 %v1893, %v1893
        %v1919 = vpack.c.b16 %v1894, %v1894
        %v1920 = vpack.c.b16 %v1895, %v1895
        %v1921 = vpack.c.b16 %v1896, %v1896
        %1947 = vst [vmem:[%s609] sm:$0xf] %v1897
        %1948 = vst [vmem:[%s609 + $0x4] sm:$0xf] %v1898
        %1949 = vst [vmem:[%s609 + $0x8] sm:$0xf] %v1899
        %1950 = vst [vmem:[%s609 + $0xc] sm:$0xf] %v1900
        %1951 = vst [vmem:[%s609 + $0x10] sm:$0xf] %v1901
        %1952 = vst [vmem:[%s609 + $0x14] sm:$0xf] %v1902
        %1953 = vst [vmem:[%s609 + $0x18] sm:$0xf] %v1903
        %1954 = vst [vmem:[%s609 + $0x1c] sm:$0xf] %v1904
        %1955 = vst [vmem:[%s609 + $0x20] sm:$0xf] %v1905
        %1956 = vst [vmem:[%s609 + $0x24] sm:$0xf] %v1906
        %1957 = vst [vmem:[%s609 + $0x28] sm:$0xf] %v1907
        %1958 = vst [vmem:[%s609 + $0x2c] sm:$0xf] %v1908
        %1959 = vst [vmem:[%s609 + $0x30] sm:$0xf] %v1909
        %1960 = vst [vmem:[%s609 + $0x34] sm:$0xf] %v1910
        %1961 = vst [vmem:[%s609 + $0x38] sm:$0xf] %v1911
        %1962 = vst [vmem:[%s609 + $0x3c] sm:$0xf] %v1912
        %1963 = vst [vmem:[%s609 + $0x40] sm:$0xf] %v1913
        %1964 = vst [vmem:[%s609 + $0x44] sm:$0xf] %v1914
        %1965 = vst [vmem:[%s609 + $0x48] sm:$0xf] %v1915
        %1966 = vst [vmem:[%s609 + $0x4c] sm:$0xf] %v1916
        %1967 = vst [vmem:[%s609 + $0x50] sm:$0xf] %v1917
        %1968 = vst [vmem:[%s609 + $0x54] sm:$0xf] %v1918
        %1969 = vst [vmem:[%s609 + $0x58] sm:$0xf] %v1919
        %1970 = vst [vmem:[%s609 + $0x5c] sm:$0xf] %v1920
        %1971 = vst [vmem:[%s609 + $0x60] sm:$0xf] %v1921
        %s1972 = smul.u32 25, %s14
        %p1973 = scmp.lt.s32.totalorder %s1972, 49
        %s1974 = scalar_select %p1973, %s1972, 49
        %s1975 = smul.addr %s1974, 4
        %s1976 = scalar_lea.vmem %s3, %s1975
        // Predicated region
        $region74: #{net_forward.3} parent=68 // pred_check
          %p1977 = pneg %p100
        $region75: #{net_forward.3} parent=68 // pred_check_branch
          %1979 = sbr.rel (%p1977) target = $region77
        $region76: #{net_forward.3} parent=68 // pred_region
          %s1980 = smul.u32 25, %s14
        $region77: #{net_forward.3} parent=68 // pred_fallthru
          _
      $region69: #{net_forward.3} parent=5 // pred_fallthru
        _
      %p1981 = scmp.le.s32.totalorder 2, %s9
      // Predicated region
      $region78: #{net_forward.3} parent=5 // pred_check
        %p1982 = pneg %p1981
      $region79: #{net_forward.3} parent=5 // pred_check_branch
        %1984 = sbr.rel (%p1982) target = $region81
      $region80: #{net_forward.3} parent=5 // pred_region
        %s1985 = ssub.s32 %s9, 2
        // Predicated region
        $region82: #{net_forward.3} parent=80 // pred_check
          %p1986 = pneg %p106
        $region83: #{net_forward.3} parent=80 // pred_check_branch
          %1988 = sbr.rel (%p1986) target = $region85
        $region84: #{net_forward.3} parent=80 // pred_region
          %s1989 = smul.u32 25, %s15
          %p1990 = scmp.lt.s32.totalorder %s1989, 49
          %s1991 = scalar_select %p1990, %s1989, 49
          %s1992 = smul.addr %s1991, 4
          %s1993 = scalar_lea.vmem %s3, %s1992
        $region85: #{net_forward.3} parent=80 // pred_fallthru
          _
      $region81: #{net_forward.3} parent=5 // pred_fallthru
        _
    $region6: #{net_forward.3} parent=1 // loop_footer
      %s13 = sadd.s32 1, %s9
    $region7: #{net_forward.3} parent=1 // loop_footer_branch
      %8 = sbr.rel target = $region3
    $region8: #{net_forward.3} parent=1 // loop_exit
      _

// kernel: net_forward.4
$region0: #{net_forward.4}
  #allocation0 [shape = 'u32[]', space=smem, size = 0x4, offset = 0x4, fixed_abs, tag = 'smem constant byte address 0x4 - core index']
  #allocation1 [shape = 'u32[144,128]{1,0:T(1,128)}', space=vmem, size = 0x12000, scoped, tag = 'internal scratch']
  %s0 = inlined_call_operand.vmem [shape: bf16[4,64,150], index: 0, kind: input, shape index: {}]
  %s1 = inlined_call_operand.vmem [shape: bf16[150,128], index: 1, kind: input, shape index: {}]
  %s2 = inlined_call_operand.vmem [shape: f32[1,128], index: 2, kind: input, shape index: {}]
  %s3 = inlined_call_operand.vmem [shape: bf16[64,128], index: 3, kind: output, shape index: {}]
  %s4 = sld [smem:[#allocation0]]
  $region83: #{net_forward.4} parent=0
    _
  %s6 = ssub.s32 1, %s4
  %s7 = scalar_select 0, %s6, %s4
  $region1: #{net_forward.4} parent=0
    #allocation2 [shape = 'u8[131072]{0}', space=vmem, size = 0x20000, scoped, tag = 'input window, operand 0']
    loop: start=0, step=1, limit=4
    $region2: #{net_forward.4} parent=1 // loop_pre_header
      _
    $region3: #{net_forward.4} parent=1 // loop_header
      %s9 = sphi 0, %s13
      %p10 = scmp.ge.s32.totalorder %s9, 4
      %s19 = sphi 0, %s21
      %s22 = sphi 0, %s19
      %s23 = sphi 0, %s22
      %s39 = sphi 0, %s23
      %s43 = sphi 0, %s43
      %s45 = sphi 0, %s43
      %s46 = sphi 0, %s45
      %s60 = sphi 0, %s46
      %s64 = sphi 0, %s64
      %s66 = sphi 0, %s64
      %s67 = sphi 0, %s66
      %s81 = sphi 0, %s67
      %s87 = sphi 0, %s89
      %s90 = sphi 0, %s87
      %s91 = sphi 0, %s90
      %s107 = sphi 0, %s91
    $region4: #{net_forward.4} parent=1 // loop_header_branch
      %12 = sbr.rel (%p10) target = $region8
    $region5: #{net_forward.4} parent=1 // loop_body
      %s14 = ssub.s32 %s9, 1
      %s15 = ssub.s32 %s9, 2
      %s16 = sadd.s32 %s9, 1
      %s17 = ssub.s32 %s9, %s16
      %p18 = scmp.eq.s32.totalorder %s17, 0
      %s20 = sadd.s32 %s19, 1
      %s21 = scalar_select %p18, %s19, %s20
      %p24 = pneg %p18
      %p25 = scmp.eq.s32.totalorder %s9, 1
      %p26 = por %p24, %p25
      %p27 = scmp.ne.s32.totalorder %s19, %s22
      %p28 = scmp.eq.s32.totalorder %s9, 0
      %p29 = por %p27, %p28
      %p30 = scmp.ne.s32.totalorder %s19, %s22
      %p31 = scmp.eq.s32.totalorder %s14, 1
      %p32 = por %p30, %p31
      %p33 = scmp.ne.s32.totalorder %s22, %s23
      %p34 = scmp.eq.s32.totalorder %s14, 0
      %p35 = por %p33, %p34
      %p36 = scmp.ne.s32.totalorder %s22, %s23
      %p37 = scmp.eq.s32.totalorder %s15, 1
      %p38 = por %p36, %p37
      %p40 = scmp.ne.s32.totalorder %s23, %s39
      %p41 = scmp.eq.s32.totalorder %s15, 0
      %p42 = por %p40, %p41
      %s44 = sadd.s32 %s43, 1
      %p47 = scmp.eq.s32.totalorder %s9, 1
      %p48 = scmp.ne.s32.totalorder %s43, %s45
      %p49 = scmp.eq.s32.totalorder %s9, 0
      %p50 = por %p48, %p49
      %p51 = scmp.ne.s32.totalorder %s43, %s45
      %p52 = scmp.eq.s32.totalorder %s14, 1
      %p53 = por %p51, %p52
      %p54 = scmp.ne.s32.totalorder %s45, %s46
      %p55 = scmp.eq.s32.totalorder %s14, 0
      %p56 = por %p54, %p55
      %p57 = scmp.ne.s32.totalorder %s45, %s46
      %p58 = scmp.eq.s32.totalorder %s15, 1
      %p59 = por %p57, %p58
      %p61 = scmp.ne.s32.totalorder %s46, %s60
      %p62 = scmp.eq.s32.totalorder %s15, 0
      %p63 = por %p61, %p62
      %s65 = sadd.s32 %s64, 1
      %p68 = scmp.eq.s32.totalorder %s9, 1
      %p69 = scmp.ne.s32.totalorder %s64, %s66
      %p70 = scmp.eq.s32.totalorder %s9, 0
      %p71 = por %p69, %p70
      %p72 = scmp.ne.s32.totalorder %s64, %s66
      %p73 = scmp.eq.s32.totalorder %s14, 1
      %p74 = por %p72, %p73
      %p75 = scmp.ne.s32.totalorder %s66, %s67
      %p76 = scmp.eq.s32.totalorder %s14, 0
      %p77 = por %p75, %p76
      %p78 = scmp.ne.s32.totalorder %s66, %s67
      %p79 = scmp.eq.s32.totalorder %s15, 1
      %p80 = por %p78, %p79
      %p82 = scmp.ne.s32.totalorder %s67, %s81
      %p83 = scmp.eq.s32.totalorder %s15, 0
      %p84 = por %p82, %p83
      %s85 = ssub.s32 %s9, %s16
      %p86 = scmp.eq.s32.totalorder %s85, 0
      %s88 = sadd.s32 %s87, 1
      %s89 = scalar_select %p86, %s87, %s88
      %p92 = pneg %p86
      %p93 = scmp.eq.s32.totalorder %s9, 1
      %p94 = por %p92, %p93
      %p95 = scmp.ne.s32.totalorder %s87, %s90
      %p96 = scmp.eq.s32.totalorder %s9, 0
      %p97 = por %p95, %p96
      %p98 = scmp.ne.s32.totalorder %s87, %s90
      %p99 = scmp.eq.s32.totalorder %s14, 1
      %p100 = por %p98, %p99
      %p101 = scmp.ne.s32.totalorder %s90, %s91
      %p102 = scmp.eq.s32.totalorder %s14, 0
      %p103 = por %p101, %p102
      %p104 = scmp.ne.s32.totalorder %s90, %s91
      %p105 = scmp.eq.s32.totalorder %s15, 1
      %p106 = por %p104, %p105
      %p108 = scmp.ne.s32.totalorder %s91, %s107
      %p109 = scmp.eq.s32.totalorder %s15, 0
      %p110 = por %p108, %p109
      %p111 = scmp.le.s32.totalorder 1, %s9
      %p112 = scmp.lt.s32.totalorder %s9, 3
      %p113 = pnand %p111, %p112
      %p114 = pneg %p113
      // Predicated region
      $region9: #{net_forward.4} parent=5 // pred_check
        _
      $region10: #{net_forward.4} parent=5 // pred_check_branch
        %116 = sbr.rel (%p113) target = $region12
      $region11: #{net_forward.4} parent=5 // pred_region
        %s117 = ssub.s32 %s9, 1
        // Predicated region
        $region13: #{net_forward.4} parent=11 // pred_check
          %p118 = pneg %p56
        $region14: #{net_forward.4} parent=11 // pred_check_branch
          %120 = sbr.rel (%p118) target = $region16
        $region15: #{net_forward.4} parent=11 // pred_region
          _
        $region16: #{net_forward.4} parent=11 // pred_fallthru
          _
        // Predicated region
        $region17: #{net_forward.4} parent=11 // pred_check
          %p121 = pneg %p77
        $region18: #{net_forward.4} parent=11 // pred_check_branch
          %123 = sbr.rel (%p121) target = $region20
        $region19: #{net_forward.4} parent=11 // pred_region
          _
        $region20: #{net_forward.4} parent=11 // pred_fallthru
          _
      $region12: #{net_forward.4} parent=5 // pred_fallthru
        _
      %p124 = scmp.lt.s32.totalorder %s9, 2
      // Predicated region
      $region21: #{net_forward.4} parent=5 // pred_check
        %p125 = pneg %p124
      $region22: #{net_forward.4} parent=5 // pred_check_branch
        %127 = sbr.rel (%p125) target = $region24
      $region23: #{net_forward.4} parent=5 // pred_region
        // Predicated region
        $region25: #{net_forward.4} parent=23 // pred_check
          %p128 = pneg %p29
        $region26: #{net_forward.4} parent=23 // pred_check_branch
          %130 = sbr.rel (%p128) target = $region28
        $region27: #{net_forward.4} parent=23 // pred_region
          %s131 = sand.u32 %s19, 1
          %s132 = sand.u32 %s19, 1
          %s133 = smul.addr %s132, 128
          %s134 = scalar_lea.vmem [#allocation2], %s133
          %s135 = smul.u32 4, %s9
          %s136 = smul.addr %s135, 2
          %s137 = smul.addr %s136, 4
          %s138 = scalar_lea.vmem %s0, %s137
          // Predicated region
          $region29: #{net_forward.4} parent=27 // pred_check
            _
          $region30: #{net_forward.4} parent=27 // pred_check_branch
            %140 = sbr.rel (0) target = $region32
          $region31: #{net_forward.4} parent=27 // pred_region
            // Predicated region
            $region33: #{net_forward.4} parent=31 // pred_check
              _
            $region34: #{net_forward.4} parent=31 // pred_check_branch
              %142 = sbr.rel (0) target = $region36
            $region35: #{net_forward.4} parent=31 // pred_region
              // Predicated region
              $region48: #{net_forward.4} parent=35 // pred_check
                _
              $region49: #{net_forward.4} parent=35 // pred_check_branch
                %187 = sbr.rel (0) target = $region51
              $region50: #{net_forward.4} parent=35 // pred_region
                loop: start=0, step=1, limit=1
                $region52: #{net_forward.4} parent=50 // loop_pre_header
                  _
                $region53: #{net_forward.4} parent=50 // loop_header
                  %s189 = sphi 0, %s193
                  %p190 = scmp.ge.s32.totalorder %s189, 1
                  %s194 = sphi %s138, %s138
                  %s195 = sphi %s134, %s134
                $region54: #{net_forward.4} parent=50 // loop_header_branch
                  %192 = sbr.rel (%p190) target = $region58
                $region55: #{net_forward.4} parent=50 // loop_body
                  %v196 = vld [vmem:[%s194] sm:$0xff]
                  %197 = vst [vmem:[%s195] sm:$0xff] %v196
                  %v198 = vld [vmem:[%s194 + $0x8] sm:$0xff]
                  %199 = vst [vmem:[%s195 + $0x8] sm:$0xff] %v198
                  %v200 = vld [vmem:[%s194 + $0x10] sm:$0xff]
                  %201 = vst [vmem:[%s195 + $0x10] sm:$0xff] %v200
                  %v202 = vld [vmem:[%s194 + $0x18] sm:$0xff]
                  %203 = vst [vmem:[%s195 + $0x18] sm:$0xff] %v202
                  %v204 = vld [vmem:[%s194 + $0x40] sm:$0xff]
                  %205 = vst [vmem:[%s195 + $0x20] sm:$0xff] %v204
                  %v206 = vld [vmem:[%s194 + $0x48] sm:$0xff]
                  %207 = vst [vmem:[%s195 + $0x28] sm:$0xff] %v206
                  %v208 = vld [vmem:[%s194 + $0x50] sm:$0xff]
                  %209 = vst [vmem:[%s195 + $0x30] sm:$0xff] %v208
                  %v210 = vld [vmem:[%s194 + $0x58] sm:$0xff]
                  %211 = vst [vmem:[%s195 + $0x38] sm:$0xff] %v210
                  %v212 = vld [vmem:[%s194 + $0x80] sm:$0xff]
                  %213 = vst [vmem:[%s195 + $0x40] sm:$0xff] %v212
                  %v214 = vld [vmem:[%s194 + $0x88] sm:$0xff]
                  %215 = vst [vmem:[%s195 + $0x48] sm:$0xff] %v214
                  %v216 = vld [vmem:[%s194 + $0x90] sm:$0xff]
                  %217 = vst [vmem:[%s195 + $0x50] sm:$0xff] %v216
                  %v218 = vld [vmem:[%s194 + $0x98] sm:$0xff]
                  %219 = vst [vmem:[%s195 + $0x58] sm:$0xff] %v218
                  %v220 = vld [vmem:[%s194 + $0xc0] sm:$0xff]
                  %221 = vst [vmem:[%s195 + $0x60] sm:$0xff] %v220
                  %v222 = vld [vmem:[%s194 + $0xc8] sm:$0xff]
                  %223 = vst [vmem:[%s195 + $0x68] sm:$0xff] %v222
                  %v224 = vld [vmem:[%s194 + $0xd0] sm:$0xff]
                  %225 = vst [vmem:[%s195 + $0x70] sm:$0xff] %v224
                  %v226 = vld [vmem:[%s194 + $0xd8] sm:$0xff]
                  %227 = vst [vmem:[%s195 + $0x78] sm:$0xff] %v226
                $region56: #{net_forward.4} parent=50 // loop_footer
                  %s193 = sadd.s32 1, %s189
                $region57: #{net_forward.4} parent=50 // loop_footer_branch
                  %188 = sbr.rel target = $region53
                $region58: #{net_forward.4} parent=50 // loop_exit
                  _
              $region51: #{net_forward.4} parent=35 // pred_fallthru
                _
              // Predicated region
              $region59: #{net_forward.4} parent=35 // pred_check
                _
              $region60: #{net_forward.4} parent=35 // pred_check_branch
                %229 = sbr.rel target = $region62
              $region61: #{net_forward.4} parent=35 // pred_region
                _
              $region62: #{net_forward.4} parent=35 // pred_fallthru
                _
            $region36: #{net_forward.4} parent=31 // pred_fallthru
              _
            // Predicated region
            $region37: #{net_forward.4} parent=31 // pred_check
              _
            $region38: #{net_forward.4} parent=31 // pred_check_branch
              %144 = sbr.rel target = $region40
            $region39: #{net_forward.4} parent=31 // pred_region
              loop: start=0, step=1, limit=1
              $region41: #{net_forward.4} parent=39 // loop_pre_header
                _
              $region42: #{net_forward.4} parent=39 // loop_header
                %s147 = sphi 0, %s151
                %p148 = scmp.ge.s32.totalorder %s147, 1
                %s152 = sphi %s138, %s138
                %s153 = sphi %s134, %s134
              $region43: #{net_forward.4} parent=39 // loop_header_branch
                %150 = sbr.rel (%p148) target = $region47
              $region44: #{net_forward.4} parent=39 // loop_body
                %v154 = vld [vmem:[%s152] sm:$0xff]
                %155 = vst [vmem:[%s153] sm:$0xff] %v154
                %v156 = vld [vmem:[%s152 + $0x8] sm:$0xff]
                %157 = vst [vmem:[%s153 + $0x8] sm:$0xff] %v156
                %v158 = vld [vmem:[%s152 + $0x10] sm:$0xff]
                %159 = vst [vmem:[%s153 + $0x10] sm:$0xff] %v158
                %v160 = vld [vmem:[%s152 + $0x18] sm:$0xff]
                %161 = vst [vmem:[%s153 + $0x18] sm:$0xff] %v160
                %v162 = vld [vmem:[%s152 + $0x40] sm:$0xff]
                %163 = vst [vmem:[%s153 + $0x20] sm:$0xff] %v162
                %v164 = vld [vmem:[%s152 + $0x48] sm:$0xff]
                %165 = vst [vmem:[%s153 + $0x28] sm:$0xff] %v164
                %v166 = vld [vmem:[%s152 + $0x50] sm:$0xff]
                %167 = vst [vmem:[%s153 + $0x30] sm:$0xff] %v166
                %v168 = vld [vmem:[%s152 + $0x58] sm:$0xff]
                %169 = vst [vmem:[%s153 + $0x38] sm:$0xff] %v168
                %v170 = vld [vmem:[%s152 + $0x80] sm:$0xff]
                %171 = vst [vmem:[%s153 + $0x40] sm:$0xff] %v170
                %v172 = vld [vmem:[%s152 + $0x88] sm:$0xff]
                %173 = vst [vmem:[%s153 + $0x48] sm:$0xff] %v172
                %v174 = vld [vmem:[%s152 + $0x90] sm:$0xff]
                %175 = vst [vmem:[%s153 + $0x50] sm:$0xff] %v174
                %v176 = vld [vmem:[%s152 + $0x98] sm:$0xff]
                %177 = vst [vmem:[%s153 + $0x58] sm:$0xff] %v176
                %v178 = vld [vmem:[%s152 + $0xc0] sm:$0xff]
                %179 = vst [vmem:[%s153 + $0x60] sm:$0xff] %v178
                %v180 = vld [vmem:[%s152 + $0xc8] sm:$0xff]
                %181 = vst [vmem:[%s153 + $0x68] sm:$0xff] %v180
                %v182 = vld [vmem:[%s152 + $0xd0] sm:$0xff]
                %183 = vst [vmem:[%s153 + $0x70] sm:$0xff] %v182
                %v184 = vld [vmem:[%s152 + $0xd8] sm:$0xff]
                %185 = vst [vmem:[%s153 + $0x78] sm:$0xff] %v184
              $region45: #{net_forward.4} parent=39 // loop_footer
                %s151 = sadd.s32 1, %s147
              $region46: #{net_forward.4} parent=39 // loop_footer_branch
                %146 = sbr.rel target = $region42
              $region47: #{net_forward.4} parent=39 // loop_exit
                _
            $region40: #{net_forward.4} parent=31 // pred_fallthru
              _
          $region32: #{net_forward.4} parent=27 // pred_fallthru
            _
          %230 = vnop
        $region28: #{net_forward.4} parent=23 // pred_fallthru
          _
      $region24: #{net_forward.4} parent=5 // pred_fallthru
        _
      %p231 = scmp.le.s32.totalorder 1, %s9
      %p232 = scmp.lt.s32.totalorder %s9, 3
      %p233 = pnand %p231, %p232
      %p234 = pneg %p233
      // Predicated region
      $region63: #{net_forward.4} parent=5 // pred_check
        _
      $region64: #{net_forward.4} parent=5 // pred_check_branch
        %236 = sbr.rel (%p233) target = $region66
      $region65: #{net_forward.4} parent=5 // pred_region
        %s237 = ssub.s32 %s9, 1
        %s238 = sand.u32 %s22, 1
        %s239 = sand.u32 %s22, 1
        %s240 = smul.addr %s239, 128
        %s241 = scalar_lea.vmem [#allocation2], %s240
        // Predicated region
        $region67: #{net_forward.4} parent=65 // pred_check
          %p242 = pneg %p35
        $region68: #{net_forward.4} parent=65 // pred_check_branch
          %244 = sbr.rel (%p242) target = $region70
        $region69: #{net_forward.4} parent=65 // pred_region
          _
        $region70: #{net_forward.4} parent=65 // pred_fallthru
          _
        %s245 = sand.u32 %s22, 1
        %s246 = sand.u32 %s22, 1
        %s247 = smul.addr %s246, 128
        %s248 = scalar_lea.vmem [#allocation2], %s247
        %p249 = pneg %p35
        %p250 = pneg %p32
        %p251 = pneg %p56
        %p252 = pneg %p53
        %p253 = pneg %p77
        %p254 = pneg %p74
        %p255 = pneg %p103
        %p256 = pneg %p100
        %s257 = smul.u32 4, %s14
        %p258 = scmp.lt.s32.totalorder %s257, 7
        %s259 = scalar_select %p258, %s257, 7
        %s260 = smul.addr %s259, 4
        %s261 = scalar_lea.vmem %s3, %s260
        %s262 = smul.u32 4, %s14
        %s263 = smul.u32 4, %s14
        %p264 = scmp.lt.s32.totalorder %s263, 7
        %s265 = scalar_select %p264, %s263, 7
        %s266 = smul.addr %s265, 4
        %s267 = scalar_lea.vmem %s3, %s266
        %s268 = smul.u32 4, %s14
        %v270 = vld [vmem:[%s1] sm:$0xf]
        %v271 = vld [vmem:[%s1 + $0x4] sm:$0xf]
        %v272 = vld [vmem:[%s1 + $0x8] sm:$0xf]
        %v273 = vld [vmem:[%s1 + $0xc] sm:$0xf]
        %v274 = vld [vmem:[%s1 + $0x10] sm:$0xf]
        %v275 = vld [vmem:[%s1 + $0x14] sm:$0xf]
        %v276 = vld [vmem:[%s1 + $0x18] sm:$0xf]
        %v277 = vld [vmem:[%s1 + $0x1c] sm:$0xf]
        %v278 = vld [vmem:[%s1 + $0x20] sm:$0xf]
        %v279 = vld [vmem:[%s1 + $0x24] sm:$0xf]
        %v280 = vld [vmem:[%s1 + $0x28] sm:$0xf]
        %v281 = vld [vmem:[%s1 + $0x2c] sm:$0xf]
        %v282 = vld [vmem:[%s1 + $0x30] sm:$0xf]
        %v283 = vld [vmem:[%s1 + $0x34] sm:$0xf]
        %v284 = vld [vmem:[%s1 + $0x38] sm:$0xf]
        %v285 = vld [vmem:[%s1 + $0x3c] sm:$0xf]
        %v286 = vld [vmem:[%s1 + $0x40] sm:$0xf]
        %v287 = vld [vmem:[%s1 + $0x44] sm:$0xf]
        %v288 = vld [vmem:[%s1 + $0x48] sm:$0x7]
        %v289 = vld [vmem:[%s241] sm:$0xff]
        %v290 = vld [vmem:[%s241 + $0x8] sm:$0xff]
        %v291 = vld [vmem:[%s241 + $0x10] sm:$0xff]
        %v292 = vld [vmem:[%s241 + $0x18] sm:$0xff]
        %v297 = vunpack.c.l.b16 %v289
        %v298 = vunpack.c.h.b16 %v289
        %v299 = vunpack.c.l.b16 %v290
        %v300 = vunpack.c.h.b16 %v290
        %v301 = vunpack.c.l.b16 %v291
        %v302 = vunpack.c.h.b16 %v291
        %v303 = vunpack.c.l.b16 %v292
        %v304 = vunpack.c.h.b16 %v292
        %v305 = vpack.c.b16 %v299, %v297
        %v306 = vpack.c.b16 %v300, %v298
        %v307 = vpack.c.b16 %v303, %v301
        %v308 = vpack.c.b16 %v304, %v302
        %v330 = vunpack.c.l.b16 %v270
        %v331 = vunpack.c.l.b16 %v271
        %v332 = vunpack.c.l.b16 %v272
        %v333 = vunpack.c.l.b16 %v273
        %v334 = vunpack.c.l.b16 %v274
        %v335 = vunpack.c.l.b16 %v275
        %v336 = vunpack.c.l.b16 %v276
        %v337 = vunpack.c.l.b16 %v277
        %v338 = vunpack.c.l.b16 %v278
        %v339 = vunpack.c.l.b16 %v279
        %v340 = vunpack.c.l.b16 %v280
        %v341 = vunpack.c.l.b16 %v281
        %v342 = vunpack.c.l.b16 %v282
        %v343 = vunpack.c.l.b16 %v283
        %v344 = vunpack.c.l.b16 %v284
        %v345 = vunpack.c.l.b16 %v285
        %v346 = vunpack.c.l.b16 %v286
        %v347 = vunpack.c.l.b16 %v287
        %v348 = vunpack.c.l.b16 %v288
        %v349 = vpack.c.b16 %v331, %v330
        %v350 = vpack.c.b16 %v333, %v332
        %v351 = vpack.c.b16 %v335, %v334
        %v352 = vpack.c.b16 %v337, %v336
        %v353 = vpack.c.b16 %v339, %v338
        %v354 = vpack.c.b16 %v341, %v340
        %v355 = vpack.c.b16 %v343, %v342
        %v356 = vpack.c.b16 %v345, %v344
        %v357 = vpack.c.b16 %v347, %v346
        %v358 = vpack.c.b16 %v348, %v348
        %vm368 = vcmask 179200
        %v370 = vsel %vm368, %v306, 0
        %v373 = vsel %vm368, %v308, 0
        %vm375 = vcmask 1042432
        %v377 = vsel %vm375, %v358, 0
        %379 = vmatprep.subr.bf16.mxu0 0
        %380 = vmatpush1.bf16.msra.mxu0 %v349
        %381 = vmatprep.subr.bf16.mxu0 0
        %382 = vmatpush1.bf16.msra.mxu0 %v350
        %383 = vmatprep.subr.bf16.mxu0 0
        %384 = vmatpush1.bf16.msra.mxu0 %v351
        %385 = vmatprep.subr.bf16.mxu0 0
        %386 = vmatpush1.bf16.msra.mxu0 %v352
        %387 = vmatprep.subr.bf16.mxu0 0
        %388 = vmatpush1.bf16.msra.mxu0 %v353
        %389 = vmatprep.subr.bf16.mxu0 0
        %390 = vmatpush1.bf16.msra.mxu0 %v354
        %391 = vmatprep.subr.bf16.mxu0 0
        %392 = vmatpush1.bf16.msra.mxu0 %v355
        %393 = vmatprep.subr.bf16.mxu0 0
        %394 = vmatpush1.bf16.msra.mxu0 %v356
        %395 = vmatprep.subr.bf16.mxu0 0
        %396 = vmatpush1.bf16.msra.mxu0 %v357
        %397 = vmatprep.subr.bf16.mxu0 0
        %398 = vmatpush1.bf16.msra.mxu0 %v377
        %399 = vmatprep.subr.bf16.mxu0 0
        %400 = vmatpush1.bf16.msra.mxu0 0
        %401 = vmatprep.subr.bf16.mxu0 0
        %402 = vmatpush1.bf16.msra.mxu0 0
        %403 = vmatprep.subr.bf16.mxu0 0
        %404 = vmatpush1.bf16.msra.mxu0 0
        %405 = vmatprep.subr.bf16.mxu0 0
        %406 = vmatpush1.bf16.msra.mxu0 0
        %407 = vmatprep.subr.bf16.mxu0 0
        %408 = vmatpush1.bf16.msra.mxu0 0
        %409 = vmatprep.subr.bf16.mxu0 0
        %410 = vmatpush1.bf16.msra.mxu0 0
        %411 = vmatprep.mubr.bf16.mxu0 %v370
        %412 = vmatmul.mubr.bf16.gmra.mrb[0].mxu0 %v305
        %v413 = vpop.f32.mrb[0].mxu0
        %v414 = vadd.f32 0.0, %v413
        %v415 = vpop.f32.mrb[0].mxu0
        %v416 = vpop.f32.mrb[0].mxu0
        %v417 = vadd.f32 0.0, %v416
        %v418 = vpop.f32.mrb[0].mxu0
        %419 = vmatprep.mubr.bf16.mxu0 %v373
        %420 = vmatmul.mubr.bf16.gmra.mrb[0].mxu0 %v307
        %v421 = vpop.f32.mrb[0].mxu0
        %v422 = vadd.f32 0.0, %v421
        %v423 = vpop.f32.mrb[0].mxu0
        %v424 = vpop.f32.mrb[0].mxu0
        %v425 = vadd.f32 0.0, %v424
        %v426 = vpop.f32.mrb[0].mxu0
        %427 = vdwg.mxu0
        %s428 = scalar_lea.vmem %s241, 32 [#allocation2]
        %v429 = vld [vmem:[%s428] sm:$0xff]
        %v430 = vld [vmem:[%s428 + $0x8] sm:$0xff]
        %v431 = vld [vmem:[%s428 + $0x10] sm:$0xff]
        %v432 = vld [vmem:[%s428 + $0x18] sm:$0xff]
        %v437 = vunpack.c.l.b16 %v429
        %v438 = vunpack.c.h.b16 %v429
        %v439 = vunpack.c.l.b16 %v430
        %v440 = vunpack.c.h.b16 %v430
        %v441 = vunpack.c.l.b16 %v431
        %v442 = vunpack.c.h.b16 %v431
        %v443 = vunpack.c.l.b16 %v432
        %v444 = vunpack.c.h.b16 %v432
        %v445 = vpack.c.b16 %v439, %v437
        %v446 = vpack.c.b16 %v440, %v438
        %v447 = vpack.c.b16 %v443, %v441
        %v448 = vpack.c.b16 %v444, %v442
        %v452 = vsel %vm368, %v446, 0
        %v455 = vsel %vm368, %v448, 0
        %457 = vmatprep.subr.bf16.mxu0 0
        %458 = vmatpush1.bf16.msra.mxu0 %v349
        %459 = vmatprep.subr.bf16.mxu0 0
        %460 = vmatpush1.bf16.msra.mxu0 %v350
        %461 = vmatprep.subr.bf16.mxu0 0
        %462 = vmatpush1.bf16.msra.mxu0 %v351
        %463 = vmatprep.subr.bf16.mxu0 0
        %464 = vmatpush1.bf16.msra.mxu0 %v352
        %465 = vmatprep.subr.bf16.mxu0 0
        %466 = vmatpush1.bf16.msra.mxu0 %v353
        %467 = vmatprep.subr.bf16.mxu0 0
        %468 = vmatpush1.bf16.msra.mxu0 %v354
        %469 = vmatprep.subr.bf16.mxu0 0
        %470 = vmatpush1.bf16.msra.mxu0 %v355
        %471 = vmatprep.subr.bf16.mxu0 0
        %472 = vmatpush1.bf16.msra.mxu0 %v356
        %473 = vmatprep.subr.bf16.mxu0 0
        %474 = vmatpush1.bf16.msra.mxu0 %v357
        %475 = vmatprep.subr.bf16.mxu0 0
        %476 = vmatpush1.bf16.msra.mxu0 %v377
        %477 = vmatprep.subr.bf16.mxu0 0
        %478 = vmatpush1.bf16.msra.mxu0 0
        %479 = vmatprep.subr.bf16.mxu0 0
        %480 = vmatpush1.bf16.msra.mxu0 0
        %481 = vmatprep.subr.bf16.mxu0 0
        %482 = vmatpush1.bf16.msra.mxu0 0
        %483 = vmatprep.subr.bf16.mxu0 0
        %484 = vmatpush1.bf16.msra.mxu0 0
        %485 = vmatprep.subr.bf16.mxu0 0
        %486 = vmatpush1.bf16.msra.mxu0 0
        %487 = vmatprep.subr.bf16.mxu0 0
        %488 = vmatpush1.bf16.msra.mxu0 0
        %489 = vmatprep.mubr.bf16.mxu0 %v452
        %490 = vmatmul.mubr.bf16.gmra.mrb[0].mxu0 %v445
        %v491 = vpop.f32.mrb[0].mxu0
        %v492 = vadd.f32 0.0, %v491
        %v493 = vpop.f32.mrb[0].mxu0
        %v494 = vpop.f32.mrb[0].mxu0
        %v495 = vadd.f32 0.0, %v494
        %v496 = vpop.f32.mrb[0].mxu0
        %497 = vmatprep.mubr.bf16.mxu0 %v455
        %498 = vmatmul.mubr.bf16.gmra.mrb[0].mxu0 %v447
        %v499 = vpop.f32.mrb[0].mxu0
        %v500 = vadd.f32 0.0, %v499
        %v501 = vpop.f32.mrb[0].mxu0
        %v502 = vpop.f32.mrb[0].mxu0
        %v503 = vadd.f32 0.0, %v502
        %v504 = vpop.f32.mrb[0].mxu0
        %505 = vdwg.mxu0
        %s506 = scalar_lea.vmem %s241, 64 [#allocation2]
        %v507 = vld [vmem:[%s506] sm:$0xff]
        %v508 = vld [vmem:[%s506 + $0x8] sm:$0xff]
        %v509 = vld [vmem:[%s506 + $0x10] sm:$0xff]
        %v510 = vld [vmem:[%s506 + $0x18] sm:$0xff]
        %v515 = vunpack.c.l.b16 %v507
        %v516 = vunpack.c.h.b16 %v507
        %v517 = vunpack.c.l.b16 %v508
        %v518 = vunpack.c.h.b16 %v508
        %v519 = vunpack.c.l.b16 %v509
        %v520 = vunpack.c.h.b16 %v509
        %v521 = vunpack.c.l.b16 %v510
        %v522 = vunpack.c.h.b16 %v510
        %v523 = vpack.c.b16 %v517, %v515
        %v524 = vpack.c.b16 %v518, %v516
        %v525 = vpack.c.b16 %v521, %v519
        %v526 = vpack.c.b16 %v522, %v520
        %v530 = vsel %vm368, %v524, 0
        %v533 = vsel %vm368, %v526, 0
        %535 = vmatprep.subr.bf16.mxu0 0
        %536 = vmatpush1.bf16.msra.mxu0 %v349
        %537 = vmatprep.subr.bf16.mxu0 0
        %538 = vmatpush1.bf16.msra.mxu0 %v350
        %539 = vmatprep.subr.bf16.mxu0 0
        %540 = vmatpush1.bf16.msra.mxu0 %v351
        %541 = vmatprep.subr.bf16.mxu0 0
        %542 = vmatpush1.bf16.msra.mxu0 %v352
        %543 = vmatprep.subr.bf16.mxu0 0
        %544 = vmatpush1.bf16.msra.mxu0 %v353
        %545 = vmatprep.subr.bf16.mxu0 0
        %546 = vmatpush1.bf16.msra.mxu0 %v354
        %547 = vmatprep.subr.bf16.mxu0 0
        %548 = vmatpush1.bf16.msra.mxu0 %v355
        %549 = vmatprep.subr.bf16.mxu0 0
        %550 = vmatpush1.bf16.msra.mxu0 %v356
        %551 = vmatprep.subr.bf16.mxu0 0
        %552 = vmatpush1.bf16.msra.mxu0 %v357
        %553 = vmatprep.subr.bf16.mxu0 0
        %554 = vmatpush1.bf16.msra.mxu0 %v377
        %555 = vmatprep.subr.bf16.mxu0 0
        %556 = vmatpush1.bf16.msra.mxu0 0
        %557 = vmatprep.subr.bf16.mxu0 0
        %558 = vmatpush1.bf16.msra.mxu0 0
        %559 = vmatprep.subr.bf16.mxu0 0
        %560 = vmatpush1.bf16.msra.mxu0 0
        %561 = vmatprep.subr.bf16.mxu0 0
        %562 = vmatpush1.bf16.msra.mxu0 0
        %563 = vmatprep.subr.bf16.mxu0 0
        %564 = vmatpush1.bf16.msra.mxu0 0
        %565 = vmatprep.subr.bf16.mxu0 0
        %566 = vmatpush1.bf16.msra.mxu0 0
        %567 = vmatprep.mubr.bf16.mxu0 %v530
        %568 = vmatmul.mubr.bf16.gmra.mrb[0].mxu0 %v523
        %v569 = vpop.f32.mrb[0].mxu0
        %v570 = vadd.f32 0.0, %v569
        %v571 = vpop.f32.mrb[0].mxu0
        %v572 = vpop.f32.mrb[0].mxu0
        %v573 = vadd.f32 0.0, %v572
        %v574 = vpop.f32.mrb[0].mxu0
        %575 = vmatprep.mubr.bf16.mxu0 %v533
        %576 = vmatmul.mubr.bf16.gmra.mrb[0].mxu0 %v525
        %v577 = vpop.f32.mrb[0].mxu0
        %v578 = vadd.f32 0.0, %v577
        %v579 = vpop.f32.mrb[0].mxu0
        %v580 = vpop.f32.mrb[0].mxu0
        %v581 = vadd.f32 0.0, %v580
        %v582 = vpop.f32.mrb[0].mxu0
        %583 = vdwg.mxu0
        %s584 = scalar_lea.vmem %s241, 96 [#allocation2]
        %v585 = vld [vmem:[%s584] sm:$0xff]
        %v586 = vld [vmem:[%s584 + $0x8] sm:$0xff]
        %v587 = vld [vmem:[%s584 + $0x10] sm:$0xff]
        %v588 = vld [vmem:[%s584 + $0x18] sm:$0xff]
        %v593 = vunpack.c.l.b16 %v585
        %v594 = vunpack.c.h.b16 %v585
        %v595 = vunpack.c.l.b16 %v586
        %v596 = vunpack.c.h.b16 %v586
        %v597 = vunpack.c.l.b16 %v587
        %v598 = vunpack.c.h.b16 %v587
        %v599 = vunpack.c.l.b16 %v588
        %v600 = vunpack.c.h.b16 %v588
        %v601 = vpack.c.b16 %v595, %v593
        %v602 = vpack.c.b16 %v596, %v594
        %v603 = vpack.c.b16 %v599, %v597
        %v604 = vpack.c.b16 %v600, %v598
        %v608 = vsel %vm368, %v602, 0
        %v611 = vsel %vm368, %v604, 0
        %613 = vmatprep.subr.bf16.mxu0 0
        %614 = vmatpush1.bf16.msra.mxu0 %v349
        %615 = vmatprep.subr.bf16.mxu0 0
        %616 = vmatpush1.bf16.msra.mxu0 %v350
        %617 = vmatprep.subr.bf16.mxu0 0
        %618 = vmatpush1.bf16.msra.mxu0 %v351
        %619 = vmatprep.subr.bf16.mxu0 0
        %620 = vmatpush1.bf16.msra.mxu0 %v352
        %621 = vmatprep.subr.bf16.mxu0 0
        %622 = vmatpush1.bf16.msra.mxu0 %v353
        %623 = vmatprep.subr.bf16.mxu0 0
        %624 = vmatpush1.bf16.msra.mxu0 %v354
        %625 = vmatprep.subr.bf16.mxu0 0
        %626 = vmatpush1.bf16.msra.mxu0 %v355
        %627 = vmatprep.subr.bf16.mxu0 0
        %628 = vmatpush1.bf16.msra.mxu0 %v356
        %629 = vmatprep.subr.bf16.mxu0 0
        %630 = vmatpush1.bf16.msra.mxu0 %v357
        %631 = vmatprep.subr.bf16.mxu0 0
        %632 = vmatpush1.bf16.msra.mxu0 %v377
        %633 = vmatprep.subr.bf16.mxu0 0
        %634 = vmatpush1.bf16.msra.mxu0 0
        %635 = vmatprep.subr.bf16.mxu0 0
        %636 = vmatpush1.bf16.msra.mxu0 0
        %637 = vmatprep.subr.bf16.mxu0 0
        %638 = vmatpush1.bf16.msra.mxu0 0
        %639 = vmatprep.subr.bf16.mxu0 0
        %640 = vmatpush1.bf16.msra.mxu0 0
        %641 = vmatprep.subr.bf16.mxu0 0
        %642 = vmatpush1.bf16.msra.mxu0 0
        %643 = vmatprep.subr.bf16.mxu0 0
        %644 = vmatpush1.bf16.msra.mxu0 0
        %645 = vmatprep.mubr.bf16.mxu0 %v608
        %646 = vmatmul.mubr.bf16.gmra.mrb[0].mxu0 %v601
        %v647 = vpop.f32.mrb[0].mxu0
        %v648 = vadd.f32 0.0, %v647
        %v649 = vpop.f32.mrb[0].mxu0
        %v650 = vpop.f32.mrb[0].mxu0
        %v651 = vadd.f32 0.0, %v650
        %v652 = vpop.f32.mrb[0].mxu0
        %653 = vmatprep.mubr.bf16.mxu0 %v611
        %654 = vmatmul.mubr.bf16.gmra.mrb[0].mxu0 %v603
        %v655 = vpop.f32.mrb[0].mxu0
        %v656 = vadd.f32 0.0, %v655
        %v657 = vpop.f32.mrb[0].mxu0
        %v658 = vpop.f32.mrb[0].mxu0
        %v659 = vadd.f32 0.0, %v658
        %v660 = vpop.f32.mrb[0].mxu0
        %661 = vdwg.mxu0
        %v662 = vmax.f32 %v414, %v492
        %v663 = vmax.f32 %v417, %v495
        %v664 = vmax.f32 %v422, %v500
        %v665 = vmax.f32 %v425, %v503
        %v666 = vmax.f32 %v570, %v648
        %v667 = vmax.f32 %v573, %v651
        %v668 = vmax.f32 %v578, %v656
        %v669 = vmax.f32 %v581, %v659
        %v670 = vmax.f32 %v662, %v666
        %v671 = vmax.f32 %v663, %v667
        %v672 = vmax.f32 %v664, %v668
        %v673 = vmax.f32 %v665, %v669
        %v674 = vld [vmem:[%s2] sm:$0x1]
        %v676 = vlaneseq
        %v677 = vshrl.u32 %v676, 7
        %v678 = vsub.s32 0, %v677
        %v679 = vrot.slane %v674, %v678
        %v681 = vadd.f32 %v670, %v679
        %v682 = vadd.f32 %v671, %v679
        %v683 = vadd.f32 %v672, %v679
        %v684 = vadd.f32 %v673, %v679
        %v685 = vmax.f32 %v681, 0.0
        %v686 = vmax.f32 %v682, 0.0
        %v687 = vmax.f32 %v683, 0.0
        %v688 = vmax.f32 %v684, 0.0
        %v689 = vpack.c.bf16 %v686, %v685
        %v690 = vpack.c.bf16 %v688, %v687
        %v693 = vunpack.c.l.b16 %v689
        %v694 = vunpack.c.h.b16 %v689
        %v695 = vunpack.c.l.b16 %v690
        %v696 = vunpack.c.h.b16 %v690
        %v697 = vpack.c.b16 %v693, %v693
        %v698 = vpack.c.b16 %v694, %v694
        %v699 = vpack.c.b16 %v695, %v695
        %v700 = vpack.c.b16 %v696, %v696
        %705 = vst [vmem:[%s267] sm:$0xf] %v697
        %706 = vst [vmem:[%s267 + $0x4] sm:$0xf] %v698
        %707 = vst [vmem:[%s267 + $0x8] sm:$0xf] %v699
        %708 = vst [vmem:[%s267 + $0xc] sm:$0xf] %v700
        %s709 = smul.u32 4, %s14
        %p710 = scmp.lt.s32.totalorder %s709, 7
        %s711 = scalar_select %p710, %s709, 7
        %s712 = smul.addr %s711, 4
        %s713 = scalar_lea.vmem %s3, %s712
        // Predicated region
        $region71: #{net_forward.4} parent=65 // pred_check
          %p714 = pneg %p100
        $region72: #{net_forward.4} parent=65 // pred_check_branch
          %716 = sbr.rel (%p714) target = $region74
        $region73: #{net_forward.4} parent=65 // pred_region
          %s717 = smul.u32 4, %s14
        $region74: #{net_forward.4} parent=65 // pred_fallthru
          _
      $region66: #{net_forward.4} parent=5 // pred_fallthru
        _
      %p718 = scmp.le.s32.totalorder 2, %s9
      // Predicated region
      $region75: #{net_forward.4} parent=5 // pred_check
        %p719 = pneg %p718
      $region76: #{net_forward.4} parent=5 // pred_check_branch
        %721 = sbr.rel (%p719) target = $region78
      $region77: #{net_forward.4} parent=5 // pred_region
        %s722 = ssub.s32 %s9, 2
        // Predicated region
        $region79: #{net_forward.4} parent=77 // pred_check
          %p723 = pneg %p106
        $region80: #{net_forward.4} parent=77 // pred_check_branch
          %725 = sbr.rel (%p723) target = $region82
        $region81: #{net_forward.4} parent=77 // pred_region
          %s726 = smul.u32 4, %s15
          %p727 = scmp.lt.s32.totalorder %s726, 7
          %s728 = scalar_select %p727, %s726, 7
          %s729 = smul.addr %s728, 4
          %s730 = scalar_lea.vmem %s3, %s729
        $region82: #{net_forward.4} parent=77 // pred_fallthru
          _
      $region78: #{net_forward.4} parent=5 // pred_fallthru
        _
    $region6: #{net_forward.4} parent=1 // loop_footer
      %s13 = sadd.s32 1, %s9
    $region7: #{net_forward.4} parent=1 // loop_footer_branch
      %8 = sbr.rel target = $region3
    $region8: #{net_forward.4} parent=1 // loop_exit
      _

// kernel: net_forward.5
$region0: #{net_forward.5}
  #allocation0 [shape = 'u32[]', space=smem, size = 0x4, offset = 0x4, fixed_abs, tag = 'smem constant byte address 0x4 - core index']
  #allocation1 [shape = 'u32[144,128]{1,0:T(1,128)}', space=vmem, size = 0x12000, scoped, tag = 'internal scratch']
  %s0 = inlined_call_operand.vmem [shape: bf16[16,400], index: 0, kind: input, shape index: {}]
  %s1 = inlined_call_operand.vmem [shape: bf16[400,128], index: 1, kind: input, shape index: {}]
  %s2 = inlined_call_operand.vmem [shape: f32[1,128], index: 2, kind: input, shape index: {}]
  %s3 = inlined_call_operand.vmem [shape: bf16[128,128], index: 3, kind: input, shape index: {}]
  %s4 = inlined_call_operand.vmem [shape: f32[1,128], index: 4, kind: input, shape index: {}]
  %s5 = inlined_call_operand.vmem [shape: bf16[128,128], index: 5, kind: input, shape index: {}]
  %s6 = inlined_call_operand.vmem [shape: f32[1,128], index: 6, kind: input, shape index: {}]
  %s7 = inlined_call_operand.vmem [shape: f32[16,128], index: 7, kind: output, shape index: {}]
  %s8 = sld [smem:[#allocation0]]
  $region61: #{net_forward.5} parent=0
    _
  %s10 = ssub.s32 1, %s8
  %s11 = scalar_select 0, %s10, %s8
  loop: start=0, step=1, limit=4
  $region2: #{net_forward.5} parent=0 // loop_pre_header
    _
  $region3: #{net_forward.5} parent=0 // loop_header
    %s13 = sphi 0, %s17
    %p14 = scmp.ge.s32.totalorder %s13, 4
    %s23 = sphi 0, %s25
    %s26 = sphi 0, %s23
    %s27 = sphi 0, %s26
    %s43 = sphi 0, %s27
    %s47 = sphi 0, %s47
    %s49 = sphi 0, %s47
    %s50 = sphi 0, %s49
    %s64 = sphi 0, %s50
    %s68 = sphi 0, %s68
    %s70 = sphi 0, %s68
    %s71 = sphi 0, %s70
    %s85 = sphi 0, %s71
    %s89 = sphi 0, %s89
    %s91 = sphi 0, %s89
    %s92 = sphi 0, %s91
    %s106 = sphi 0, %s92
    %s110 = sphi 0, %s110
    %s112 = sphi 0, %s110
    %s113 = sphi 0, %s112
    %s127 = sphi 0, %s113
    %s131 = sphi 0, %s131
    %s133 = sphi 0, %s131
    %s134 = sphi 0, %s133
    %s148 = sphi 0, %s134
    %s152 = sphi 0, %s152
    %s154 = sphi 0, %s152
    %s155 = sphi 0, %s154
    %s169 = sphi 0, %s155
    %s175 = sphi 0, %s177
    %s178 = sphi 0, %s175
    %s179 = sphi 0, %s178
    %s195 = sphi 0, %s179
  $region4: #{net_forward.5} parent=0 // loop_header_branch
    %16 = sbr.rel (%p14) target = $region8
  $region5: #{net_forward.5} parent=0 // loop_body
    %s18 = ssub.s32 %s13, 1
    %s19 = ssub.s32 %s13, 2
    %s20 = sadd.s32 %s13, 1
    %s21 = ssub.s32 %s13, %s20
    %p22 = scmp.eq.s32.totalorder %s21, 0
    %s24 = sadd.s32 %s23, 1
    %s25 = scalar_select %p22, %s23, %s24
    %p28 = pneg %p22
    %p29 = scmp.eq.s32.totalorder %s13, 1
    %p30 = por %p28, %p29
    %p31 = scmp.ne.s32.totalorder %s23, %s26
    %p32 = scmp.eq.s32.totalorder %s13, 0
    %p33 = por %p31, %p32
    %p34 = scmp.ne.s32.totalorder %s23, %s26
    %p35 = scmp.eq.s32.totalorder %s18, 1
    %p36 = por %p34, %p35
    %p37 = scmp.ne.s32.totalorder %s26, %s27
    %p38 = scmp.eq.s32.totalorder %s18, 0
    %p39 = por %p37, %p38
    %p40 = scmp.ne.s32.totalorder %s26, %s27
    %p41 = scmp.eq.s32.totalorder %s19, 1
    %p42 = por %p40, %p41
    %p44 = scmp.ne.s32.totalorder %s27, %s43
    %p45 = scmp.eq.s32.totalorder %s19, 0
    %p46 = por %p44, %p45
    %s48 = sadd.s32 %s47, 1
    %p51 = scmp.eq.s32.totalorder %s13, 1
    %p52 = scmp.ne.s32.totalorder %s47, %s49
    %p53 = scmp.eq.s32.totalorder %s13, 0
    %p54 = por %p52, %p53
    %p55 = scmp.ne.s32.totalorder %s47, %s49
    %p56 = scmp.eq.s32.totalorder %s18, 1
    %p57 = por %p55, %p56
    %p58 = scmp.ne.s32.totalorder %s49, %s50
    %p59 = scmp.eq.s32.totalorder %s18, 0
    %p60 = por %p58, %p59
    %p61 = scmp.ne.s32.totalorder %s49, %s50
    %p62 = scmp.eq.s32.totalorder %s19, 1
    %p63 = por %p61, %p62
    %p65 = scmp.ne.s32.totalorder %s50, %s64
    %p66 = scmp.eq.s32.totalorder %s19, 0
    %p67 = por %p65, %p66
    %s69 = sadd.s32 %s68, 1
    %p72 = scmp.eq.s32.totalorder %s13, 1
    %p73 = scmp.ne.s32.totalorder %s68, %s70
    %p74 = scmp.eq.s32.totalorder %s13, 0
    %p75 = por %p73, %p74
    %p76 = scmp.ne.s32.totalorder %s68, %s70
    %p77 = scmp.eq.s32.totalorder %s18, 1
    %p78 = por %p76, %p77
    %p79 = scmp.ne.s32.totalorder %s70, %s71
    %p80 = scmp.eq.s32.totalorder %s18, 0
    %p81 = por %p79, %p80
    %p82 = scmp.ne.s32.totalorder %s70, %s71
    %p83 = scmp.eq.s32.totalorder %s19, 1
    %p84 = por %p82, %p83
    %p86 = scmp.ne.s32.totalorder %s71, %s85
    %p87 = scmp.eq.s32.totalorder %s19, 0
    %p88 = por %p86, %p87
    %s90 = sadd.s32 %s89, 1
    %p93 = scmp.eq.s32.totalorder %s13, 1
    %p94 = scmp.ne.s32.totalorder %s89, %s91
    %p95 = scmp.eq.s32.totalorder %s13, 0
    %p96 = por %p94, %p95
    %p97 = scmp.ne.s32.totalorder %s89, %s91
    %p98 = scmp.eq.s32.totalorder %s18, 1
    %p99 = por %p97, %p98
    %p100 = scmp.ne.s32.totalorder %s91, %s92
    %p101 = scmp.eq.s32.totalorder %s18, 0
    %p102 = por %p100, %p101
    %p103 = scmp.ne.s32.totalorder %s91, %s92
    %p104 = scmp.eq.s32.totalorder %s19, 1
    %p105 = por %p103, %p104
    %p107 = scmp.ne.s32.totalorder %s92, %s106
    %p108 = scmp.eq.s32.totalorder %s19, 0
    %p109 = por %p107, %p108
    %s111 = sadd.s32 %s110, 1
    %p114 = scmp.eq.s32.totalorder %s13, 1
    %p115 = scmp.ne.s32.totalorder %s110, %s112
    %p116 = scmp.eq.s32.totalorder %s13, 0
    %p117 = por %p115, %p116
    %p118 = scmp.ne.s32.totalorder %s110, %s112
    %p119 = scmp.eq.s32.totalorder %s18, 1
    %p120 = por %p118, %p119
    %p121 = scmp.ne.s32.totalorder %s112, %s113
    %p122 = scmp.eq.s32.totalorder %s18, 0
    %p123 = por %p121, %p122
    %p124 = scmp.ne.s32.totalorder %s112, %s113
    %p125 = scmp.eq.s32.totalorder %s19, 1
    %p126 = por %p124, %p125
    %p128 = scmp.ne.s32.totalorder %s113, %s127
    %p129 = scmp.eq.s32.totalorder %s19, 0
    %p130 = por %p128, %p129
    %s132 = sadd.s32 %s131, 1
    %p135 = scmp.eq.s32.totalorder %s13, 1
    %p136 = scmp.ne.s32.totalorder %s131, %s133
    %p137 = scmp.eq.s32.totalorder %s13, 0
    %p138 = por %p136, %p137
    %p139 = scmp.ne.s32.totalorder %s131, %s133
    %p140 = scmp.eq.s32.totalorder %s18, 1
    %p141 = por %p139, %p140
    %p142 = scmp.ne.s32.totalorder %s133, %s134
    %p143 = scmp.eq.s32.totalorder %s18, 0
    %p144 = por %p142, %p143
    %p145 = scmp.ne.s32.totalorder %s133, %s134
    %p146 = scmp.eq.s32.totalorder %s19, 1
    %p147 = por %p145, %p146
    %p149 = scmp.ne.s32.totalorder %s134, %s148
    %p150 = scmp.eq.s32.totalorder %s19, 0
    %p151 = por %p149, %p150
    %s153 = sadd.s32 %s152, 1
    %p156 = scmp.eq.s32.totalorder %s13, 1
    %p157 = scmp.ne.s32.totalorder %s152, %s154
    %p158 = scmp.eq.s32.totalorder %s13, 0
    %p159 = por %p157, %p158
    %p160 = scmp.ne.s32.totalorder %s152, %s154
    %p161 = scmp.eq.s32.totalorder %s18, 1
    %p162 = por %p160, %p161
    %p163 = scmp.ne.s32.totalorder %s154, %s155
    %p164 = scmp.eq.s32.totalorder %s18, 0
    %p165 = por %p163, %p164
    %p166 = scmp.ne.s32.totalorder %s154, %s155
    %p167 = scmp.eq.s32.totalorder %s19, 1
    %p168 = por %p166, %p167
    %p170 = scmp.ne.s32.totalorder %s155, %s169
    %p171 = scmp.eq.s32.totalorder %s19, 0
    %p172 = por %p170, %p171
    %s173 = ssub.s32 %s13, %s20
    %p174 = scmp.eq.s32.totalorder %s173, 0
    %s176 = sadd.s32 %s175, 1
    %s177 = scalar_select %p174, %s175, %s176
    %p180 = pneg %p174
    %p181 = scmp.eq.s32.totalorder %s13, 1
    %p182 = por %p180, %p181
    %p183 = scmp.ne.s32.totalorder %s175, %s178
    %p184 = scmp.eq.s32.totalorder %s13, 0
    %p185 = por %p183, %p184
    %p186 = scmp.ne.s32.totalorder %s175, %s178
    %p187 = scmp.eq.s32.totalorder %s18, 1
    %p188 = por %p186, %p187
    %p189 = scmp.ne.s32.totalorder %s178, %s179
    %p190 = scmp.eq.s32.totalorder %s18, 0
    %p191 = por %p189, %p190
    %p192 = scmp.ne.s32.totalorder %s178, %s179
    %p193 = scmp.eq.s32.totalorder %s19, 1
    %p194 = por %p192, %p193
    %p196 = scmp.ne.s32.totalorder %s179, %s195
    %p197 = scmp.eq.s32.totalorder %s19, 0
    %p198 = por %p196, %p197
    %p199 = scmp.le.s32.totalorder 1, %s13
    %p200 = scmp.lt.s32.totalorder %s13, 3
    %p201 = pnand %p199, %p200
    %p202 = pneg %p201
    // Predicated region
    $region9: #{net_forward.5} parent=5 // pred_check
      _
    $region10: #{net_forward.5} parent=5 // pred_check_branch
      %204 = sbr.rel (%p201) target = $region12
    $region11: #{net_forward.5} parent=5 // pred_region
      %s205 = ssub.s32 %s13, 1
      // Predicated region
      $region13: #{net_forward.5} parent=11 // pred_check
        %p206 = pneg %p60
      $region14: #{net_forward.5} parent=11 // pred_check_branch
        %208 = sbr.rel (%p206) target = $region16
      $region15: #{net_forward.5} parent=11 // pred_region
        _
      $region16: #{net_forward.5} parent=11 // pred_fallthru
        _
      // Predicated region
      $region17: #{net_forward.5} parent=11 // pred_check
        %p209 = pneg %p81
      $region18: #{net_forward.5} parent=11 // pred_check_branch
        %211 = sbr.rel (%p209) target = $region20
      $region19: #{net_forward.5} parent=11 // pred_region
        _
      $region20: #{net_forward.5} parent=11 // pred_fallthru
        _
      // Predicated region
      $region21: #{net_forward.5} parent=11 // pred_check
        %p212 = pneg %p102
      $region22: #{net_forward.5} parent=11 // pred_check_branch
        %214 = sbr.rel (%p212) target = $region24
      $region23: #{net_forward.5} parent=11 // pred_region
        _
      $region24: #{net_forward.5} parent=11 // pred_fallthru
        _
      // Predicated region
      $region25: #{net_forward.5} parent=11 // pred_check
        %p215 = pneg %p123
      $region26: #{net_forward.5} parent=11 // pred_check_branch
        %217 = sbr.rel (%p215) target = $region28
      $region27: #{net_forward.5} parent=11 // pred_region
        _
      $region28: #{net_forward.5} parent=11 // pred_fallthru
        _
      // Predicated region
      $region29: #{net_forward.5} parent=11 // pred_check
        %p218 = pneg %p144
      $region30: #{net_forward.5} parent=11 // pred_check_branch
        %220 = sbr.rel (%p218) target = $region32
      $region31: #{net_forward.5} parent=11 // pred_region
        _
      $region32: #{net_forward.5} parent=11 // pred_fallthru
        _
      // Predicated region
      $region33: #{net_forward.5} parent=11 // pred_check
        %p221 = pneg %p165
      $region34: #{net_forward.5} parent=11 // pred_check_branch
        %223 = sbr.rel (%p221) target = $region36
      $region35: #{net_forward.5} parent=11 // pred_region
        _
      $region36: #{net_forward.5} parent=11 // pred_fallthru
        _
    $region12: #{net_forward.5} parent=5 // pred_fallthru
      _
    %p224 = scmp.lt.s32.totalorder %s13, 2
    // Predicated region
    $region37: #{net_forward.5} parent=5 // pred_check
      %p225 = pneg %p224
    $region38: #{net_forward.5} parent=5 // pred_check_branch
      %227 = sbr.rel (%p225) target = $region40
    $region39: #{net_forward.5} parent=5 // pred_region
      // Predicated region
      $region41: #{net_forward.5} parent=39 // pred_check
        %p228 = pneg %p33
      $region42: #{net_forward.5} parent=39 // pred_check_branch
        %230 = sbr.rel (%p228) target = $region44
      $region43: #{net_forward.5} parent=39 // pred_region
        %p231 = scmp.lt.s32.totalorder %s13, 1
        %s232 = scalar_select %p231, %s13, 1
        %s233 = smul.addr %s232, 4
        %s234 = smul.addr %s233, 4
        %s235 = scalar_lea.vmem %s0, %s234
      $region44: #{net_forward.5} parent=39 // pred_fallthru
        _
    $region40: #{net_forward.5} parent=5 // pred_fallthru
      _
    %p236 = scmp.le.s32.totalorder 1, %s13
    %p237 = scmp.lt.s32.totalorder %s13, 3
    %p238 = pnand %p236, %p237
    %p239 = pneg %p238
    // Predicated region
    $region45: #{net_forward.5} parent=5 // pred_check
      _
    $region46: #{net_forward.5} parent=5 // pred_check_branch
      %241 = sbr.rel (%p238) target = $region48
    $region47: #{net_forward.5} parent=5 // pred_region
      %s242 = ssub.s32 %s13, 1
      %p243 = scmp.lt.s32.totalorder %s18, 1
      %s244 = scalar_select %p243, %s18, 1
      %s245 = smul.addr %s244, 4
      %s246 = smul.addr %s245, 4
      %s247 = scalar_lea.vmem %s0, %s246
      %p248 = pneg %p39
      %p249 = pneg %p36
      %p250 = pneg %p60
      %p251 = pneg %p57
      %p252 = pneg %p81
      %p253 = pneg %p78
      %p254 = pneg %p102
      %p255 = pneg %p99
      %p256 = pneg %p123
      %p257 = pneg %p120
      %p258 = pneg %p144
      %p259 = pneg %p141
      %p260 = pneg %p165
      %p261 = pneg %p162
      %p262 = pneg %p191
      %p263 = pneg %p188
      %p264 = scmp.lt.s32.totalorder %s18, 1
      %s265 = scalar_select %p264, %s18, 1
      %s266 = smul.addr %s265, 8
      %s267 = scalar_lea.vmem %s7, %s266
      %p268 = scmp.lt.s32.totalorder %s18, 1
      %s269 = scalar_select %p268, %s18, 1
      %s270 = smul.addr %s269, 4
      %s271 = smul.addr %s270, 4
      %s272 = scalar_lea.vmem %s0, %s271
      %p273 = scmp.lt.s32.totalorder %s18, 1
      %s274 = scalar_select %p273, %s18, 1
      %s275 = smul.addr %s274, 8
      %s276 = scalar_lea.vmem %s7, %s275
      %v278 = vld [vmem:[%s272] sm:$0xff]
      %v279 = vld [vmem:[%s272 + $0x8] sm:$0xff]
      %v280 = vld [vmem:[%s1] sm:$0xf]
      %v281 = vld [vmem:[%s1 + $0x4] sm:$0xf]
      %v282 = vld [vmem:[%s1 + $0x8] sm:$0xf]
      %v283 = vld [vmem:[%s1 + $0xc] sm:$0xf]
      %v284 = vld [vmem:[%s1 + $0x10] sm:$0xf]
      %v285 = vld [vmem:[%s1 + $0x14] sm:$0xf]
      %v286 = vld [vmem:[%s1 + $0x18] sm:$0xf]
      %v287 = vld [vmem:[%s1 + $0x1c] sm:$0xf]
      %v288 = vld [vmem:[%s1 + $0x20] sm:$0xf]
      %v289 = vld [vmem:[%s1 + $0x24] sm:$0xf]
      %v290 = vld [vmem:[%s1 + $0x28] sm:$0xf]
      %v291 = vld [vmem:[%s1 + $0x2c] sm:$0xf]
      %v292 = vld [vmem:[%s1 + $0x30] sm:$0xf]
      %v293 = vld [vmem:[%s1 + $0x34] sm:$0xf]
      %v294 = vld [vmem:[%s1 + $0x38] sm:$0xf]
      %v295 = vld [vmem:[%s1 + $0x3c] sm:$0xf]
      %v296 = vld [vmem:[%s1 + $0x40] sm:$0xf]
      %v297 = vld [vmem:[%s1 + $0x44] sm:$0xf]
      %v298 = vld [vmem:[%s1 + $0x48] sm:$0xf]
      %v299 = vld [vmem:[%s1 + $0x4c] sm:$0xf]
      %v300 = vld [vmem:[%s1 + $0x50] sm:$0xf]
      %v301 = vld [vmem:[%s1 + $0x54] sm:$0xf]
      %v302 = vld [vmem:[%s1 + $0x58] sm:$0xf]
      %v303 = vld [vmem:[%s1 + $0x5c] sm:$0xf]
      %v304 = vld [vmem:[%s1 + $0x60] sm:$0xf]
      %v305 = vld [vmem:[%s1 + $0x64] sm:$0xf]
      %v306 = vld [vmem:[%s1 + $0x68] sm:$0xf]
      %v307 = vld [vmem:[%s1 + $0x6c] sm:$0xf]
      %v308 = vld [vmem:[%s1 + $0x70] sm:$0xf]
      %v309 = vld [vmem:[%s1 + $0x74] sm:$0xf]
      %v310 = vld [vmem:[%s1 + $0x78] sm:$0xf]
      %v311 = vld [vmem:[%s1 + $0x7c] sm:$0xf]
      %v312 = vld [vmem:[%s1 + $0x80] sm:$0xf]
      %v313 = vld [vmem:[%s1 + $0x84] sm:$0xf]
      %v314 = vld [vmem:[%s1 + $0x88] sm:$0xf]
      %v315 = vld [vmem:[%s1 + $0x8c] sm:$0xf]
      %v316 = vld [vmem:[%s1 + $0x90] sm:$0xf]
      %v317 = vld [vmem:[%s1 + $0x94] sm:$0xf]
      %v318 = vld [vmem:[%s1 + $0x98] sm:$0xf]
      %v319 = vld [vmem:[%s1 + $0x9c] sm:$0xf]
      %v320 = vld [vmem:[%s1 + $0xa0] sm:$0xf]
      %v321 = vld [vmem:[%s1 + $0xa4] sm:$0xf]
      %v322 = vld [vmem:[%s1 + $0xa8] sm:$0xf]
      %v323 = vld [vmem:[%s1 + $0xac] sm:$0xf]
      %v324 = vld [vmem:[%s1 + $0xb0] sm:$0xf]
      %v325 = vld [vmem:[%s1 + $0xb4] sm:$0xf]
      %v326 = vld [vmem:[%s1 + $0xb8] sm:$0xf]
      %v327 = vld [vmem:[%s1 + $0xbc] sm:$0xf]
      %v328 = vld [vmem:[%s1 + $0xc0] sm:$0xf]
      %v329 = vld [vmem:[%s1 + $0xc4] sm:$0xf]
      %v330 = vld [vmem:[%s2] sm:$0x1]
      %v332 = vlaneseq
      %v333 = vshrl.u32 %v332, 7
      %v334 = vsub.s32 0, %v333
      %v335 = vrot.slane %v330, %v334
      %v339 = vunpack.c.l.b16 %v278
      %v340 = vunpack.c.h.b16 %v278
      %v341 = vunpack.c.l.b16 %v279
      %v342 = vunpack.c.h.b16 %v279
      %v343 = vpack.c.b16 %v339, %v339
      %v344 = vpack.c.b16 %v340, %v340
      %v345 = vpack.c.b16 %v341, %v341
      %v346 = vpack.c.b16 %v342, %v342
      %v400 = vunpack.c.l.b16 %v280
      %v401 = vunpack.c.l.b16 %v281
      %v402 = vunpack.c.l.b16 %v282
      %v403 = vunpack.c.l.b16 %v283
      %v404 = vunpack.c.l.b16 %v284
      %v405 = vunpack.c.l.b16 %v285
      %v406 = vunpack.c.l.b16 %v286
      %v407 = vunpack.c.l.b16 %v287
      %v408 = vunpack.c.l.b16 %v288
      %v409 = vunpack.c.l.b16 %v289
      %v410 = vunpack.c.l.b16 %v290
      %v411 = vunpack.c.l.b16 %v291
      %v412 = vunpack.c.l.b16 %v292
      %v413 = vunpack.c.l.b16 %v293
      %v414 = vunpack.c.l.b16 %v294
      %v415 = vunpack.c.l.b16 %v295
      %v416 = vunpack.c.l.b16 %v296
      %v417 = vunpack.c.l.b16 %v297
      %v418 = vunpack.c.l.b16 %v298
      %v419 = vunpack.c.l.b16 %v299
      %v420 = vunpack.c.l.b16 %v300
      %v421 = vunpack.c.l.b16 %v301
      %v422 = vunpack.c.l.b16 %v302
      %v423 = vunpack.c.l.b16 %v303
      %v424 = vunpack.c.l.b16 %v304
      %v425 = vunpack.c.l.b16 %v305
      %v426 = vunpack.c.l.b16 %v306
      %v427 = vunpack.c.l.b16 %v307
      %v428 = vunpack.c.l.b16 %v308
      %v429 = vunpack.c.l.b16 %v309
      %v430 = vunpack.c.l.b16 %v310
      %v431 = vunpack.c.l.b16 %v311
      %v432 = vunpack.c.l.b16 %v312
      %v433 = vunpack.c.l.b16 %v313
      %v434 = vunpack.c.l.b16 %v314
      %v435 = vunpack.c.l.b16 %v315
      %v436 = vunpack.c.l.b16 %v316
      %v437 = vunpack.c.l.b16 %v317
      %v438 = vunpack.c.l.b16 %v318
      %v439 = vunpack.c.l.b16 %v319
      %v440 = vunpack.c.l.b16 %v320
      %v441 = vunpack.c.l.b16 %v321
      %v442 = vunpack.c.l.b16 %v322
      %v443 = vunpack.c.l.b16 %v323
      %v444 = vunpack.c.l.b16 %v324
      %v445 = vunpack.c.l.b16 %v325
      %v446 = vunpack.c.l.b16 %v326
      %v447 = vunpack.c.l.b16 %v327
      %v448 = vunpack.c.l.b16 %v328
      %v449 = vunpack.c.l.b16 %v329
      %v450 = vpack.c.b16 %v401, %v400
      %v451 = vpack.c.b16 %v403, %v402
      %v452 = vpack.c.b16 %v405, %v404
      %v453 = vpack.c.b16 %v407, %v406
      %v454 = vpack.c.b16 %v409, %v408
      %v455 = vpack.c.b16 %v411, %v410
      %v456 = vpack.c.b16 %v413, %v412
      %v457 = vpack.c.b16 %v415, %v414
      %v458 = vpack.c.b16 %v417, %v416
      %v459 = vpack.c.b16 %v419, %v418
      %v460 = vpack.c.b16 %v421, %v420
      %v461 = vpack.c.b16 %v423, %v422
      %v462 = vpack.c.b16 %v425, %v424
      %v463 = vpack.c.b16 %v427, %v426
      %v464 = vpack.c.b16 %v429, %v428
      %v465 = vpack.c.b16 %v431, %v430
      %v466 = vpack.c.b16 %v433, %v432
      %v467 = vpack.c.b16 %v435, %v434
      %v468 = vpack.c.b16 %v437, %v436
      %v469 = vpack.c.b16 %v439, %v438
      %v470 = vpack.c.b16 %v441, %v440
      %v471 = vpack.c.b16 %v443, %v442
      %v472 = vpack.c.b16 %v445, %v444
      %v473 = vpack.c.b16 %v447, %v446
      %v474 = vpack.c.b16 %v449, %v448
      %vm500 = vcmask 130048
      %v502 = vsel %vm500, %v346, 0
      %504 = vmatprep.subr.bf16.mxu0 0
      %505 = vmatpush1.bf16.msra.mxu0 %v450
      %506 = vmatprep.subr.bf16.mxu0 0
      %507 = vmatpush1.bf16.msra.mxu0 %v451
      %508 = vmatprep.subr.bf16.mxu0 0
      %509 = vmatpush1.bf16.msra.mxu0 %v452
      %510 = vmatprep.subr.bf16.mxu0 0
      %511 = vmatpush1.bf16.msra.mxu0 %v453
      %512 = vmatprep.subr.bf16.mxu0 0
      %513 = vmatpush1.bf16.msra.mxu0 %v454
      %514 = vmatprep.subr.bf16.mxu0 0
      %515 = vmatpush1.bf16.msra.mxu0 %v455
      %516 = vmatprep.subr.bf16.mxu0 0
      %517 = vmatpush1.bf16.msra.mxu0 %v456
      %518 = vmatprep.subr.bf16.mxu0 0
      %519 = vmatpush1.bf16.msra.mxu0 %v457
      %520 = vmatprep.subr.bf16.mxu0 0
      %521 = vmatpush1.bf16.msra.mxu0 %v458
      %522 = vmatprep.subr.bf16.mxu0 0
      %523 = vmatpush1.bf16.msra.mxu0 %v459
      %524 = vmatprep.subr.bf16.mxu0 0
      %525 = vmatpush1.bf16.msra.mxu0 %v460
      %526 = vmatprep.subr.bf16.mxu0 0
      %527 = vmatpush1.bf16.msra.mxu0 %v461
      %528 = vmatprep.subr.bf16.mxu0 0
      %529 = vmatpush1.bf16.msra.mxu0 %v462
      %530 = vmatprep.subr.bf16.mxu0 0
      %531 = vmatpush1.bf16.msra.mxu0 %v463
      %532 = vmatprep.subr.bf16.mxu0 0
      %533 = vmatpush1.bf16.msra.mxu0 %v464
      %534 = vmatprep.subr.bf16.mxu0 0
      %535 = vmatpush1.bf16.msra.mxu0 %v465
      %536 = vmatprep.mubr.bf16.mxu0 %v344
      %537 = vmatmul.mubr.bf16.gmra.mrb[0].mxu0 %v343
      %v538 = vpop.f32.mrb[0].mxu0
      %v539 = vadd.f32 %v335, %v538
      %v540 = vpop.f32.mrb[0].mxu0
      %v541 = vpop.f32.mrb[0].mxu0
      %v542 = vpop.f32.mrb[0].mxu0
      %543 = vdwg.mxu0
      %544 = vmatprep.subr.bf16.mxu0 0
      %545 = vmatpush1.bf16.msra.mxu0 %v466
      %546 = vmatprep.subr.bf16.mxu0 0
      %547 = vmatpush1.bf16.msra.mxu0 %v467
      %548 = vmatprep.subr.bf16.mxu0 0
      %549 = vmatpush1.bf16.msra.mxu0 %v468
      %550 = vmatprep.subr.bf16.mxu0 0
      %551 = vmatpush1.bf16.msra.mxu0 %v469
      %552 = vmatprep.subr.bf16.mxu0 0
      %553 = vmatpush1.bf16.msra.mxu0 %v470
      %554 = vmatprep.subr.bf16.mxu0 0
      %555 = vmatpush1.bf16.msra.mxu0 %v471
      %556 = vmatprep.subr.bf16.mxu0 0
      %557 = vmatpush1.bf16.msra.mxu0 %v472
      %558 = vmatprep.subr.bf16.mxu0 0
      %559 = vmatpush1.bf16.msra.mxu0 %v473
      %560 = vmatprep.subr.bf16.mxu0 0
      %561 = vmatpush1.bf16.msra.mxu0 %v474
      %562 = vmatprep.subr.bf16.mxu0 0
      %563 = vmatpush1.bf16.msra.mxu0 0
      %564 = vmatprep.subr.bf16.mxu0 0
      %565 = vmatpush1.bf16.msra.mxu0 0
      %566 = vmatprep.subr.bf16.mxu0 0
      %567 = vmatpush1.bf16.msra.mxu0 0
      %568 = vmatprep.subr.bf16.mxu0 0
      %569 = vmatpush1.bf16.msra.mxu0 0
      %570 = vmatprep.subr.bf16.mxu0 0
      %571 = vmatpush1.bf16.msra.mxu0 0
      %572 = vmatprep.subr.bf16.mxu0 0
      %573 = vmatpush1.bf16.msra.mxu0 0
      %574 = vmatprep.subr.bf16.mxu0 0
      %575 = vmatpush1.bf16.msra.mxu0 0
      %576 = vmatprep.mubr.bf16.mxu0 %v502
      %577 = vmatmul.mubr.bf16.gmra.mrb[0].mxu0 %v345
      %v578 = vpop.f32.mrb[0].mxu0
      %v579 = vadd.f32 %v539, %v578
      %v580 = vpop.f32.mrb[0].mxu0
      %v581 = vpop.f32.mrb[0].mxu0
      %v582 = vpop.f32.mrb[0].mxu0
      %583 = vdwg.mxu0
      %v584 = vmax.f32 %v579, 0.0
      %v585 = vpack.c.bf16 %v584, %v584
      %v586 = vld [vmem:[%s3] sm:$0xf]
      %v587 = vld [vmem:[%s3 + $0x4] sm:$0xf]
      %v588 = vld [vmem:[%s3 + $0x8] sm:$0xf]
      %v589 = vld [vmem:[%s3 + $0xc] sm:$0xf]
      %v590 = vld [vmem:[%s3 + $0x10] sm:$0xf]
      %v591 = vld [vmem:[%s3 + $0x14] sm:$0xf]
      %v592 = vld [vmem:[%s3 + $0x18] sm:$0xf]
      %v593 = vld [vmem:[%s3 + $0x1c] sm:$0xf]
      %v594 = vld [vmem:[%s3 + $0x20] sm:$0xf]
      %v595 = vld [vmem:[%s3 + $0x24] sm:$0xf]
      %v596 = vld [vmem:[%s3 + $0x28] sm:$0xf]
      %v597 = vld [vmem:[%s3 + $0x2c] sm:$0xf]
      %v598 = vld [vmem:[%s3 + $0x30] sm:$0xf]
      %v599 = vld [vmem:[%s3 + $0x34] sm:$0xf]
      %v600 = vld [vmem:[%s3 + $0x38] sm:$0xf]
      %v601 = vld [vmem:[%s3 + $0x3c] sm:$0xf]
      %v602 = vld [vmem:[%s4] sm:$0x1]
      %v604 = vlaneseq
      %v605 = vshrl.u32 %v604, 7
      %v606 = vsub.s32 0, %v605
      %v607 = vrot.slane %v602, %v606
      %v625 = vunpack.c.l.b16 %v586
      %v626 = vunpack.c.l.b16 %v587
      %v627 = vunpack.c.l.b16 %v588
      %v628 = vunpack.c.l.b16 %v589
      %v629 = vunpack.c.l.b16 %v590
      %v630 = vunpack.c.l.b16 %v591
      %v631 = vunpack.c.l.b16 %v592
      %v632 = vunpack.c.l.b16 %v593
      %v633 = vunpack.c.l.b16 %v594
      %v634 = vunpack.c.l.b16 %v595
      %v635 = vunpack.c.l.b16 %v596
      %v636 = vunpack.c.l.b16 %v597
      %v637 = vunpack.c.l.b16 %v598
      %v638 = vunpack.c.l.b16 %v599
      %v639 = vunpack.c.l.b16 %v600
      %v640 = vunpack.c.l.b16 %v601
      %v641 = vpack.c.b16 %v626, %v625
      %v642 = vpack.c.b16 %v628, %v627
      %v643 = vpack.c.b16 %v630, %v629
      %v644 = vpack.c.b16 %v632, %v631
      %v645 = vpack.c.b16 %v634, %v633
      %v646 = vpack.c.b16 %v636, %v635
      %v647 = vpack.c.b16 %v638, %v637
      %v648 = vpack.c.b16 %v640, %v639
      %657 = vmatprep.subr.bf16.mxu0 0
      %658 = vmatpush1.bf16.msra.mxu0 %v641
      %659 = vmatprep.subr.bf16.mxu0 0
      %660 = vmatpush1.bf16.msra.mxu0 %v642
      %661 = vmatprep.subr.bf16.mxu0 0
      %662 = vmatpush1.bf16.msra.mxu0 %v643
      %663 = vmatprep.subr.bf16.mxu0 0
      %664 = vmatpush1.bf16.msra.mxu0 %v644
      %665 = vmatprep.subr.bf16.mxu0 0
      %666 = vmatpush1.bf16.msra.mxu0 %v645
      %667 = vmatprep.subr.bf16.mxu0 0
      %668 = vmatpush1.bf16.msra.mxu0 %v646
      %669 = vmatprep.subr.bf16.mxu0 0
      %670 = vmatpush1.bf16.msra.mxu0 %v647
      %671 = vmatprep.subr.bf16.mxu0 0
      %672 = vmatpush1.bf16.msra.mxu0 %v648
      %673 = vmatprep.subr.bf16.mxu0 0
      %674 = vmatpush1.bf16.msra.mxu0 0
      %675 = vmatprep.subr.bf16.mxu0 0
      %676 = vmatpush1.bf16.msra.mxu0 0
      %677 = vmatprep.subr.bf16.mxu0 0
      %678 = vmatpush1.bf16.msra.mxu0 0
      %679 = vmatprep.subr.bf16.mxu0 0
      %680 = vmatpush1.bf16.msra.mxu0 0
      %681 = vmatprep.subr.bf16.mxu0 0
      %682 = vmatpush1.bf16.msra.mxu0 0
      %683 = vmatprep.subr.bf16.mxu0 0
      %684 = vmatpush1.bf16.msra.mxu0 0
      %685 = vmatprep.subr.bf16.mxu0 0
      %686 = vmatpush1.bf16.msra.mxu0 0
      %687 = vmatprep.subr.bf16.mxu0 0
      %688 = vmatpush1.bf16.msra.mxu0 0
      %689 = vmatprep.mubr.bf16.mxu0 0
      %690 = vmatmul.mubr.bf16.gmra.mrb[0].mxu0 %v585
      %v691 = vpop.f32.mrb[0].mxu0
      %v692 = vadd.f32 %v607, %v691
      %v693 = vpop.f32.mrb[0].mxu0
      %v694 = vpop.f32.mrb[0].mxu0
      %v695 = vpop.f32.mrb[0].mxu0
      %696 = vdwg.mxu0
      %v697 = vmax.f32 %v692, 0.0
      %v698 = vpack.c.bf16 %v697, %v697
      %v699 = vld [vmem:[%s5] sm:$0xf]
      %v700 = vld [vmem:[%s5 + $0x4] sm:$0xf]
      %v701 = vld [vmem:[%s5 + $0x8] sm:$0xf]
      %v702 = vld [vmem:[%s5 + $0xc] sm:$0xf]
      %v703 = vld [vmem:[%s5 + $0x10] sm:$0xf]
      %v704 = vld [vmem:[%s5 + $0x14] sm:$0xf]
      %v705 = vld [vmem:[%s5 + $0x18] sm:$0xf]
      %v706 = vld [vmem:[%s5 + $0x1c] sm:$0xf]
      %v707 = vld [vmem:[%s5 + $0x20] sm:$0xf]
      %v708 = vld [vmem:[%s5 + $0x24] sm:$0xf]
      %v709 = vld [vmem:[%s5 + $0x28] sm:$0xf]
      %v710 = vld [vmem:[%s5 + $0x2c] sm:$0xf]
      %v711 = vld [vmem:[%s5 + $0x30] sm:$0xf]
      %v712 = vld [vmem:[%s5 + $0x34] sm:$0xf]
      %v713 = vld [vmem:[%s5 + $0x38] sm:$0xf]
      %v714 = vld [vmem:[%s5 + $0x3c] sm:$0xf]
      %v715 = vld [vmem:[%s6] sm:$0x1]
      %v717 = vlaneseq
      %v718 = vshrl.u32 %v717, 7
      %v719 = vsub.s32 0, %v718
      %v720 = vrot.slane %v715, %v719
      %v738 = vunpack.c.l.b16 %v699
      %v739 = vunpack.c.l.b16 %v700
      %v740 = vunpack.c.l.b16 %v701
      %v741 = vunpack.c.l.b16 %v702
      %v742 = vunpack.c.l.b16 %v703
      %v743 = vunpack.c.l.b16 %v704
      %v744 = vunpack.c.l.b16 %v705
      %v745 = vunpack.c.l.b16 %v706
      %v746 = vunpack.c.l.b16 %v707
      %v747 = vunpack.c.l.b16 %v708
      %v748 = vunpack.c.l.b16 %v709
      %v749 = vunpack.c.l.b16 %v710
      %v750 = vunpack.c.l.b16 %v711
      %v751 = vunpack.c.l.b16 %v712
      %v752 = vunpack.c.l.b16 %v713
      %v753 = vunpack.c.l.b16 %v714
      %v754 = vpack.c.b16 %v739, %v738
      %v755 = vpack.c.b16 %v741, %v740
      %v756 = vpack.c.b16 %v743, %v742
      %v757 = vpack.c.b16 %v745, %v744
      %v758 = vpack.c.b16 %v747, %v746
      %v759 = vpack.c.b16 %v749, %v748
      %v760 = vpack.c.b16 %v751, %v750
      %v761 = vpack.c.b16 %v753, %v752
      %770 = vmatprep.subr.bf16.mxu0 0
      %771 = vmatpush1.bf16.msra.mxu0 %v754
      %772 = vmatprep.subr.bf16.mxu0 0
      %773 = vmatpush1.bf16.msra.mxu0 %v755
      %774 = vmatprep.subr.bf16.mxu0 0
      %775 = vmatpush1.bf16.msra.mxu0 %v756
      %776 = vmatprep.subr.bf16.mxu0 0
      %777 = vmatpush1.bf16.msra.mxu0 %v757
      %778 = vmatprep.subr.bf16.mxu0 0
      %779 = vmatpush1.bf16.msra.mxu0 %v758
      %780 = vmatprep.subr.bf16.mxu0 0
      %781 = vmatpush1.bf16.msra.mxu0 %v759
      %782 = vmatprep.subr.bf16.mxu0 0
      %783 = vmatpush1.bf16.msra.mxu0 %v760
      %784 = vmatprep.subr.bf16.mxu0 0
      %785 = vmatpush1.bf16.msra.mxu0 %v761
      %786 = vmatprep.subr.bf16.mxu0 0
      %787 = vmatpush1.bf16.msra.mxu0 0
      %788 = vmatprep.subr.bf16.mxu0 0
      %789 = vmatpush1.bf16.msra.mxu0 0
      %790 = vmatprep.subr.bf16.mxu0 0
      %791 = vmatpush1.bf16.msra.mxu0 0
      %792 = vmatprep.subr.bf16.mxu0 0
      %793 = vmatpush1.bf16.msra.mxu0 0
      %794 = vmatprep.subr.bf16.mxu0 0
      %795 = vmatpush1.bf16.msra.mxu0 0
      %796 = vmatprep.subr.bf16.mxu0 0
      %797 = vmatpush1.bf16.msra.mxu0 0
      %798 = vmatprep.subr.bf16.mxu0 0
      %799 = vmatpush1.bf16.msra.mxu0 0
      %800 = vmatprep.subr.bf16.mxu0 0
      %801 = vmatpush1.bf16.msra.mxu0 0
      %802 = vmatprep.mubr.bf16.mxu0 0
      %803 = vmatmul.mubr.bf16.gmra.mrb[0].mxu0 %v698
      %v804 = vpop.f32.mrb[0].mxu0
      %v805 = vadd.f32 %v720, %v804
      %v806 = vpop.f32.mrb[0].mxu0
      %v807 = vpop.f32.mrb[0].mxu0
      %v808 = vpop.f32.mrb[0].mxu0
      %809 = vdwg.mxu0
      %810 = vst [vmem:[%s276] sm:$0xff] %v805
      %p811 = scmp.lt.s32.totalorder %s18, 1
      %s812 = scalar_select %p811, %s18, 1
      %s813 = smul.addr %s812, 8
      %s814 = scalar_lea.vmem %s7, %s813
      // Predicated region
      $region49: #{net_forward.5} parent=47 // pred_check
        %p815 = pneg %p188
      $region50: #{net_forward.5} parent=47 // pred_check_branch
        %817 = sbr.rel (%p815) target = $region52
      $region51: #{net_forward.5} parent=47 // pred_region
        _
      $region52: #{net_forward.5} parent=47 // pred_fallthru
        _
    $region48: #{net_forward.5} parent=5 // pred_fallthru
      _
    %p818 = scmp.le.s32.totalorder 2, %s13
    // Predicated region
    $region53: #{net_forward.5} parent=5 // pred_check
      %p819 = pneg %p818
    $region54: #{net_forward.5} parent=5 // pred_check_branch
      %821 = sbr.rel (%p819) target = $region56
    $region55: #{net_forward.5} parent=5 // pred_region
      %s822 = ssub.s32 %s13, 2
      // Predicated region
      $region57: #{net_forward.5} parent=55 // pred_check
        %p823 = pneg %p194
      $region58: #{net_forward.5} parent=55 // pred_check_branch
        %825 = sbr.rel (%p823) target = $region60
      $region59: #{net_forward.5} parent=55 // pred_region
        %p826 = scmp.lt.s32.totalorder %s19, 1
        %s827 = scalar_select %p826, %s19, 1
        %s828 = smul.addr %s827, 8
        %s829 = scalar_lea.vmem %s7, %s828
      $region60: #{net_forward.5} parent=55 // pred_fallthru
        _
    $region56: #{net_forward.5} parent=5 // pred_fallthru
      _
  $region6: #{net_forward.5} parent=0 // loop_footer
    %s17 = sadd.s32 1, %s13
  $region7: #{net_forward.5} parent=0 // loop_footer_branch
    %12 = sbr.rel target = $region3
  $region8: #{net_forward.5} parent=0 // loop_exit
    _

</llo_original>
